<compile_context>
chip_gen: v7x
topology: tpu7x:2x2x1
jax: 0.10.0
libtpu: 0.0.40
codegen_flags: <defaults>
</compile_context>

<pallas_src>
import functools

import jax
import jax.numpy as jnp
from jax import lax
from jax.experimental import pallas as pl
from jax.experimental.pallas import tpu as pltpu

BN_EPS = 1e-5
_SUB = 8  # f32 sublane tile


def _round_up(v, m):
    return (v + m - 1) // m * m


# ---------------------------------------------------------------------------
# Fused kernel.  Layout: channels-first, flattened per-image pixels (C, Ho*Wo).
# One grid step == one image.
# ---------------------------------------------------------------------------
def _up_block_kernel(x_ref, wup_ref, bup_ref, w1_ref, b1_ref, w2_ref, b2_ref,
                     o_ref, tap_ref, *, H, W, Cp_in, Cp_out):
    f32 = jnp.float32
    Ho, Wo = 2 * H, 2 * W
    P = Ho * Wo

    def shifted(a, off):
        # shifted[:, p] = a[:, (p + off) mod P]; wrapped entries are edge-masked.
        return a if off == 0 else pltpu.roll(a, (-off) % P, axis=1)

    def _and(a, b):
        if a is None:
            return b
        if b is None:
            return a
        return jnp.logical_and(a, b)

    # ---- boundary / parity masks: computed ONCE, reused by both convs -------
    col = lax.broadcasted_iota(jnp.int32, (1, Ho, Wo), 2).reshape(1, P)
    row = lax.broadcasted_iota(jnp.int32, (1, Ho, Wo), 1).reshape(1, P)
    row_even = (row % 2) == 0
    col_even = (col % 2) == 0
    r_ge1, r_lt1 = row >= 1, row < Ho - 1
    c_ge1, c_lt1 = col >= 1, col < Wo - 1
    r_lt2, c_lt2 = row < Ho - 2, col < Wo - 2

    tap_offs, tap_masks = [], []
    for dy in range(3):
        rm = r_ge1 if dy == 0 else (r_lt1 if dy == 2 else None)
        for dx in range(3):
            cm = c_ge1 if dx == 0 else (c_lt1 if dx == 2 else None)
            tap_offs.append((dy - 1) * Wo + (dx - 1))
            tap_masks.append(_and(rm, cm))

    # ---- ConvTranspose2d(k3,s2,p1,op1): 4-phase weights acting on the already
    #      NN-upsampled input, one packed matmul, 3-deep parity select ---------
    x = x_ref[0]                                           # (Cp_in, P), lane-dense
    cdt = x.dtype
    piece_offs = (0, 2, 2 * Wo, 2 * Wo + 2)                # neighbours (0,0)(0,1)(1,0)(1,1)
    piece_masks = (None, c_lt2, r_lt2, _and(r_lt2, c_lt2))
    for s in range(4):
        t = shifted(x, piece_offs[s])
        if piece_masks[s] is not None:
            t = jnp.where(piece_masks[s], t, 0)
        tap_ref[pl.ds(s * Cp_in, Cp_in), :] = t
    yph = jnp.dot(wup_ref[...], tap_ref[pl.ds(0, 4 * Cp_in), :],
                  preferred_element_type=f32) + bup_ref[...]   # (4*Cp_in, P) f32
    # Disjoint phase select (row/col parity): 2 compares + 3 selects.
    y = jnp.where(
        row_even,
        jnp.where(col_even, yph[0 * Cp_in:1 * Cp_in], yph[1 * Cp_in:2 * Cp_in]),
        jnp.where(col_even, yph[2 * Cp_in:3 * Cp_in], yph[3 * Cp_in:4 * Cp_in]))

    # ---- (3x3 conv + folded BN + ReLU) as a packed K = 9*C matmul ------------
    def conv3x3_bn_relu(act, w_ref, b_ref, c_in):
        for i in range(9):
            t = shifted(act, tap_offs[i])
            if tap_masks[i] is not None:
                t = jnp.where(tap_masks[i], t, 0)
            tap_ref[pl.ds(i * c_in, c_in), :] = t
        acc = jnp.dot(w_ref[...], tap_ref[pl.ds(0, 9 * c_in), :],
                      preferred_element_type=f32) + b_ref[...]
        return jnp.maximum(acc, 0.0)                           # (Cp_out, P) f32

    z = conv3x3_bn_relu(y.astype(cdt), w1_ref, b1_ref, Cp_in)
    out = conv3x3_bn_relu(z.astype(cdt), w2_ref, b2_ref, Cp_out)

    # ---- full-sublane, lane-dense store (padded channels; wrapper slices) ----
    o_ref[0] = out.astype(o_ref.dtype)


# ---------------------------------------------------------------------------
# Wrapper-side weight preparation (done once per set of weights).
# ---------------------------------------------------------------------------
def _fold_bn(w_oihw, b, gamma, beta, mean, var):
    scale = gamma / jnp.sqrt(var + BN_EPS)
    return w_oihw * scale[:, None, None, None], (b - mean) * scale + beta


def _pack_conv_weight(w_oihw, cin_p, cout_p):
    # packed[co, (dy*3+dx)*cin_p + ci] = w_oihw[co, ci, dy, dx]
    cout, cin = w_oihw.shape[:2]
    w = jnp.transpose(w_oihw, (0, 2, 3, 1))
    w = jnp.pad(w, ((0, cout_p - cout), (0, 0), (0, 0), (0, cin_p - cin)))
    return w.reshape(cout_p, 9 * cin_p)


def _pack_up_weight(up_w, cp):
    # ConvTranspose2d(k3,s2,p1,op1) == 4 output phases, each a small conv on the
    # original grid; pack all 4 phases into one (4*cp, 4*cp) matrix acting on
    # [x(a,b); x(a,b+1); x(a+1,b); x(a+1,b+1)].  (For large Cin, split into 4
    # per-phase matmuls to skip the 7 structurally-zero Cin x Cin blocks.)
    cin = up_w.shape[0]
    wf = jnp.transpose(jnp.flip(up_w, axis=(2, 3)), (2, 3, 0, 1))  # [ky,kx,ci,co]
    wpk = jnp.zeros((4 * cp, 4 * cp), jnp.float32)
    for py in range(2):
        for px in range(2):
            for sy in range(2):
                for sx in range(2):
                    if (py == 0 and sy == 1) or (px == 0 and sx == 1):
                        continue
                    ky = 1 if py == 0 else (0 if sy == 0 else 2)
                    kx = 1 if px == 0 else (0 if sx == 0 else 2)
                    ph, s = 2 * py + px, 2 * sy + sx
                    wpk = wpk.at[ph * cp:ph * cp + cin,
                                 s * cp:s * cp + cin].set(wf[ky, kx].T)
    return wpk


# ---------------------------------------------------------------------------
# Forward pass of `up` built on the single fused Pallas kernel.
# ---------------------------------------------------------------------------
def up_forward(x_nchw, p, compute_dtype=jnp.float32):
    N, Cin, H, W = x_nchw.shape
    Cout = p["c1_w"].shape[0]
    Ho, Wo = 2 * H, 2 * W
    P = Ho * Wo
    Cp_in, Cp_out = _round_up(Cin, _SUB), _round_up(Cout, _SUB)
    Cmax = max(Cp_in, Cp_out)

    # Nearest-neighbour 2x upsample + channel pad + flatten (layout plumbing in
    # the wrapper): keeps every in-kernel tensor lane-dense at P lanes.
    x_up = jnp.repeat(jnp.repeat(x_nchw, 2, axis=2), 2, axis=3)    # (N,Cin,Ho,Wo)
    x_up = x_up.reshape(N, Cin, P)
    x_up = jnp.pad(x_up, ((0, 0), (0, Cp_in - Cin), (0, 0))).astype(compute_dtype)

    wup = _pack_up_weight(p["up_w"], Cp_in).astype(compute_dtype)
    bup = jnp.tile(jnp.pad(p["up_b"], (0, Cp_in - Cin)), 4)
    bup = bup.reshape(4 * Cp_in, 1).astype(jnp.float32)

    w1f, b1f = _fold_bn(p["c1_w"], p["c1_b"], p["bn1_gamma"], p["bn1_beta"],
                        p["bn1_mean"], p["bn1_var"])
    w2f, b2f = _fold_bn(p["c2_w"], p["c2_b"], p["bn2_gamma"], p["bn2_beta"],
                        p["bn2_mean"], p["bn2_var"])
    w1p = _pack_conv_weight(w1f, Cp_in, Cp_out).astype(compute_dtype)
    w2p = _pack_conv_weight(w2f, Cp_out, Cp_out).astype(compute_dtype)
    b1p = jnp.pad(b1f, (0, Cp_out - Cout)).reshape(Cp_out, 1).astype(jnp.float32)
    b2p = jnp.pad(b2f, (0, Cp_out - Cout)).reshape(Cp_out, 1).astype(jnp.float32)

    kernel = functools.partial(_up_block_kernel, H=H, W=W,
                               Cp_in=Cp_in, Cp_out=Cp_out)
    out_flat = pl.pallas_call(
        kernel,
        out_shape=jax.ShapeDtypeStruct((N, Cp_out, P), jnp.float32),
        grid=(N,),
        in_specs=[
            pl.BlockSpec((1, Cp_in, P), lambda n: (n, 0, 0)),
            pl.BlockSpec((4 * Cp_in, 4 * Cp_in), lambda n: (0, 0)),
            pl.BlockSpec((4 * Cp_in, 1), lambda n: (0, 0)),
            pl.BlockSpec((Cp_out, 9 * Cp_in), lambda n: (0, 0)),
            pl.BlockSpec((Cp_out, 1), lambda n: (0, 0)),
            pl.BlockSpec((Cp_out, 9 * Cp_out), lambda n: (0, 0)),
            pl.BlockSpec((Cp_out, 1), lambda n: (0, 0)),
        ],
        out_specs=pl.BlockSpec((1, Cp_out, P), lambda n: (n, 0, 0)),
        scratch_shapes=[pltpu.VMEM((9 * Cmax, P), compute_dtype)],
        compiler_params=pltpu.CompilerParams(
            dimension_semantics=("parallel",)),
    )(x_up, wup, bup, w1p, b1p, w2p, b2p)

    # Slice padded channels + reshape (fused/free in XLA); output is NCHW.
    return out_flat[:, :Cout, :].reshape(N, Cout, Ho, Wo)


# ---------------------------------------------------------------------------
# Parameters (deterministic, synthetic) and a pure-JAX reference.
# ---------------------------------------------------------------------------
def init_params(key, in_ch, out_ch):
    ks = jax.random.split(key, 6)
    return {
        "up_w": jax.random.normal(ks[0], (in_ch, in_ch, 3, 3), jnp.float32) * 0.1,
        "up_b": jax.random.normal(ks[1], (in_ch,), jnp.float32) * 0.1,
        "c1_w": jax.random.normal(ks[2], (out_ch, in_ch, 3, 3), jnp.float32) * 0.1,
        "c1_b": jax.random.normal(ks[3], (out_ch,), jnp.float32) * 0.1,
        "c2_w": jax.random.normal(ks[4], (out_ch, out_ch, 3, 3), jnp.float32) * 0.1,
        "c2_b": jax.random.normal(ks[5], (out_ch,), jnp.float32) * 0.1,
        "bn1_gamma": jnp.ones((out_ch,), jnp.float32),
        "bn1_beta": jnp.zeros((out_ch,), jnp.float32),
        "bn1_mean": jnp.zeros((out_ch,), jnp.float32),
        "bn1_var": jnp.ones((out_ch,), jnp.float32),
        "bn2_gamma": jnp.ones((out_ch,), jnp.float32),
        "bn2_beta": jnp.zeros((out_ch,), jnp.float32),
        "bn2_mean": jnp.zeros((out_ch,), jnp.float32),
        "bn2_var": jnp.ones((out_ch,), jnp.float32),
    }


def ref_forward(x_nchw, p):
    dn = ("NHWC", "HWIO", "NHWC")
    x = jnp.transpose(x_nchw, (0, 2, 3, 1)).astype(jnp.float32)
    w_up = jnp.transpose(jnp.flip(p["up_w"], axis=(2, 3)), (2, 3, 0, 1))
    y = lax.conv_general_dilated(x, w_up, (1, 1), [(1, 2), (1, 2)],
                                 lhs_dilation=(2, 2),
                                 dimension_numbers=dn) + p["up_b"]

    def conv_bn_relu(h, w_oihw, b, g, be, m, v):
        w = jnp.transpose(w_oihw, (2, 3, 1, 0))
        h = lax.conv_general_dilated(h, w, (1, 1), [(1, 1), (1, 1)],
                                     dimension_numbers=dn) + b
        h = (h - m) / jnp.sqrt(v + BN_EPS) * g + be
        return jnp.maximum(h, 0.0)

    z = conv_bn_relu(y, p["c1_w"], p["c1_b"], p["bn1_gamma"], p["bn1_beta"],
                     p["bn1_mean"], p["bn1_var"])
    o = conv_bn_relu(z, p["c2_w"], p["c2_b"], p["bn2_gamma"], p["bn2_beta"],
                     p["bn2_mean"], p["bn2_var"])
    return jnp.transpose(o, (0, 3, 1, 2))


if __name__ == "__main__":
    key = jax.random.PRNGKey(0)
    k_x, k_p = jax.random.split(key)

    batch, in_ch, out_ch, H, W = 2, 8, 4, 16, 16
    x = jax.random.normal(k_x, (batch, in_ch, H, W), jnp.float32)   # NCHW
    params = init_params(k_p, in_ch, out_ch)

    ref = jax.block_until_ready(ref_forward(x, params))

    # f32 path (exact-precision check)
    out = jax.block_until_ready(up_forward(x, params))
    assert out.shape == (batch, out_ch, 2 * H, 2 * W), out.shape
    assert jnp.allclose(out, ref, rtol=1e-4, atol=1e-4), (
        float(jnp.max(jnp.abs(out - ref))))

    # bf16 MXU path (v6e/v7x): bf16 taps/operands, f32 accumulation
    out_bf16 = jax.block_until_ready(
        up_forward(x, params, compute_dtype=jnp.bfloat16))
    assert jnp.allclose(out_bf16, ref, rtol=5e-2, atol=5e-2), (
        float(jnp.max(jnp.abs(out_bf16 - ref))))

    print("KERNEL_OK")
</pallas_src>

<mosaic_0001>
module attributes {stable_mosaic.version = 11 : i64} {
  func.func @_up_block_kernel(%arg0: i32, %arg1: memref<1x8x1024xf32, #tpu.memory_space<vmem>>, %arg2: memref<32x32xf32, #tpu.memory_space<vmem>>, %arg3: memref<32x1xf32, #tpu.memory_space<vmem>>, %arg4: memref<8x72xf32, #tpu.memory_space<vmem>>, %arg5: memref<8x1xf32, #tpu.memory_space<vmem>>, %arg6: memref<8x72xf32, #tpu.memory_space<vmem>>, %arg7: memref<8x1xf32, #tpu.memory_space<vmem>>, %arg8: memref<1x8x1024xf32, #tpu.memory_space<vmem>>, %arg9: memref<72x1024xf32, #tpu.memory_space<vmem>>) attributes {dimension_semantics = [#tpu.dimension_semantics<parallel>], iteration_bounds = array<i64: 2>, scalar_prefetch = 0 : i64, scratch_operands = 1 : i64, tpu.core_type = #tpu.core_type<tc>, window_params = [{transform_indices = @transform_0, window_bounds = array<i64: 1, 8, 1024>}, {pipeline_mode = #tpu.pipeline_mode<synchronous>, transform_indices = @transform_1, window_bounds = array<i64: 32, 32>}, {pipeline_mode = #tpu.pipeline_mode<synchronous>, transform_indices = @transform_2, window_bounds = array<i64: 32, 1>}, {pipeline_mode = #tpu.pipeline_mode<synchronous>, transform_indices = @transform_3, window_bounds = array<i64: 8, 72>}, {pipeline_mode = #tpu.pipeline_mode<synchronous>, transform_indices = @transform_4, window_bounds = array<i64: 8, 1>}, {pipeline_mode = #tpu.pipeline_mode<synchronous>, transform_indices = @transform_5, window_bounds = array<i64: 8, 72>}, {pipeline_mode = #tpu.pipeline_mode<synchronous>, transform_indices = @transform_6, window_bounds = array<i64: 8, 1>}, {transform_indices = @transform_7, window_bounds = array<i64: 1, 8, 1024>}]} {
    %0 = tpu.iota {dimensions = array<i32: 2>} : vector<1x32x32xi32>
    %1 = vector.shape_cast %0 : vector<1x32x32xi32> to vector<1x1024xi32>
    %2 = tpu.iota {dimensions = array<i32: 1>} : vector<1x32x32xi32>
    %3 = vector.shape_cast %2 : vector<1x32x32xi32> to vector<1x1024xi32>
    %c2_i32 = arith.constant 2 : i32
    %c0_i32 = arith.constant 0 : i32
    %4 = arith.cmpi eq, %c2_i32, %c0_i32 : i32
    %c1_i32 = arith.constant 1 : i32
    %5 = arith.select %4, %c1_i32, %c2_i32 : i32
    %6 = vector.broadcast %5 : i32 to vector<1x1024xi32>
    %7 = arith.remsi %3, %6 : vector<1x1024xi32>
    %c0_i32_0 = arith.constant 0 : i32
    %8 = vector.broadcast %c0_i32_0 : i32 to vector<1x1024xi32>
    %9 = arith.cmpi ne, %7, %8 : vector<1x1024xi32>
    %c0_i32_1 = arith.constant 0 : i32
    %10 = vector.broadcast %c0_i32_1 : i32 to vector<1x1024xi32>
    %11 = arith.cmpi slt, %7, %10 : vector<1x1024xi32>
    %c0_i32_2 = arith.constant 0 : i32
    %12 = arith.cmpi slt, %5, %c0_i32_2 : i32
    %13 = vector.broadcast %12 : i1 to vector<1x1024xi1>
    %14 = vector.broadcast %13 : vector<1x1024xi1> to vector<1x1024xi1>
    %15 = arith.xori %11, %14 : vector<1x1024xi1>
    %16 = arith.andi %15, %9 : vector<1x1024xi1>
    %17 = vector.broadcast %5 : i32 to vector<1x1024xi32>
    %18 = arith.addi %7, %17 : vector<1x1024xi32>
    %19 = arith.select %16, %18, %7 : vector<1x1024xi1>, vector<1x1024xi32>
    %c0_i32_3 = arith.constant 0 : i32
    %20 = vector.broadcast %c0_i32_3 : i32 to vector<1x1024xi32>
    %21 = arith.cmpi eq, %19, %20 : vector<1x1024xi32>
    %c2_i32_4 = arith.constant 2 : i32
    %c0_i32_5 = arith.constant 0 : i32
    %22 = arith.cmpi eq, %c2_i32_4, %c0_i32_5 : i32
    %c1_i32_6 = arith.constant 1 : i32
    %23 = arith.select %22, %c1_i32_6, %c2_i32_4 : i32
    %24 = vector.broadcast %23 : i32 to vector<1x1024xi32>
    %25 = arith.remsi %1, %24 : vector<1x1024xi32>
    %c0_i32_7 = arith.constant 0 : i32
    %26 = vector.broadcast %c0_i32_7 : i32 to vector<1x1024xi32>
    %27 = arith.cmpi ne, %25, %26 : vector<1x1024xi32>
    %c0_i32_8 = arith.constant 0 : i32
    %28 = vector.broadcast %c0_i32_8 : i32 to vector<1x1024xi32>
    %29 = arith.cmpi slt, %25, %28 : vector<1x1024xi32>
    %c0_i32_9 = arith.constant 0 : i32
    %30 = arith.cmpi slt, %23, %c0_i32_9 : i32
    %31 = vector.broadcast %30 : i1 to vector<1x1024xi1>
    %32 = vector.broadcast %31 : vector<1x1024xi1> to vector<1x1024xi1>
    %33 = arith.xori %29, %32 : vector<1x1024xi1>
    %34 = arith.andi %33, %27 : vector<1x1024xi1>
    %35 = vector.broadcast %23 : i32 to vector<1x1024xi32>
    %36 = arith.addi %25, %35 : vector<1x1024xi32>
    %37 = arith.select %34, %36, %25 : vector<1x1024xi1>, vector<1x1024xi32>
    %c0_i32_10 = arith.constant 0 : i32
    %38 = vector.broadcast %c0_i32_10 : i32 to vector<1x1024xi32>
    %39 = arith.cmpi eq, %37, %38 : vector<1x1024xi32>
    %c1_i32_11 = arith.constant 1 : i32
    %40 = vector.broadcast %c1_i32_11 : i32 to vector<1x1024xi32>
    %41 = arith.cmpi sge, %3, %40 : vector<1x1024xi32>
    %c31_i32 = arith.constant 31 : i32
    %42 = vector.broadcast %c31_i32 : i32 to vector<1x1024xi32>
    %43 = arith.cmpi slt, %3, %42 : vector<1x1024xi32>
    %c1_i32_12 = arith.constant 1 : i32
    %44 = vector.broadcast %c1_i32_12 : i32 to vector<1x1024xi32>
    %45 = arith.cmpi sge, %1, %44 : vector<1x1024xi32>
    %c31_i32_13 = arith.constant 31 : i32
    %46 = vector.broadcast %c31_i32_13 : i32 to vector<1x1024xi32>
    %47 = arith.cmpi slt, %1, %46 : vector<1x1024xi32>
    %c30_i32 = arith.constant 30 : i32
    %48 = vector.broadcast %c30_i32 : i32 to vector<1x1024xi32>
    %49 = arith.cmpi slt, %3, %48 : vector<1x1024xi32>
    %c30_i32_14 = arith.constant 30 : i32
    %50 = vector.broadcast %c30_i32_14 : i32 to vector<1x1024xi32>
    %51 = arith.cmpi slt, %1, %50 : vector<1x1024xi32>
    %52 = arith.andi %41, %45 : vector<1x1024xi1>
    %53 = arith.andi %41, %47 : vector<1x1024xi1>
    %54 = arith.andi %43, %45 : vector<1x1024xi1>
    %55 = arith.andi %43, %47 : vector<1x1024xi1>
    %c0 = arith.constant 0 : index
    %c0_15 = arith.constant 0 : index
    %c0_16 = arith.constant 0 : index
    %56 = vector.load %arg1[%c0, %c0_15, %c0_16] : memref<1x8x1024xf32, #tpu.memory_space<vmem>>, vector<1x8x1024xf32>
    %57 = vector.shape_cast %56 : vector<1x8x1024xf32> to vector<8x1024xf32>
    %58 = arith.andi %49, %51 : vector<1x1024xi1>
    %c0_17 = arith.constant 0 : index
    %c0_18 = arith.constant 0 : index
    %59 = vector.load %arg9[%c0_17, %c0_18] : memref<72x1024xf32, #tpu.memory_space<vmem>>, vector<8x1024xf32>
    tpu.vector_store %arg9[%c0_17, %c0_18], %57 {strides = array<i32>} : memref<72x1024xf32, #tpu.memory_space<vmem>>, vector<8x1024xf32>,
    %c1022_i32 = arith.constant 1022 : i32
    %60 = tpu.dynamic_rotate %57 by %c1022_i32 dim 1 : vector<8x1024xf32>, i32 -> vector<8x1024xf32>
    %c0_i32_19 = arith.constant 0 : i32
    %61 = arith.sitofp %c0_i32_19 : i32 to f32
    %62 = vector.shape_cast %51 : vector<1x1024xi1> to vector<1x1024xi1>
    %63 = vector.broadcast %62 : vector<1x1024xi1> to vector<8x1024xi1>
    %64 = vector.broadcast %61 : f32 to vector<8x1024xf32>
    %65 = arith.select %63, %60, %64 : vector<8x1024xi1>, vector<8x1024xf32>
    %c8 = arith.constant 8 : index
    %c0_20 = arith.constant 0 : index
    %66 = vector.load %arg9[%c8, %c0_20] : memref<72x1024xf32, #tpu.memory_space<vmem>>, vector<8x1024xf32>
    tpu.vector_store %arg9[%c8, %c0_20], %65 {strides = array<i32>} : memref<72x1024xf32, #tpu.memory_space<vmem>>, vector<8x1024xf32>,
    %c960_i32 = arith.constant 960 : i32
    %67 = tpu.dynamic_rotate %57 by %c960_i32 dim 1 : vector<8x1024xf32>, i32 -> vector<8x1024xf32>
    %c0_i32_21 = arith.constant 0 : i32
    %68 = arith.sitofp %c0_i32_21 : i32 to f32
    %69 = vector.shape_cast %49 : vector<1x1024xi1> to vector<1x1024xi1>
    %70 = vector.broadcast %69 : vector<1x1024xi1> to vector<8x1024xi1>
    %71 = vector.broadcast %68 : f32 to vector<8x1024xf32>
    %72 = arith.select %70, %67, %71 : vector<8x1024xi1>, vector<8x1024xf32>
    %c16 = arith.constant 16 : index
    %c0_22 = arith.constant 0 : index
    %73 = vector.load %arg9[%c16, %c0_22] : memref<72x1024xf32, #tpu.memory_space<vmem>>, vector<8x1024xf32>
    tpu.vector_store %arg9[%c16, %c0_22], %72 {strides = array<i32>} : memref<72x1024xf32, #tpu.memory_space<vmem>>, vector<8x1024xf32>,
    %c958_i32 = arith.constant 958 : i32
    %74 = tpu.dynamic_rotate %57 by %c958_i32 dim 1 : vector<8x1024xf32>, i32 -> vector<8x1024xf32>
    %c0_i32_23 = arith.constant 0 : i32
    %75 = arith.sitofp %c0_i32_23 : i32 to f32
    %76 = vector.shape_cast %58 : vector<1x1024xi1> to vector<1x1024xi1>
    %77 = vector.broadcast %76 : vector<1x1024xi1> to vector<8x1024xi1>
    %78 = vector.broadcast %75 : f32 to vector<8x1024xf32>
    %79 = arith.select %77, %74, %78 : vector<8x1024xi1>, vector<8x1024xf32>
    %c24 = arith.constant 24 : index
    %c0_24 = arith.constant 0 : index
    %80 = vector.load %arg9[%c24, %c0_24] : memref<72x1024xf32, #tpu.memory_space<vmem>>, vector<8x1024xf32>
    tpu.vector_store %arg9[%c24, %c0_24], %79 {strides = array<i32>} : memref<72x1024xf32, #tpu.memory_space<vmem>>, vector<8x1024xf32>,
    %c0_25 = arith.constant 0 : index
    %c0_26 = arith.constant 0 : index
    %81 = vector.load %arg2[%c0_25, %c0_26] : memref<32x32xf32, #tpu.memory_space<vmem>>, vector<32x32xf32>
    %c0_27 = arith.constant 0 : index
    %c0_28 = arith.constant 0 : index
    %82 = vector.load %arg9[%c0_27, %c0_28] : memref<72x1024xf32, #tpu.memory_space<vmem>>, vector<32x1024xf32>
    %cst = arith.constant dense<0.000000e+00> : vector<32x1024xf32>
    %83 = tpu.matmul %81, %82, %cst {dimension_numbers = #tpu.dot_dimension_numbers<[1], [0], [0], [1], [0, 0, 1, 1], [], []>} : vector<32x32xf32>, vector<32x1024xf32>, vector<32x1024xf32> -> vector<32x1024xf32>
    %c0_29 = arith.constant 0 : index
    %c0_30 = arith.constant 0 : index
    %84 = vector.load %arg3[%c0_29, %c0_30] : memref<32x1xf32, #tpu.memory_space<vmem>>, vector<32x1xf32>
    %85 = vector.broadcast %84 : vector<32x1xf32> to vector<32x1024xf32>
    %86 = arith.addf %83, %85 : vector<32x1024xf32>
    %87 = vector.extract_strided_slice %86 {offsets = [0, 0], sizes = [8, 1024], strides = [1, 1]} : vector<32x1024xf32> to vector<8x1024xf32>
    %88 = vector.extract_strided_slice %86 {offsets = [8, 0], sizes = [8, 1024], strides = [1, 1]} : vector<32x1024xf32> to vector<8x1024xf32>
    %89 = vector.shape_cast %39 : vector<1x1024xi1> to vector<1x1024xi1>
    %90 = vector.broadcast %89 : vector<1x1024xi1> to vector<8x1024xi1>
    %91 = arith.select %90, %87, %88 : vector<8x1024xi1>, vector<8x1024xf32>
    %92 = vector.extract_strided_slice %86 {offsets = [16, 0], sizes = [8, 1024], strides = [1, 1]} : vector<32x1024xf32> to vector<8x1024xf32>
    %93 = vector.extract_strided_slice %86 {offsets = [24, 0], sizes = [8, 1024], strides = [1, 1]} : vector<32x1024xf32> to vector<8x1024xf32>
    %94 = vector.shape_cast %39 : vector<1x1024xi1> to vector<1x1024xi1>
    %95 = vector.broadcast %94 : vector<1x1024xi1> to vector<8x1024xi1>
    %96 = arith.select %95, %92, %93 : vector<8x1024xi1>, vector<8x1024xf32>
    %97 = vector.shape_cast %21 : vector<1x1024xi1> to vector<1x1024xi1>
    %98 = vector.broadcast %97 : vector<1x1024xi1> to vector<8x1024xi1>
    %99 = arith.select %98, %91, %96 : vector<8x1024xi1>, vector<8x1024xf32>
    %c33_i32 = arith.constant 33 : i32
    %100 = tpu.dynamic_rotate %99 by %c33_i32 dim 1 : vector<8x1024xf32>, i32 -> vector<8x1024xf32>
    %c0_i32_31 = arith.constant 0 : i32
    %101 = arith.sitofp %c0_i32_31 : i32 to f32
    %102 = vector.shape_cast %52 : vector<1x1024xi1> to vector<1x1024xi1>
    %103 = vector.broadcast %102 : vector<1x1024xi1> to vector<8x1024xi1>
    %104 = vector.broadcast %101 : f32 to vector<8x1024xf32>
    %105 = arith.select %103, %100, %104 : vector<8x1024xi1>, vector<8x1024xf32>
    %c0_32 = arith.constant 0 : index
    %c0_33 = arith.constant 0 : index
    %106 = vector.load %arg9[%c0_32, %c0_33] : memref<72x1024xf32, #tpu.memory_space<vmem>>, vector<8x1024xf32>
    tpu.vector_store %arg9[%c0_32, %c0_33], %105 {strides = array<i32>} : memref<72x1024xf32, #tpu.memory_space<vmem>>, vector<8x1024xf32>,
    %c32_i32 = arith.constant 32 : i32
    %107 = tpu.dynamic_rotate %99 by %c32_i32 dim 1 : vector<8x1024xf32>, i32 -> vector<8x1024xf32>
    %c0_i32_34 = arith.constant 0 : i32
    %108 = arith.sitofp %c0_i32_34 : i32 to f32
    %109 = vector.shape_cast %41 : vector<1x1024xi1> to vector<1x1024xi1>
    %110 = vector.broadcast %109 : vector<1x1024xi1> to vector<8x1024xi1>
    %111 = vector.broadcast %108 : f32 to vector<8x1024xf32>
    %112 = arith.select %110, %107, %111 : vector<8x1024xi1>, vector<8x1024xf32>
    %c8_35 = arith.constant 8 : index
    %c0_36 = arith.constant 0 : index
    %113 = vector.load %arg9[%c8_35, %c0_36] : memref<72x1024xf32, #tpu.memory_space<vmem>>, vector<8x1024xf32>
    tpu.vector_store %arg9[%c8_35, %c0_36], %112 {strides = array<i32>} : memref<72x1024xf32, #tpu.memory_space<vmem>>, vector<8x1024xf32>,
    %c31_i32_37 = arith.constant 31 : i32
    %114 = tpu.dynamic_rotate %99 by %c31_i32_37 dim 1 : vector<8x1024xf32>, i32 -> vector<8x1024xf32>
    %c0_i32_38 = arith.constant 0 : i32
    %115 = arith.sitofp %c0_i32_38 : i32 to f32
    %116 = vector.shape_cast %53 : vector<1x1024xi1> to vector<1x1024xi1>
    %117 = vector.broadcast %116 : vector<1x1024xi1> to vector<8x1024xi1>
    %118 = vector.broadcast %115 : f32 to vector<8x1024xf32>
    %119 = arith.select %117, %114, %118 : vector<8x1024xi1>, vector<8x1024xf32>
    %c16_39 = arith.constant 16 : index
    %c0_40 = arith.constant 0 : index
    %120 = vector.load %arg9[%c16_39, %c0_40] : memref<72x1024xf32, #tpu.memory_space<vmem>>, vector<8x1024xf32>
    tpu.vector_store %arg9[%c16_39, %c0_40], %119 {strides = array<i32>} : memref<72x1024xf32, #tpu.memory_space<vmem>>, vector<8x1024xf32>,
    %c1_i32_41 = arith.constant 1 : i32
    %121 = tpu.dynamic_rotate %99 by %c1_i32_41 dim 1 : vector<8x1024xf32>, i32 -> vector<8x1024xf32>
    %c0_i32_42 = arith.constant 0 : i32
    %122 = arith.sitofp %c0_i32_42 : i32 to f32
    %123 = vector.shape_cast %45 : vector<1x1024xi1> to vector<1x1024xi1>
    %124 = vector.broadcast %123 : vector<1x1024xi1> to vector<8x1024xi1>
    %125 = vector.broadcast %122 : f32 to vector<8x1024xf32>
    %126 = arith.select %124, %121, %125 : vector<8x1024xi1>, vector<8x1024xf32>
    %c24_43 = arith.constant 24 : index
    %c0_44 = arith.constant 0 : index
    %127 = vector.load %arg9[%c24_43, %c0_44] : memref<72x1024xf32, #tpu.memory_space<vmem>>, vector<8x1024xf32>
    tpu.vector_store %arg9[%c24_43, %c0_44], %126 {strides = array<i32>} : memref<72x1024xf32, #tpu.memory_space<vmem>>, vector<8x1024xf32>,
    %c32 = arith.constant 32 : index
    %c0_45 = arith.constant 0 : index
    %128 = vector.load %arg9[%c32, %c0_45] : memref<72x1024xf32, #tpu.memory_space<vmem>>, vector<8x1024xf32>
    tpu.vector_store %arg9[%c32, %c0_45], %99 {strides = array<i32>} : memref<72x1024xf32, #tpu.memory_space<vmem>>, vector<8x1024xf32>,
    %c1023_i32 = arith.constant 1023 : i32
    %129 = tpu.dynamic_rotate %99 by %c1023_i32 dim 1 : vector<8x1024xf32>, i32 -> vector<8x1024xf32>
    %c0_i32_46 = arith.constant 0 : i32
    %130 = arith.sitofp %c0_i32_46 : i32 to f32
    %131 = vector.shape_cast %47 : vector<1x1024xi1> to vector<1x1024xi1>
    %132 = vector.broadcast %131 : vector<1x1024xi1> to vector<8x1024xi1>
    %133 = vector.broadcast %130 : f32 to vector<8x1024xf32>
    %134 = arith.select %132, %129, %133 : vector<8x1024xi1>, vector<8x1024xf32>
    %c40 = arith.constant 40 : index
    %c0_47 = arith.constant 0 : index
    %135 = vector.load %arg9[%c40, %c0_47] : memref<72x1024xf32, #tpu.memory_space<vmem>>, vector<8x1024xf32>
    tpu.vector_store %arg9[%c40, %c0_47], %134 {strides = array<i32>} : memref<72x1024xf32, #tpu.memory_space<vmem>>, vector<8x1024xf32>,
    %c993_i32 = arith.constant 993 : i32
    %136 = tpu.dynamic_rotate %99 by %c993_i32 dim 1 : vector<8x1024xf32>, i32 -> vector<8x1024xf32>
    %c0_i32_48 = arith.constant 0 : i32
    %137 = arith.sitofp %c0_i32_48 : i32 to f32
    %138 = vector.shape_cast %54 : vector<1x1024xi1> to vector<1x1024xi1>
    %139 = vector.broadcast %138 : vector<1x1024xi1> to vector<8x1024xi1>
    %140 = vector.broadcast %137 : f32 to vector<8x1024xf32>
    %141 = arith.select %139, %136, %140 : vector<8x1024xi1>, vector<8x1024xf32>
    %c48 = arith.constant 48 : index
    %c0_49 = arith.constant 0 : index
    %142 = vector.load %arg9[%c48, %c0_49] : memref<72x1024xf32, #tpu.memory_space<vmem>>, vector<8x1024xf32>
    tpu.vector_store %arg9[%c48, %c0_49], %141 {strides = array<i32>} : memref<72x1024xf32, #tpu.memory_space<vmem>>, vector<8x1024xf32>,
    %c992_i32 = arith.constant 992 : i32
    %143 = tpu.dynamic_rotate %99 by %c992_i32 dim 1 : vector<8x1024xf32>, i32 -> vector<8x1024xf32>
    %c0_i32_50 = arith.constant 0 : i32
    %144 = arith.sitofp %c0_i32_50 : i32 to f32
    %145 = vector.shape_cast %43 : vector<1x1024xi1> to vector<1x1024xi1>
    %146 = vector.broadcast %145 : vector<1x1024xi1> to vector<8x1024xi1>
    %147 = vector.broadcast %144 : f32 to vector<8x1024xf32>
    %148 = arith.select %146, %143, %147 : vector<8x1024xi1>, vector<8x1024xf32>
    %c56 = arith.constant 56 : index
    %c0_51 = arith.constant 0 : index
    %149 = vector.load %arg9[%c56, %c0_51] : memref<72x1024xf32, #tpu.memory_space<vmem>>, vector<8x1024xf32>
    tpu.vector_store %arg9[%c56, %c0_51], %148 {strides = array<i32>} : memref<72x1024xf32, #tpu.memory_space<vmem>>, vector<8x1024xf32>,
    %c991_i32 = arith.constant 991 : i32
    %150 = tpu.dynamic_rotate %99 by %c991_i32 dim 1 : vector<8x1024xf32>, i32 -> vector<8x1024xf32>
    %c0_i32_52 = arith.constant 0 : i32
    %151 = arith.sitofp %c0_i32_52 : i32 to f32
    %152 = vector.shape_cast %55 : vector<1x1024xi1> to vector<1x1024xi1>
    %153 = vector.broadcast %152 : vector<1x1024xi1> to vector<8x1024xi1>
    %154 = vector.broadcast %151 : f32 to vector<8x1024xf32>
    %155 = arith.select %153, %150, %154 : vector<8x1024xi1>, vector<8x1024xf32>
    %c64 = arith.constant 64 : index
    %c0_53 = arith.constant 0 : index
    %156 = vector.load %arg9[%c64, %c0_53] : memref<72x1024xf32, #tpu.memory_space<vmem>>, vector<8x1024xf32>
    tpu.vector_store %arg9[%c64, %c0_53], %155 {strides = array<i32>} : memref<72x1024xf32, #tpu.memory_space<vmem>>, vector<8x1024xf32>,
    %c0_54 = arith.constant 0 : index
    %c0_55 = arith.constant 0 : index
    %157 = vector.load %arg4[%c0_54, %c0_55] : memref<8x72xf32, #tpu.memory_space<vmem>>, vector<8x72xf32>
    %c0_56 = arith.constant 0 : index
    %c0_57 = arith.constant 0 : index
    %158 = vector.load %arg9[%c0_56, %c0_57] : memref<72x1024xf32, #tpu.memory_space<vmem>>, vector<72x1024xf32>
    %cst_58 = arith.constant dense<0.000000e+00> : vector<8x1024xf32>
    %159 = tpu.matmul %157, %158, %cst_58 {dimension_numbers = #tpu.dot_dimension_numbers<[1], [0], [0], [1], [0, 0, 1, 1], [], []>} : vector<8x72xf32>, vector<72x1024xf32>, vector<8x1024xf32> -> vector<8x1024xf32>
    %c0_59 = arith.constant 0 : index
    %c0_60 = arith.constant 0 : index
    %160 = vector.load %arg5[%c0_59, %c0_60] : memref<8x1xf32, #tpu.memory_space<vmem>>, vector<8x1xf32>
    %161 = vector.broadcast %160 : vector<8x1xf32> to vector<8x1024xf32>
    %162 = arith.addf %159, %161 : vector<8x1024xf32>
    %cst_61 = arith.constant 0.000000e+00 : f32
    %163 = vector.broadcast %cst_61 : f32 to vector<8x1024xf32>
    %164 = arith.maximumf %162, %163 : vector<8x1024xf32>
    %c33_i32_62 = arith.constant 33 : i32
    %165 = tpu.dynamic_rotate %164 by %c33_i32_62 dim 1 : vector<8x1024xf32>, i32 -> vector<8x1024xf32>
    %c0_i32_63 = arith.constant 0 : i32
    %166 = arith.sitofp %c0_i32_63 : i32 to f32
    %167 = vector.shape_cast %52 : vector<1x1024xi1> to vector<1x1024xi1>
    %168 = vector.broadcast %167 : vector<1x1024xi1> to vector<8x1024xi1>
    %169 = vector.broadcast %166 : f32 to vector<8x1024xf32>
    %170 = arith.select %168, %165, %169 : vector<8x1024xi1>, vector<8x1024xf32>
    %c0_64 = arith.constant 0 : index
    %c0_65 = arith.constant 0 : index
    %171 = vector.load %arg9[%c0_64, %c0_65] : memref<72x1024xf32, #tpu.memory_space<vmem>>, vector<8x1024xf32>
    tpu.vector_store %arg9[%c0_64, %c0_65], %170 {strides = array<i32>} : memref<72x1024xf32, #tpu.memory_space<vmem>>, vector<8x1024xf32>,
    %c32_i32_66 = arith.constant 32 : i32
    %172 = tpu.dynamic_rotate %164 by %c32_i32_66 dim 1 : vector<8x1024xf32>, i32 -> vector<8x1024xf32>
    %c0_i32_67 = arith.constant 0 : i32
    %173 = arith.sitofp %c0_i32_67 : i32 to f32
    %174 = vector.shape_cast %41 : vector<1x1024xi1> to vector<1x1024xi1>
    %175 = vector.broadcast %174 : vector<1x1024xi1> to vector<8x1024xi1>
    %176 = vector.broadcast %173 : f32 to vector<8x1024xf32>
    %177 = arith.select %175, %172, %176 : vector<8x1024xi1>, vector<8x1024xf32>
    %c8_68 = arith.constant 8 : index
    %c0_69 = arith.constant 0 : index
    %178 = vector.load %arg9[%c8_68, %c0_69] : memref<72x1024xf32, #tpu.memory_space<vmem>>, vector<8x1024xf32>
    tpu.vector_store %arg9[%c8_68, %c0_69], %177 {strides = array<i32>} : memref<72x1024xf32, #tpu.memory_space<vmem>>, vector<8x1024xf32>,
    %c31_i32_70 = arith.constant 31 : i32
    %179 = tpu.dynamic_rotate %164 by %c31_i32_70 dim 1 : vector<8x1024xf32>, i32 -> vector<8x1024xf32>
    %c0_i32_71 = arith.constant 0 : i32
    %180 = arith.sitofp %c0_i32_71 : i32 to f32
    %181 = vector.shape_cast %53 : vector<1x1024xi1> to vector<1x1024xi1>
    %182 = vector.broadcast %181 : vector<1x1024xi1> to vector<8x1024xi1>
    %183 = vector.broadcast %180 : f32 to vector<8x1024xf32>
    %184 = arith.select %182, %179, %183 : vector<8x1024xi1>, vector<8x1024xf32>
    %c16_72 = arith.constant 16 : index
    %c0_73 = arith.constant 0 : index
    %185 = vector.load %arg9[%c16_72, %c0_73] : memref<72x1024xf32, #tpu.memory_space<vmem>>, vector<8x1024xf32>
    tpu.vector_store %arg9[%c16_72, %c0_73], %184 {strides = array<i32>} : memref<72x1024xf32, #tpu.memory_space<vmem>>, vector<8x1024xf32>,
    %c1_i32_74 = arith.constant 1 : i32
    %186 = tpu.dynamic_rotate %164 by %c1_i32_74 dim 1 : vector<8x1024xf32>, i32 -> vector<8x1024xf32>
    %c0_i32_75 = arith.constant 0 : i32
    %187 = arith.sitofp %c0_i32_75 : i32 to f32
    %188 = vector.shape_cast %45 : vector<1x1024xi1> to vector<1x1024xi1>
    %189 = vector.broadcast %188 : vector<1x1024xi1> to vector<8x1024xi1>
    %190 = vector.broadcast %187 : f32 to vector<8x1024xf32>
    %191 = arith.select %189, %186, %190 : vector<8x1024xi1>, vector<8x1024xf32>
    %c24_76 = arith.constant 24 : index
    %c0_77 = arith.constant 0 : index
    %192 = vector.load %arg9[%c24_76, %c0_77] : memref<72x1024xf32, #tpu.memory_space<vmem>>, vector<8x1024xf32>
    tpu.vector_store %arg9[%c24_76, %c0_77], %191 {strides = array<i32>} : memref<72x1024xf32, #tpu.memory_space<vmem>>, vector<8x1024xf32>,
    %c32_78 = arith.constant 32 : index
    %c0_79 = arith.constant 0 : index
    %193 = vector.load %arg9[%c32_78, %c0_79] : memref<72x1024xf32, #tpu.memory_space<vmem>>, vector<8x1024xf32>
    tpu.vector_store %arg9[%c32_78, %c0_79], %164 {strides = array<i32>} : memref<72x1024xf32, #tpu.memory_space<vmem>>, vector<8x1024xf32>,
    %c1023_i32_80 = arith.constant 1023 : i32
    %194 = tpu.dynamic_rotate %164 by %c1023_i32_80 dim 1 : vector<8x1024xf32>, i32 -> vector<8x1024xf32>
    %c0_i32_81 = arith.constant 0 : i32
    %195 = arith.sitofp %c0_i32_81 : i32 to f32
    %196 = vector.shape_cast %47 : vector<1x1024xi1> to vector<1x1024xi1>
    %197 = vector.broadcast %196 : vector<1x1024xi1> to vector<8x1024xi1>
    %198 = vector.broadcast %195 : f32 to vector<8x1024xf32>
    %199 = arith.select %197, %194, %198 : vector<8x1024xi1>, vector<8x1024xf32>
    %c40_82 = arith.constant 40 : index
    %c0_83 = arith.constant 0 : index
    %200 = vector.load %arg9[%c40_82, %c0_83] : memref<72x1024xf32, #tpu.memory_space<vmem>>, vector<8x1024xf32>
    tpu.vector_store %arg9[%c40_82, %c0_83], %199 {strides = array<i32>} : memref<72x1024xf32, #tpu.memory_space<vmem>>, vector<8x1024xf32>,
    %c993_i32_84 = arith.constant 993 : i32
    %201 = tpu.dynamic_rotate %164 by %c993_i32_84 dim 1 : vector<8x1024xf32>, i32 -> vector<8x1024xf32>
    %c0_i32_85 = arith.constant 0 : i32
    %202 = arith.sitofp %c0_i32_85 : i32 to f32
    %203 = vector.shape_cast %54 : vector<1x1024xi1> to vector<1x1024xi1>
    %204 = vector.broadcast %203 : vector<1x1024xi1> to vector<8x1024xi1>
    %205 = vector.broadcast %202 : f32 to vector<8x1024xf32>
    %206 = arith.select %204, %201, %205 : vector<8x1024xi1>, vector<8x1024xf32>
    %c48_86 = arith.constant 48 : index
    %c0_87 = arith.constant 0 : index
    %207 = vector.load %arg9[%c48_86, %c0_87] : memref<72x1024xf32, #tpu.memory_space<vmem>>, vector<8x1024xf32>
    tpu.vector_store %arg9[%c48_86, %c0_87], %206 {strides = array<i32>} : memref<72x1024xf32, #tpu.memory_space<vmem>>, vector<8x1024xf32>,
    %c992_i32_88 = arith.constant 992 : i32
    %208 = tpu.dynamic_rotate %164 by %c992_i32_88 dim 1 : vector<8x1024xf32>, i32 -> vector<8x1024xf32>
    %c0_i32_89 = arith.constant 0 : i32
    %209 = arith.sitofp %c0_i32_89 : i32 to f32
    %210 = vector.shape_cast %43 : vector<1x1024xi1> to vector<1x1024xi1>
    %211 = vector.broadcast %210 : vector<1x1024xi1> to vector<8x1024xi1>
    %212 = vector.broadcast %209 : f32 to vector<8x1024xf32>
    %213 = arith.select %211, %208, %212 : vector<8x1024xi1>, vector<8x1024xf32>
    %c56_90 = arith.constant 56 : index
    %c0_91 = arith.constant 0 : index
    %214 = vector.load %arg9[%c56_90, %c0_91] : memref<72x1024xf32, #tpu.memory_space<vmem>>, vector<8x1024xf32>
    tpu.vector_store %arg9[%c56_90, %c0_91], %213 {strides = array<i32>} : memref<72x1024xf32, #tpu.memory_space<vmem>>, vector<8x1024xf32>,
    %c991_i32_92 = arith.constant 991 : i32
    %215 = tpu.dynamic_rotate %164 by %c991_i32_92 dim 1 : vector<8x1024xf32>, i32 -> vector<8x1024xf32>
    %c0_i32_93 = arith.constant 0 : i32
    %216 = arith.sitofp %c0_i32_93 : i32 to f32
    %217 = vector.shape_cast %55 : vector<1x1024xi1> to vector<1x1024xi1>
    %218 = vector.broadcast %217 : vector<1x1024xi1> to vector<8x1024xi1>
    %219 = vector.broadcast %216 : f32 to vector<8x1024xf32>
    %220 = arith.select %218, %215, %219 : vector<8x1024xi1>, vector<8x1024xf32>
    %c64_94 = arith.constant 64 : index
    %c0_95 = arith.constant 0 : index
    %221 = vector.load %arg9[%c64_94, %c0_95] : memref<72x1024xf32, #tpu.memory_space<vmem>>, vector<8x1024xf32>
    tpu.vector_store %arg9[%c64_94, %c0_95], %220 {strides = array<i32>} : memref<72x1024xf32, #tpu.memory_space<vmem>>, vector<8x1024xf32>,
    %c0_96 = arith.constant 0 : index
    %c0_97 = arith.constant 0 : index
    %222 = vector.load %arg6[%c0_96, %c0_97] : memref<8x72xf32, #tpu.memory_space<vmem>>, vector<8x72xf32>
    %c0_98 = arith.constant 0 : index
    %c0_99 = arith.constant 0 : index
    %223 = vector.load %arg9[%c0_98, %c0_99] : memref<72x1024xf32, #tpu.memory_space<vmem>>, vector<72x1024xf32>
    %cst_100 = arith.constant dense<0.000000e+00> : vector<8x1024xf32>
    %224 = tpu.matmul %222, %223, %cst_100 {dimension_numbers = #tpu.dot_dimension_numbers<[1], [0], [0], [1], [0, 0, 1, 1], [], []>} : vector<8x72xf32>, vector<72x1024xf32>, vector<8x1024xf32> -> vector<8x1024xf32>
    %c0_101 = arith.constant 0 : index
    %c0_102 = arith.constant 0 : index
    %225 = vector.load %arg7[%c0_101, %c0_102] : memref<8x1xf32, #tpu.memory_space<vmem>>, vector<8x1xf32>
    %226 = vector.broadcast %225 : vector<8x1xf32> to vector<8x1024xf32>
    %227 = arith.addf %224, %226 : vector<8x1024xf32>
    %cst_103 = arith.constant 0.000000e+00 : f32
    %228 = vector.broadcast %cst_103 : f32 to vector<8x1024xf32>
    %229 = arith.maximumf %227, %228 : vector<8x1024xf32>
    %c0_104 = arith.constant 0 : index
    %c0_105 = arith.constant 0 : index
    %c0_106 = arith.constant 0 : index
    %230 = vector.load %arg8[%c0_104, %c0_105, %c0_106] : memref<1x8x1024xf32, #tpu.memory_space<vmem>>, vector<1x8x1024xf32>
    %231 = vector.shape_cast %230 : vector<1x8x1024xf32> to vector<8x1024xf32>
    %232 = vector.shape_cast %229 : vector<8x1024xf32> to vector<1x8x1024xf32>
    tpu.vector_store %arg8[%c0_104, %c0_105, %c0_106], %232 {strides = array<i32>} : memref<1x8x1024xf32, #tpu.memory_space<vmem>>, vector<1x8x1024xf32>,
    return
  }
  func.func @transform_0(%arg0: i32) -> (i32, i32, i32) {
    %c0_i32 = arith.constant 0 : i32
    %c0_i32_0 = arith.constant 0 : i32
    %c0_i32_1 = arith.constant 0 : i32
    return %arg0, %c0_i32, %c0_i32_0 : i32, i32, i32
  }
  func.func @transform_1(%arg0: i32) -> (i32, i32) {
    %c0_i32 = arith.constant 0 : i32
    %c0_i32_0 = arith.constant 0 : i32
    %c0_i32_1 = arith.constant 0 : i32
    return %c0_i32, %c0_i32_0 : i32, i32
  }
  func.func @transform_2(%arg0: i32) -> (i32, i32) {
    %c0_i32 = arith.constant 0 : i32
    %c0_i32_0 = arith.constant 0 : i32
    %c0_i32_1 = arith.constant 0 : i32
    return %c0_i32, %c0_i32_0 : i32, i32
  }
  func.func @transform_3(%arg0: i32) -> (i32, i32) {
    %c0_i32 = arith.constant 0 : i32
    %c0_i32_0 = arith.constant 0 : i32
    %c0_i32_1 = arith.constant 0 : i32
    return %c0_i32, %c0_i32_0 : i32, i32
  }
  func.func @transform_4(%arg0: i32) -> (i32, i32) {
    %c0_i32 = arith.constant 0 : i32
    %c0_i32_0 = arith.constant 0 : i32
    %c0_i32_1 = arith.constant 0 : i32
    return %c0_i32, %c0_i32_0 : i32, i32
  }
  func.func @transform_5(%arg0: i32) -> (i32, i32) {
    %c0_i32 = arith.constant 0 : i32
    %c0_i32_0 = arith.constant 0 : i32
    %c0_i32_1 = arith.constant 0 : i32
    return %c0_i32, %c0_i32_0 : i32, i32
  }
  func.func @transform_6(%arg0: i32) -> (i32, i32) {
    %c0_i32 = arith.constant 0 : i32
    %c0_i32_0 = arith.constant 0 : i32
    %c0_i32_1 = arith.constant 0 : i32
    return %c0_i32, %c0_i32_0 : i32, i32
  }
  func.func @transform_7(%arg0: i32) -> (i32, i32, i32) {
    %c0_i32 = arith.constant 0 : i32
    %c0_i32_0 = arith.constant 0 : i32
    %c0_i32_1 = arith.constant 0 : i32
    return %arg0, %c0_i32, %c0_i32_0 : i32, i32, i32
  }
}

</mosaic_0001>

<llo_original>
// kernel: tpu_custom_call.1
$region0: #{tpu_custom_call.1}
  #allocation0 [shape = 'u32[]', space=smem, size = 0x4, offset = 0x4, fixed_abs, tag = 'smem constant byte address 0x4 - core index']
  #allocation1 [shape = 'u32[144,128]{1,0:T(1,128)}', space=vmem, size = 0x12000, scoped, tag = 'internal scratch']
  #allocation2 [shape = 'f32[72,1024]{1,0:T(8,128)}', space=vmem, size = 0x48000, scoped, tag = 'scratch operand']
  %s0 = inlined_call_operand.hbm [shape: f32[2,8,1024], index: 0, kind: input, shape index: {}]
  %s1 = inlined_call_operand.vmem [shape: f32[32,32], index: 1, kind: input, shape index: {}]
  %s2 = inlined_call_operand.vmem [shape: f32[32,1], index: 2, kind: input, shape index: {}]
  %s3 = inlined_call_operand.vmem [shape: f32[8,72], index: 3, kind: input, shape index: {}]
  %s4 = inlined_call_operand.vmem [shape: f32[8,1], index: 4, kind: input, shape index: {}]
  %s5 = inlined_call_operand.vmem [shape: f32[8,72], index: 5, kind: input, shape index: {}]
  %s6 = inlined_call_operand.vmem [shape: f32[8,1], index: 6, kind: input, shape index: {}]
  %s7 = inlined_call_operand.hbm [shape: f32[2,8,1024], index: 7, kind: output, shape index: {}]
  %s8 = sld [smem:[#allocation0]]
  $region65: #{tpu_custom_call.1} parent=0
    _
  %s10 = ssub.s32 1, %s8
  %s11 = scalar_select 0, %s10, %s8
  $region1: #{tpu_custom_call.1} parent=0
    #allocation3 [shape = 'u8[65536]{0}', space=vmem, size = 0x10000, scoped, tag = 'input window, operand 0']
    #allocation4 [shape = 's32[2]{0}', space=sflag, size = 0x8, scoped, tag = 'scoped memory for tpu_custom_call.1']
    #allocation5 [shape = 's32[2]{0}', space=sflag, size = 0x8, scoped, tag = 'scoped memory for tpu_custom_call.1']
    #allocation6 [shape = 'u8[65536]{0}', space=vmem, size = 0x10000, scoped, tag = 'output window, operand 0']
    %12 = vsyncpa [#allocation4], 0
    %s13 = scalar_lea.sflag [#allocation4], 1
    %14 = vsyncpa %s13, 0
    %15 = vsyncpa [#allocation5], 0
    %s16 = scalar_lea.sflag [#allocation5], 1
    %17 = vsyncpa %s16, 0
    loop: start=0, step=1, limit=4
    $region2: #{tpu_custom_call.1} parent=1 // loop_pre_header
      _
    $region3: #{tpu_custom_call.1} parent=1 // loop_header
      %s19 = sphi 0, %s23
      %p20 = scmp.ge.s32.totalorder %s19, 4
      %s29 = sphi 0, %s31
      %s32 = sphi 0, %s29
      %s33 = sphi 0, %s32
      %s49 = sphi 0, %s33
      %s53 = sphi 0, %s53
      %s55 = sphi 0, %s53
      %s56 = sphi 0, %s55
      %s70 = sphi 0, %s56
      %s74 = sphi 0, %s74
      %s76 = sphi 0, %s74
      %s77 = sphi 0, %s76
      %s91 = sphi 0, %s77
      %s95 = sphi 0, %s95
      %s97 = sphi 0, %s95
      %s98 = sphi 0, %s97
      %s112 = sphi 0, %s98
      %s116 = sphi 0, %s116
      %s118 = sphi 0, %s116
      %s119 = sphi 0, %s118
      %s133 = sphi 0, %s119
      %s137 = sphi 0, %s137
      %s139 = sphi 0, %s137
      %s140 = sphi 0, %s139
      %s154 = sphi 0, %s140
      %s158 = sphi 0, %s158
      %s160 = sphi 0, %s158
      %s161 = sphi 0, %s160
      %s175 = sphi 0, %s161
      %s181 = sphi 0, %s183
      %s184 = sphi 0, %s181
      %s185 = sphi 0, %s184
      %s201 = sphi 0, %s185
    $region4: #{tpu_custom_call.1} parent=1 // loop_header_branch
      %22 = sbr.rel (%p20) target = $region8
    $region5: #{tpu_custom_call.1} parent=1 // loop_body
      %s24 = ssub.s32 %s19, 1
      %s25 = ssub.s32 %s19, 2
      %s26 = sadd.s32 %s19, 1
      %s27 = ssub.s32 %s19, %s26
      %p28 = scmp.eq.s32.totalorder %s27, 0
      %s30 = sadd.s32 %s29, 1
      %s31 = scalar_select %p28, %s29, %s30
      %p34 = pneg %p28
      %p35 = scmp.eq.s32.totalorder %s19, 1
      %p36 = por %p34, %p35
      %p37 = scmp.ne.s32.totalorder %s29, %s32
      %p38 = scmp.eq.s32.totalorder %s19, 0
      %p39 = por %p37, %p38
      %p40 = scmp.ne.s32.totalorder %s29, %s32
      %p41 = scmp.eq.s32.totalorder %s24, 1
      %p42 = por %p40, %p41
      %p43 = scmp.ne.s32.totalorder %s32, %s33
      %p44 = scmp.eq.s32.totalorder %s24, 0
      %p45 = por %p43, %p44
      %p46 = scmp.ne.s32.totalorder %s32, %s33
      %p47 = scmp.eq.s32.totalorder %s25, 1
      %p48 = por %p46, %p47
      %p50 = scmp.ne.s32.totalorder %s33, %s49
      %p51 = scmp.eq.s32.totalorder %s25, 0
      %p52 = por %p50, %p51
      %s54 = sadd.s32 %s53, 1
      %p57 = scmp.eq.s32.totalorder %s19, 1
      %p58 = scmp.ne.s32.totalorder %s53, %s55
      %p59 = scmp.eq.s32.totalorder %s19, 0
      %p60 = por %p58, %p59
      %p61 = scmp.ne.s32.totalorder %s53, %s55
      %p62 = scmp.eq.s32.totalorder %s24, 1
      %p63 = por %p61, %p62
      %p64 = scmp.ne.s32.totalorder %s55, %s56
      %p65 = scmp.eq.s32.totalorder %s24, 0
      %p66 = por %p64, %p65
      %p67 = scmp.ne.s32.totalorder %s55, %s56
      %p68 = scmp.eq.s32.totalorder %s25, 1
      %p69 = por %p67, %p68
      %p71 = scmp.ne.s32.totalorder %s56, %s70
      %p72 = scmp.eq.s32.totalorder %s25, 0
      %p73 = por %p71, %p72
      %s75 = sadd.s32 %s74, 1
      %p78 = scmp.eq.s32.totalorder %s19, 1
      %p79 = scmp.ne.s32.totalorder %s74, %s76
      %p80 = scmp.eq.s32.totalorder %s19, 0
      %p81 = por %p79, %p80
      %p82 = scmp.ne.s32.totalorder %s74, %s76
      %p83 = scmp.eq.s32.totalorder %s24, 1
      %p84 = por %p82, %p83
      %p85 = scmp.ne.s32.totalorder %s76, %s77
      %p86 = scmp.eq.s32.totalorder %s24, 0
      %p87 = por %p85, %p86
      %p88 = scmp.ne.s32.totalorder %s76, %s77
      %p89 = scmp.eq.s32.totalorder %s25, 1
      %p90 = por %p88, %p89
      %p92 = scmp.ne.s32.totalorder %s77, %s91
      %p93 = scmp.eq.s32.totalorder %s25, 0
      %p94 = por %p92, %p93
      %s96 = sadd.s32 %s95, 1
      %p99 = scmp.eq.s32.totalorder %s19, 1
      %p100 = scmp.ne.s32.totalorder %s95, %s97
      %p101 = scmp.eq.s32.totalorder %s19, 0
      %p102 = por %p100, %p101
      %p103 = scmp.ne.s32.totalorder %s95, %s97
      %p104 = scmp.eq.s32.totalorder %s24, 1
      %p105 = por %p103, %p104
      %p106 = scmp.ne.s32.totalorder %s97, %s98
      %p107 = scmp.eq.s32.totalorder %s24, 0
      %p108 = por %p106, %p107
      %p109 = scmp.ne.s32.totalorder %s97, %s98
      %p110 = scmp.eq.s32.totalorder %s25, 1
      %p111 = por %p109, %p110
      %p113 = scmp.ne.s32.totalorder %s98, %s112
      %p114 = scmp.eq.s32.totalorder %s25, 0
      %p115 = por %p113, %p114
      %s117 = sadd.s32 %s116, 1
      %p120 = scmp.eq.s32.totalorder %s19, 1
      %p121 = scmp.ne.s32.totalorder %s116, %s118
      %p122 = scmp.eq.s32.totalorder %s19, 0
      %p123 = por %p121, %p122
      %p124 = scmp.ne.s32.totalorder %s116, %s118
      %p125 = scmp.eq.s32.totalorder %s24, 1
      %p126 = por %p124, %p125
      %p127 = scmp.ne.s32.totalorder %s118, %s119
      %p128 = scmp.eq.s32.totalorder %s24, 0
      %p129 = por %p127, %p128
      %p130 = scmp.ne.s32.totalorder %s118, %s119
      %p131 = scmp.eq.s32.totalorder %s25, 1
      %p132 = por %p130, %p131
      %p134 = scmp.ne.s32.totalorder %s119, %s133
      %p135 = scmp.eq.s32.totalorder %s25, 0
      %p136 = por %p134, %p135
      %s138 = sadd.s32 %s137, 1
      %p141 = scmp.eq.s32.totalorder %s19, 1
      %p142 = scmp.ne.s32.totalorder %s137, %s139
      %p143 = scmp.eq.s32.totalorder %s19, 0
      %p144 = por %p142, %p143
      %p145 = scmp.ne.s32.totalorder %s137, %s139
      %p146 = scmp.eq.s32.totalorder %s24, 1
      %p147 = por %p145, %p146
      %p148 = scmp.ne.s32.totalorder %s139, %s140
      %p149 = scmp.eq.s32.totalorder %s24, 0
      %p150 = por %p148, %p149
      %p151 = scmp.ne.s32.totalorder %s139, %s140
      %p152 = scmp.eq.s32.totalorder %s25, 1
      %p153 = por %p151, %p152
      %p155 = scmp.ne.s32.totalorder %s140, %s154
      %p156 = scmp.eq.s32.totalorder %s25, 0
      %p157 = por %p155, %p156
      %s159 = sadd.s32 %s158, 1
      %p162 = scmp.eq.s32.totalorder %s19, 1
      %p163 = scmp.ne.s32.totalorder %s158, %s160
      %p164 = scmp.eq.s32.totalorder %s19, 0
      %p165 = por %p163, %p164
      %p166 = scmp.ne.s32.totalorder %s158, %s160
      %p167 = scmp.eq.s32.totalorder %s24, 1
      %p168 = por %p166, %p167
      %p169 = scmp.ne.s32.totalorder %s160, %s161
      %p170 = scmp.eq.s32.totalorder %s24, 0
      %p171 = por %p169, %p170
      %p172 = scmp.ne.s32.totalorder %s160, %s161
      %p173 = scmp.eq.s32.totalorder %s25, 1
      %p174 = por %p172, %p173
      %p176 = scmp.ne.s32.totalorder %s161, %s175
      %p177 = scmp.eq.s32.totalorder %s25, 0
      %p178 = por %p176, %p177
      %s179 = ssub.s32 %s19, %s26
      %p180 = scmp.eq.s32.totalorder %s179, 0
      %s182 = sadd.s32 %s181, 1
      %s183 = scalar_select %p180, %s181, %s182
      %p186 = pneg %p180
      %p187 = scmp.eq.s32.totalorder %s19, 1
      %p188 = por %p186, %p187
      %p189 = scmp.ne.s32.totalorder %s181, %s184
      %p190 = scmp.eq.s32.totalorder %s19, 0
      %p191 = por %p189, %p190
      %p192 = scmp.ne.s32.totalorder %s181, %s184
      %p193 = scmp.eq.s32.totalorder %s24, 1
      %p194 = por %p192, %p193
      %p195 = scmp.ne.s32.totalorder %s184, %s185
      %p196 = scmp.eq.s32.totalorder %s24, 0
      %p197 = por %p195, %p196
      %p198 = scmp.ne.s32.totalorder %s184, %s185
      %p199 = scmp.eq.s32.totalorder %s25, 1
      %p200 = por %p198, %p199
      %p202 = scmp.ne.s32.totalorder %s185, %s201
      %p203 = scmp.eq.s32.totalorder %s25, 0
      %p204 = por %p202, %p203
      %p205 = scmp.le.s32.totalorder 1, %s19
      %p206 = scmp.lt.s32.totalorder %s19, 3
      %p207 = pnand %p205, %p206
      %p208 = pneg %p207
      // Predicated region
      $region9: #{tpu_custom_call.1} parent=5 // pred_check
        _
      $region10: #{tpu_custom_call.1} parent=5 // pred_check_branch
        %210 = sbr.rel (%p207) target = $region12
      $region11: #{tpu_custom_call.1} parent=5 // pred_region
        %s211 = ssub.s32 %s19, 1
        // Predicated region
        $region13: #{tpu_custom_call.1} parent=11 // pred_check
          %p212 = pneg %p66
        $region14: #{tpu_custom_call.1} parent=11 // pred_check_branch
          %214 = sbr.rel (%p212) target = $region16
        $region15: #{tpu_custom_call.1} parent=11 // pred_region
          _
        $region16: #{tpu_custom_call.1} parent=11 // pred_fallthru
          _
        // Predicated region
        $region17: #{tpu_custom_call.1} parent=11 // pred_check
          %p215 = pneg %p87
        $region18: #{tpu_custom_call.1} parent=11 // pred_check_branch
          %217 = sbr.rel (%p215) target = $region20
        $region19: #{tpu_custom_call.1} parent=11 // pred_region
          _
        $region20: #{tpu_custom_call.1} parent=11 // pred_fallthru
          _
        // Predicated region
        $region21: #{tpu_custom_call.1} parent=11 // pred_check
          %p218 = pneg %p108
        $region22: #{tpu_custom_call.1} parent=11 // pred_check_branch
          %220 = sbr.rel (%p218) target = $region24
        $region23: #{tpu_custom_call.1} parent=11 // pred_region
          _
        $region24: #{tpu_custom_call.1} parent=11 // pred_fallthru
          _
        // Predicated region
        $region25: #{tpu_custom_call.1} parent=11 // pred_check
          %p221 = pneg %p129
        $region26: #{tpu_custom_call.1} parent=11 // pred_check_branch
          %223 = sbr.rel (%p221) target = $region28
        $region27: #{tpu_custom_call.1} parent=11 // pred_region
          _
        $region28: #{tpu_custom_call.1} parent=11 // pred_fallthru
          _
        // Predicated region
        $region29: #{tpu_custom_call.1} parent=11 // pred_check
          %p224 = pneg %p150
        $region30: #{tpu_custom_call.1} parent=11 // pred_check_branch
          %226 = sbr.rel (%p224) target = $region32
        $region31: #{tpu_custom_call.1} parent=11 // pred_region
          _
        $region32: #{tpu_custom_call.1} parent=11 // pred_fallthru
          _
        // Predicated region
        $region33: #{tpu_custom_call.1} parent=11 // pred_check
          %p227 = pneg %p171
        $region34: #{tpu_custom_call.1} parent=11 // pred_check_branch
          %229 = sbr.rel (%p227) target = $region36
        $region35: #{tpu_custom_call.1} parent=11 // pred_region
          _
        $region36: #{tpu_custom_call.1} parent=11 // pred_fallthru
          _
      $region12: #{tpu_custom_call.1} parent=5 // pred_fallthru
        _
      %p230 = scmp.lt.s32.totalorder %s19, 2
      // Predicated region
      $region37: #{tpu_custom_call.1} parent=5 // pred_check
        %p231 = pneg %p230
      $region38: #{tpu_custom_call.1} parent=5 // pred_check_branch
        %233 = sbr.rel (%p231) target = $region40
      $region39: #{tpu_custom_call.1} parent=5 // pred_region
        // Predicated region
        $region41: #{tpu_custom_call.1} parent=39 // pred_check
          %p234 = pneg %p39
        $region42: #{tpu_custom_call.1} parent=39 // pred_check_branch
          %236 = sbr.rel (%p234) target = $region44
        $region43: #{tpu_custom_call.1} parent=39 // pred_region
          %s237 = sand.u32 %s29, 1
          %s238 = scalar_lea.sflag [#allocation4], %s237
          %s239 = sand.u32 %s29, 1
          %s240 = smul.addr %s239, 64
          %s241 = scalar_lea.vmem [#allocation3], %s240
          %s243 = ssub.s32 1024, 1024
          %244 = vsyncadd %s238, %s243
          %s245 = smul.addr %s19, 8
          %s246 = smul.addr %s245, 128
          %s247 = scalar_lea.hbm %s0, %s246
          %s249 = sshll.u32 %s241, 4
          %s250 = int_to_ptr.vmem [resolvable:$true] %s249
          %252 = dma.hbm_to_vmem [thread:$0]  %s247, 1024, %s250, %s238
        $region44: #{tpu_custom_call.1} parent=39 // pred_fallthru
          _
      $region40: #{tpu_custom_call.1} parent=5 // pred_fallthru
        _
      %p253 = scmp.le.s32.totalorder 1, %s19
      %p254 = scmp.lt.s32.totalorder %s19, 3
      %p255 = pnand %p253, %p254
      %p256 = pneg %p255
      // Predicated region
      $region45: #{tpu_custom_call.1} parent=5 // pred_check
        _
      $region46: #{tpu_custom_call.1} parent=5 // pred_check_branch
        %258 = sbr.rel (%p255) target = $region48
      $region47: #{tpu_custom_call.1} parent=5 // pred_region
        %s259 = ssub.s32 %s19, 1
        %s260 = sand.u32 %s32, 1
        %s261 = scalar_lea.sflag [#allocation4], %s260
        %s262 = sand.u32 %s32, 1
        %s263 = smul.addr %s262, 64
        %s264 = scalar_lea.vmem [#allocation3], %s263
        // Predicated region
        $region49: #{tpu_custom_call.1} parent=47 // pred_check
          %p265 = pneg %p45
        $region50: #{tpu_custom_call.1} parent=47 // pred_check_branch
          %267 = sbr.rel (%p265) target = $region52
        $region51: #{tpu_custom_call.1} parent=47 // pred_region
          %268 = dma.done %s261, 1024
        $region52: #{tpu_custom_call.1} parent=47 // pred_fallthru
          _
        %s269 = sand.u32 %s32, 1
        %s270 = scalar_lea.sflag [#allocation4], %s269
        %s271 = sand.u32 %s32, 1
        %s272 = smul.addr %s271, 64
        %s273 = scalar_lea.vmem [#allocation3], %s272
        %p274 = pneg %p45
        %p275 = pneg %p42
        %p276 = pneg %p66
        %p277 = pneg %p63
        %p278 = pneg %p87
        %p279 = pneg %p84
        %p280 = pneg %p108
        %p281 = pneg %p105
        %p282 = pneg %p129
        %p283 = pneg %p126
        %p284 = pneg %p150
        %p285 = pneg %p147
        %p286 = pneg %p171
        %p287 = pneg %p168
        %p288 = pneg %p197
        %p289 = pneg %p194
        %s290 = sand.u32 %s184, 1
        %s291 = scalar_lea.sflag [#allocation5], %s290
        %s292 = sand.u32 %s184, 1
        %s293 = smul.addr %s292, 64
        %s294 = scalar_lea.vmem [#allocation6], %s293
        %v295 = vlaneseq
        %v296 = vand.u32 %v295, 127
        %v297 = vcombine.high %v296, 0
        %v299 = vunpack.c.l.s4 1983009808
        %v300 = vunpack.c.0.s8 %v299
        %v301 = vlaneseq
        %v302 = vshrl.u32 %v301, 7
        %v303 = vsub.s32 %v300, %v302
        %v304 = vrot.slane %v296, %v303
        %v306 = vunpack.c.l.s4 1983009808
        %v307 = vunpack.c.0.s8 %v306
        %v308 = vlaneseq
        %v309 = vshrl.u32 %v308, 7
        %v310 = vsub.s32 %v307, %v309
        %v311 = vrot.slane %v297, %v310
        %v312 = vcombine.high %v304, 0
        %v314 = vunpack.c.l.s4 1934713408
        %v315 = vunpack.c.0.s8 %v314
        %v316 = vlaneseq
        %v317 = vshrl.u32 %v316, 7
        %v318 = vsub.s32 %v315, %v317
        %v319 = vrot.slane %v304, %v318
        %v321 = vunpack.c.l.s4 1934713408
        %v322 = vunpack.c.0.s8 %v321
        %v323 = vlaneseq
        %v324 = vshrl.u32 %v323, 7
        %v325 = vsub.s32 %v322, %v324
        %v326 = vrot.slane %v312, %v325
        %v327 = vcombine.high %v311, 0
        %v329 = vunpack.c.l.s4 1934713408
        %v330 = vunpack.c.0.s8 %v329
        %v331 = vlaneseq
        %v332 = vshrl.u32 %v331, 7
        %v333 = vsub.s32 %v330, %v332
        %v334 = vrot.slane %v311, %v333
        %v336 = vunpack.c.l.s4 1934713408
        %v337 = vunpack.c.0.s8 %v336
        %v338 = vlaneseq
        %v339 = vshrl.u32 %v338, 7
        %v340 = vsub.s32 %v337, %v339
        %v341 = vrot.slane %v327, %v340
        %v342 = vcombine.high %v319, 0
        %v343 = vcombine.high %v326, 0
        %v344 = vcombine.high %v334, 0
        %v345 = vcombine.high %v341, 0
        %346 = vrot.lane.b32.xlu0 %v342, 32
        %v347 = vpop.permute.xlu0 %346
        %348 = vrot.lane.b32.xlu0 %v326, 64
        %v349 = vpop.permute.xlu0 %348
        %350 = vrot.lane.b32.xlu0 %v343, 96
        %v351 = vpop.permute.xlu0 %350
        %352 = vrot.lane.b32.xlu0 %v344, 32
        %v353 = vpop.permute.xlu0 %352
        %354 = vrot.lane.b32.xlu0 %v341, 64
        %v355 = vpop.permute.xlu0 %354
        %356 = vrot.lane.b32.xlu0 %v345, 96
        %v357 = vpop.permute.xlu0 %356
        %vm358 = vcmask 261120
        %v359 = vsel %vm358, %v319, %v347
        %vm360 = vcmask 523264
        %v361 = vsel %vm360, %v359, %v349
        %vm362 = vcmask 785408
        %v363 = vsel %vm362, %v361, %v351
        %v364 = vsel %vm358, %v334, %v353
        %v365 = vsel %vm360, %v364, %v355
        %v366 = vsel %vm362, %v365, %v357
        %v367 = vlaneseq
        %v368 = vshrl.u32 %v367, 7
        %v369 = vadd.s32 %v368, 8
        %v370 = vadd.s32 %v368, 16
        %v371 = vadd.s32 %v368, 24
        %v372 = vcombine.high %v368, 0
        %v374 = vunpack.c.l.s4 1983009808
        %v375 = vunpack.c.0.s8 %v374
        %v376 = vlaneseq
        %v377 = vshrl.u32 %v376, 7
        %v378 = vsub.s32 %v375, %v377
        %v379 = vrot.slane %v368, %v378
        %v381 = vunpack.c.l.s4 1983009808
        %v382 = vunpack.c.0.s8 %v381
        %v383 = vlaneseq
        %v384 = vshrl.u32 %v383, 7
        %v385 = vsub.s32 %v382, %v384
        %v386 = vrot.slane %v372, %v385
        %v387 = vcombine.high %v379, 0
        %v389 = vunpack.c.l.s4 1934713408
        %v390 = vunpack.c.0.s8 %v389
        %v391 = vlaneseq
        %v392 = vshrl.u32 %v391, 7
        %v393 = vsub.s32 %v390, %v392
        %v394 = vrot.slane %v379, %v393
        %v396 = vunpack.c.l.s4 1934713408
        %v397 = vunpack.c.0.s8 %v396
        %v398 = vlaneseq
        %v399 = vshrl.u32 %v398, 7
        %v400 = vsub.s32 %v397, %v399
        %v401 = vrot.slane %v387, %v400
        %v402 = vcombine.high %v386, 0
        %v404 = vunpack.c.l.s4 1934713408
        %v405 = vunpack.c.0.s8 %v404
        %v406 = vlaneseq
        %v407 = vshrl.u32 %v406, 7
        %v408 = vsub.s32 %v405, %v407
        %v409 = vrot.slane %v386, %v408
        %v411 = vunpack.c.l.s4 1934713408
        %v412 = vunpack.c.0.s8 %v411
        %v413 = vlaneseq
        %v414 = vshrl.u32 %v413, 7
        %v415 = vsub.s32 %v412, %v414
        %v416 = vrot.slane %v402, %v415
        %v417 = vcombine.high %v394, 0
        %v418 = vcombine.high %v401, 0
        %v419 = vcombine.high %v409, 0
        %v420 = vcombine.high %v416, 0
        %v421 = vcombine.high %v369, 0
        %v423 = vunpack.c.l.s4 1983009808
        %v424 = vunpack.c.0.s8 %v423
        %v425 = vlaneseq
        %v426 = vshrl.u32 %v425, 7
        %v427 = vsub.s32 %v424, %v426
        %v428 = vrot.slane %v369, %v427
        %v430 = vunpack.c.l.s4 1983009808
        %v431 = vunpack.c.0.s8 %v430
        %v432 = vlaneseq
        %v433 = vshrl.u32 %v432, 7
        %v434 = vsub.s32 %v431, %v433
        %v435 = vrot.slane %v421, %v434
        %v436 = vcombine.high %v428, 0
        %v438 = vunpack.c.l.s4 1934713408
        %v439 = vunpack.c.0.s8 %v438
        %v440 = vlaneseq
        %v441 = vshrl.u32 %v440, 7
        %v442 = vsub.s32 %v439, %v441
        %v443 = vrot.slane %v428, %v442
        %v445 = vunpack.c.l.s4 1934713408
        %v446 = vunpack.c.0.s8 %v445
        %v447 = vlaneseq
        %v448 = vshrl.u32 %v447, 7
        %v449 = vsub.s32 %v446, %v448
        %v450 = vrot.slane %v436, %v449
        %v451 = vcombine.high %v435, 0
        %v453 = vunpack.c.l.s4 1934713408
        %v454 = vunpack.c.0.s8 %v453
        %v455 = vlaneseq
        %v456 = vshrl.u32 %v455, 7
        %v457 = vsub.s32 %v454, %v456
        %v458 = vrot.slane %v435, %v457
        %v460 = vunpack.c.l.s4 1934713408
        %v461 = vunpack.c.0.s8 %v460
        %v462 = vlaneseq
        %v463 = vshrl.u32 %v462, 7
        %v464 = vsub.s32 %v461, %v463
        %v465 = vrot.slane %v451, %v464
        %v466 = vcombine.high %v443, 0
        %v467 = vcombine.high %v450, 0
        %v468 = vcombine.high %v458, 0
        %v469 = vcombine.high %v465, 0
        %v470 = vcombine.high %v370, 0
        %v472 = vunpack.c.l.s4 1983009808
        %v473 = vunpack.c.0.s8 %v472
        %v474 = vlaneseq
        %v475 = vshrl.u32 %v474, 7
        %v476 = vsub.s32 %v473, %v475
        %v477 = vrot.slane %v370, %v476
        %v479 = vunpack.c.l.s4 1983009808
        %v480 = vunpack.c.0.s8 %v479
        %v481 = vlaneseq
        %v482 = vshrl.u32 %v481, 7
        %v483 = vsub.s32 %v480, %v482
        %v484 = vrot.slane %v470, %v483
        %v485 = vcombine.high %v477, 0
        %v487 = vunpack.c.l.s4 1934713408
        %v488 = vunpack.c.0.s8 %v487
        %v489 = vlaneseq
        %v490 = vshrl.u32 %v489, 7
        %v491 = vsub.s32 %v488, %v490
        %v492 = vrot.slane %v477, %v491
        %v494 = vunpack.c.l.s4 1934713408
        %v495 = vunpack.c.0.s8 %v494
        %v496 = vlaneseq
        %v497 = vshrl.u32 %v496, 7
        %v498 = vsub.s32 %v495, %v497
        %v499 = vrot.slane %v485, %v498
        %v500 = vcombine.high %v484, 0
        %v502 = vunpack.c.l.s4 1934713408
        %v503 = vunpack.c.0.s8 %v502
        %v504 = vlaneseq
        %v505 = vshrl.u32 %v504, 7
        %v506 = vsub.s32 %v503, %v505
        %v507 = vrot.slane %v484, %v506
        %v509 = vunpack.c.l.s4 1934713408
        %v510 = vunpack.c.0.s8 %v509
        %v511 = vlaneseq
        %v512 = vshrl.u32 %v511, 7
        %v513 = vsub.s32 %v510, %v512
        %v514 = vrot.slane %v500, %v513
        %v515 = vcombine.high %v492, 0
        %v516 = vcombine.high %v499, 0
        %v517 = vcombine.high %v507, 0
        %v518 = vcombine.high %v514, 0
        %v519 = vcombine.high %v371, 0
        %v521 = vunpack.c.l.s4 1983009808
        %v522 = vunpack.c.0.s8 %v521
        %v523 = vlaneseq
        %v524 = vshrl.u32 %v523, 7
        %v525 = vsub.s32 %v522, %v524
        %v526 = vrot.slane %v371, %v525
        %v528 = vunpack.c.l.s4 1983009808
        %v529 = vunpack.c.0.s8 %v528
        %v530 = vlaneseq
        %v531 = vshrl.u32 %v530, 7
        %v532 = vsub.s32 %v529, %v531
        %v533 = vrot.slane %v519, %v532
        %v534 = vcombine.high %v526, 0
        %v536 = vunpack.c.l.s4 1934713408
        %v537 = vunpack.c.0.s8 %v536
        %v538 = vlaneseq
        %v539 = vshrl.u32 %v538, 7
        %v540 = vsub.s32 %v537, %v539
        %v541 = vrot.slane %v526, %v540
        %v543 = vunpack.c.l.s4 1934713408
        %v544 = vunpack.c.0.s8 %v543
        %v545 = vlaneseq
        %v546 = vshrl.u32 %v545, 7
        %v547 = vsub.s32 %v544, %v546
        %v548 = vrot.slane %v534, %v547
        %v549 = vcombine.high %v533, 0
        %v551 = vunpack.c.l.s4 1934713408
        %v552 = vunpack.c.0.s8 %v551
        %v553 = vlaneseq
        %v554 = vshrl.u32 %v553, 7
        %v555 = vsub.s32 %v552, %v554
        %v556 = vrot.slane %v533, %v555
        %v558 = vunpack.c.l.s4 1934713408
        %v559 = vunpack.c.0.s8 %v558
        %v560 = vlaneseq
        %v561 = vshrl.u32 %v560, 7
        %v562 = vsub.s32 %v559, %v561
        %v563 = vrot.slane %v549, %v562
        %v564 = vcombine.high %v541, 0
        %v565 = vcombine.high %v548, 0
        %v566 = vcombine.high %v556, 0
        %v567 = vcombine.high %v563, 0
        %568 = vrot.lane.b32.xlu0 %v417, 32
        %v569 = vpop.permute.xlu0 %568
        %570 = vrot.lane.b32.xlu0 %v401, 64
        %v571 = vpop.permute.xlu0 %570
        %572 = vrot.lane.b32.xlu0 %v418, 96
        %v573 = vpop.permute.xlu0 %572
        %574 = vrot.lane.b32.xlu0 %v419, 32
        %v575 = vpop.permute.xlu0 %574
        %576 = vrot.lane.b32.xlu0 %v416, 64
        %v577 = vpop.permute.xlu0 %576
        %578 = vrot.lane.b32.xlu0 %v420, 96
        %v579 = vpop.permute.xlu0 %578
        %580 = vrot.lane.b32.xlu0 %v466, 32
        %v581 = vpop.permute.xlu0 %580
        %582 = vrot.lane.b32.xlu0 %v450, 64
        %v583 = vpop.permute.xlu0 %582
        %584 = vrot.lane.b32.xlu0 %v467, 96
        %v585 = vpop.permute.xlu0 %584
        %586 = vrot.lane.b32.xlu0 %v468, 32
        %v587 = vpop.permute.xlu0 %586
        %588 = vrot.lane.b32.xlu0 %v465, 64
        %v589 = vpop.permute.xlu0 %588
        %590 = vrot.lane.b32.xlu0 %v469, 96
        %v591 = vpop.permute.xlu0 %590
        %592 = vrot.lane.b32.xlu0 %v515, 32
        %v593 = vpop.permute.xlu0 %592
        %594 = vrot.lane.b32.xlu0 %v499, 64
        %v595 = vpop.permute.xlu0 %594
        %596 = vrot.lane.b32.xlu0 %v516, 96
        %v597 = vpop.permute.xlu0 %596
        %598 = vrot.lane.b32.xlu0 %v517, 32
        %v599 = vpop.permute.xlu0 %598
        %600 = vrot.lane.b32.xlu0 %v514, 64
        %v601 = vpop.permute.xlu0 %600
        %602 = vrot.lane.b32.xlu0 %v518, 96
        %v603 = vpop.permute.xlu0 %602
        %604 = vrot.lane.b32.xlu0 %v564, 32
        %v605 = vpop.permute.xlu0 %604
        %606 = vrot.lane.b32.xlu0 %v548, 64
        %v607 = vpop.permute.xlu0 %606
        %608 = vrot.lane.b32.xlu0 %v565, 96
        %v609 = vpop.permute.xlu0 %608
        %610 = vrot.lane.b32.xlu0 %v566, 32
        %v611 = vpop.permute.xlu0 %610
        %612 = vrot.lane.b32.xlu0 %v563, 64
        %v613 = vpop.permute.xlu0 %612
        %614 = vrot.lane.b32.xlu0 %v567, 96
        %v615 = vpop.permute.xlu0 %614
        %v616 = vsel %vm358, %v394, %v569
        %v617 = vsel %vm360, %v616, %v571
        %v618 = vsel %vm362, %v617, %v573
        %v619 = vsel %vm358, %v409, %v575
        %v620 = vsel %vm360, %v619, %v577
        %v621 = vsel %vm362, %v620, %v579
        %v622 = vsel %vm358, %v443, %v581
        %v623 = vsel %vm360, %v622, %v583
        %v624 = vsel %vm362, %v623, %v585
        %v625 = vsel %vm358, %v458, %v587
        %v626 = vsel %vm360, %v625, %v589
        %v627 = vsel %vm362, %v626, %v591
        %v628 = vsel %vm358, %v492, %v593
        %v629 = vsel %vm360, %v628, %v595
        %v630 = vsel %vm362, %v629, %v597
        %v631 = vsel %vm358, %v507, %v599
        %v632 = vsel %vm360, %v631, %v601
        %v633 = vsel %vm362, %v632, %v603
        %v634 = vsel %vm358, %v541, %v605
        %v635 = vsel %vm360, %v634, %v607
        %v636 = vsel %vm362, %v635, %v609
        %v637 = vsel %vm358, %v556, %v611
        %v638 = vsel %vm360, %v637, %v613
        %v639 = vsel %vm362, %v638, %v615
        %vm640 = vcmp.lt.s32.totalorder %v618, 0
        %v641 = vsub.s32 0, %v618
        %v642 = vsel %vm640, %v641, %v618
        %v643 = vshrl.u32 %v642, 1
        %v644 = vand.u32 %v642, 1
        %v645 = vsub.s32 0, %v644
        %v646 = vsel %vm640, %v645, %v644
        %vm647 = vcmp.lt.s32.totalorder %v621, 0
        %v648 = vsub.s32 0, %v621
        %v649 = vsel %vm647, %v648, %v621
        %v650 = vshrl.u32 %v649, 1
        %v651 = vand.u32 %v649, 1
        %v652 = vsub.s32 0, %v651
        %v653 = vsel %vm647, %v652, %v651
        %vm654 = vcmp.lt.s32.totalorder %v624, 0
        %v655 = vsub.s32 0, %v624
        %v656 = vsel %vm654, %v655, %v624
        %v657 = vshrl.u32 %v656, 1
        %v658 = vand.u32 %v656, 1
        %v659 = vsub.s32 0, %v658
        %v660 = vsel %vm654, %v659, %v658
        %vm661 = vcmp.lt.s32.totalorder %v627, 0
        %v662 = vsub.s32 0, %v627
        %v663 = vsel %vm661, %v662, %v627
        %v664 = vshrl.u32 %v663, 1
        %v665 = vand.u32 %v663, 1
        %v666 = vsub.s32 0, %v665
        %v667 = vsel %vm661, %v666, %v665
        %vm668 = vcmp.lt.s32.totalorder %v630, 0
        %v669 = vsub.s32 0, %v630
        %v670 = vsel %vm668, %v669, %v630
        %v671 = vshrl.u32 %v670, 1
        %v672 = vand.u32 %v670, 1
        %v673 = vsub.s32 0, %v672
        %v674 = vsel %vm668, %v673, %v672
        %vm675 = vcmp.lt.s32.totalorder %v633, 0
        %v676 = vsub.s32 0, %v633
        %v677 = vsel %vm675, %v676, %v633
        %v678 = vshrl.u32 %v677, 1
        %v679 = vand.u32 %v677, 1
        %v680 = vsub.s32 0, %v679
        %v681 = vsel %vm675, %v680, %v679
        %vm682 = vcmp.lt.s32.totalorder %v636, 0
        %v683 = vsub.s32 0, %v636
        %v684 = vsel %vm682, %v683, %v636
        %v685 = vshrl.u32 %v684, 1
        %v686 = vand.u32 %v684, 1
        %v687 = vsub.s32 0, %v686
        %v688 = vsel %vm682, %v687, %v686
        %vm689 = vcmp.lt.s32.totalorder %v639, 0
        %v690 = vsub.s32 0, %v639
        %v691 = vsel %vm689, %v690, %v639
        %v692 = vshrl.u32 %v691, 1
        %v693 = vand.u32 %v691, 1
        %v694 = vsub.s32 0, %v693
        %v695 = vsel %vm689, %v694, %v693
        %vm696 = vcmp.ne.s32.totalorder %v646, 0
        %vm697 = vcmp.ne.s32.totalorder %v653, 0
        %vm698 = vcmp.ne.s32.totalorder %v660, 0
        %vm699 = vcmp.ne.s32.totalorder %v667, 0
        %vm700 = vcmp.ne.s32.totalorder %v674, 0
        %vm701 = vcmp.ne.s32.totalorder %v681, 0
        %vm702 = vcmp.ne.s32.totalorder %v688, 0
        %vm703 = vcmp.ne.s32.totalorder %v695, 0
        %vm704 = vcmp.lt.s32.totalorder %v646, 0
        %vm705 = vcmp.lt.s32.totalorder %v653, 0
        %vm706 = vcmp.lt.s32.totalorder %v660, 0
        %vm707 = vcmp.lt.s32.totalorder %v667, 0
        %vm708 = vcmp.lt.s32.totalorder %v674, 0
        %vm709 = vcmp.lt.s32.totalorder %v681, 0
        %vm710 = vcmp.lt.s32.totalorder %v688, 0
        %vm711 = vcmp.lt.s32.totalorder %v695, 0
        %vm712 = vmand %vm704, %vm696
        %vm713 = vmand %vm705, %vm697
        %vm714 = vmand %vm706, %vm698
        %vm715 = vmand %vm707, %vm699
        %vm716 = vmand %vm708, %vm700
        %vm717 = vmand %vm709, %vm701
        %vm718 = vmand %vm710, %vm702
        %vm719 = vmand %vm711, %vm703
        %v720 = vadd.s32 %v646, 2
        %v721 = vadd.s32 %v653, 2
        %v722 = vadd.s32 %v660, 2
        %v723 = vadd.s32 %v667, 2
        %v724 = vadd.s32 %v674, 2
        %v725 = vadd.s32 %v681, 2
        %v726 = vadd.s32 %v688, 2
        %v727 = vadd.s32 %v695, 2
        %v728 = vsel %vm712, %v720, %v646
        %v729 = vsel %vm713, %v721, %v653
        %v730 = vsel %vm714, %v722, %v660
        %v731 = vsel %vm715, %v723, %v667
        %v732 = vsel %vm716, %v724, %v674
        %v733 = vsel %vm717, %v725, %v681
        %v734 = vsel %vm718, %v726, %v688
        %v735 = vsel %vm719, %v727, %v695
        %vm736 = vcmp.eq.s32.totalorder %v728, 0
        %vm737 = vcmp.eq.s32.totalorder %v729, 0
        %vm738 = vcmp.eq.s32.totalorder %v730, 0
        %vm739 = vcmp.eq.s32.totalorder %v731, 0
        %vm740 = vcmp.eq.s32.totalorder %v732, 0
        %vm741 = vcmp.eq.s32.totalorder %v733, 0
        %vm742 = vcmp.eq.s32.totalorder %v734, 0
        %vm743 = vcmp.eq.s32.totalorder %v735, 0
        %vm744 = vcmp.lt.s32.totalorder %v363, 0
        %v745 = vsub.s32 0, %v363
        %v746 = vsel %vm744, %v745, %v363
        %v747 = vshrl.u32 %v746, 1
        %v748 = vand.u32 %v746, 1
        %v749 = vsub.s32 0, %v748
        %v750 = vsel %vm744, %v749, %v748
        %vm751 = vcmp.lt.s32.totalorder %v366, 0
        %v752 = vsub.s32 0, %v366
        %v753 = vsel %vm751, %v752, %v366
        %v754 = vshrl.u32 %v753, 1
        %v755 = vand.u32 %v753, 1
        %v756 = vsub.s32 0, %v755
        %v757 = vsel %vm751, %v756, %v755
        %vm758 = vcmp.ne.s32.totalorder %v750, 0
        %vm759 = vcmp.ne.s32.totalorder %v757, 0
        %vm760 = vcmp.lt.s32.totalorder %v750, 0
        %vm761 = vcmp.lt.s32.totalorder %v757, 0
        %vm762 = vmand %vm760, %vm758
        %vm763 = vmand %vm761, %vm759
        %v764 = vadd.s32 %v750, 2
        %v765 = vadd.s32 %v757, 2
        %v766 = vsel %vm762, %v764, %v750
        %v767 = vsel %vm763, %v765, %v757
        %vm768 = vcmp.eq.s32.totalorder %v766, 0
        %vm769 = vcmp.eq.s32.totalorder %v767, 0
        %vm770 = vcmp.ge.s32.totalorder %v618, 1
        %vm771 = vcmp.ge.s32.totalorder %v621, 1
        %vm772 = vcmp.ge.s32.totalorder %v624, 1
        %vm773 = vcmp.ge.s32.totalorder %v627, 1
        %vm774 = vcmp.ge.s32.totalorder %v630, 1
        %vm775 = vcmp.ge.s32.totalorder %v633, 1
        %vm776 = vcmp.ge.s32.totalorder %v636, 1
        %vm777 = vcmp.ge.s32.totalorder %v639, 1
        %vm778 = vcmp.lt.s32.totalorder %v618, 31
        %vm779 = vcmp.lt.s32.totalorder %v621, 31
        %vm780 = vcmp.lt.s32.totalorder %v624, 31
        %vm781 = vcmp.lt.s32.totalorder %v627, 31
        %vm782 = vcmp.lt.s32.totalorder %v630, 31
        %vm783 = vcmp.lt.s32.totalorder %v633, 31
        %vm784 = vcmp.lt.s32.totalorder %v636, 31
        %vm785 = vcmp.lt.s32.totalorder %v639, 31
        %vm786 = vcmp.ge.s32.totalorder %v363, 1
        %vm787 = vcmp.ge.s32.totalorder %v366, 1
        %vm788 = vcmp.lt.s32.totalorder %v363, 31
        %vm789 = vcmp.lt.s32.totalorder %v366, 31
        %vm790 = vcmp.lt.s32.totalorder %v618, 30
        %vm791 = vcmp.lt.s32.totalorder %v621, 30
        %vm792 = vcmp.lt.s32.totalorder %v624, 30
        %vm793 = vcmp.lt.s32.totalorder %v627, 30
        %vm794 = vcmp.lt.s32.totalorder %v630, 30
        %vm795 = vcmp.lt.s32.totalorder %v633, 30
        %vm796 = vcmp.lt.s32.totalorder %v636, 30
        %vm797 = vcmp.lt.s32.totalorder %v639, 30
        %vm798 = vcmp.lt.s32.totalorder %v363, 30
        %vm799 = vcmp.lt.s32.totalorder %v366, 30
        %vm800 = vmand %vm770, %vm786
        %vm801 = vmand %vm771, %vm787
        %vm802 = vmand %vm772, %vm786
        %vm803 = vmand %vm773, %vm787
        %vm804 = vmand %vm774, %vm786
        %vm805 = vmand %vm775, %vm787
        %vm806 = vmand %vm776, %vm786
        %vm807 = vmand %vm777, %vm787
        %vm808 = vmand %vm770, %vm788
        %vm809 = vmand %vm771, %vm789
        %vm810 = vmand %vm772, %vm788
        %vm811 = vmand %vm773, %vm789
        %vm812 = vmand %vm774, %vm788
        %vm813 = vmand %vm775, %vm789
        %vm814 = vmand %vm776, %vm788
        %vm815 = vmand %vm777, %vm789
        %vm816 = vmand %vm778, %vm786
        %vm817 = vmand %vm779, %vm787
        %vm818 = vmand %vm780, %vm786
        %vm819 = vmand %vm781, %vm787
        %vm820 = vmand %vm782, %vm786
        %vm821 = vmand %vm783, %vm787
        %vm822 = vmand %vm784, %vm786
        %vm823 = vmand %vm785, %vm787
        %vm824 = vmand %vm778, %vm788
        %vm825 = vmand %vm779, %vm789
        %vm826 = vmand %vm780, %vm788
        %vm827 = vmand %vm781, %vm789
        %vm828 = vmand %vm782, %vm788
        %vm829 = vmand %vm783, %vm789
        %vm830 = vmand %vm784, %vm788
        %vm831 = vmand %vm785, %vm789
        %v832 = vld [vmem:[%s264] sm:$0xff]
        %v833 = vld [vmem:[%s264 + $0x8] sm:$0xff]
        %v834 = vld [vmem:[%s264 + $0x10] sm:$0xff]
        %v835 = vld [vmem:[%s264 + $0x18] sm:$0xff]
        %v836 = vld [vmem:[%s264 + $0x20] sm:$0xff]
        %v837 = vld [vmem:[%s264 + $0x28] sm:$0xff]
        %v838 = vld [vmem:[%s264 + $0x30] sm:$0xff]
        %v839 = vld [vmem:[%s264 + $0x38] sm:$0xff]
        %vm840 = vmand %vm790, %vm798
        %vm841 = vmand %vm791, %vm799
        %vm842 = vmand %vm792, %vm798
        %vm843 = vmand %vm793, %vm799
        %vm844 = vmand %vm794, %vm798
        %vm845 = vmand %vm795, %vm799
        %vm846 = vmand %vm796, %vm798
        %vm847 = vmand %vm797, %vm799
        %848 = vst [vmem:[#allocation2] sm:$0xff] %v832
        %849 = vst [vmem:[#allocation2 + $0x8] sm:$0xff] %v833
        %850 = vst [vmem:[#allocation2 + $0x10] sm:$0xff] %v834
        %851 = vst [vmem:[#allocation2 + $0x18] sm:$0xff] %v835
        %852 = vst [vmem:[#allocation2 + $0x20] sm:$0xff] %v836
        %853 = vst [vmem:[#allocation2 + $0x28] sm:$0xff] %v837
        %854 = vst [vmem:[#allocation2 + $0x30] sm:$0xff] %v838
        %855 = vst [vmem:[#allocation2 + $0x38] sm:$0xff] %v839
        %856 = vrot.lane.b32.xlu0 %v832, 126
        %v857 = vpop.permute.xlu0 %856
        %858 = vrot.lane.b32.xlu0 %v833, 126
        %v859 = vpop.permute.xlu0 %858
        %860 = vrot.lane.b32.xlu0 %v834, 126
        %v861 = vpop.permute.xlu0 %860
        %862 = vrot.lane.b32.xlu0 %v835, 126
        %v863 = vpop.permute.xlu0 %862
        %864 = vrot.lane.b32.xlu0 %v836, 126
        %v865 = vpop.permute.xlu0 %864
        %866 = vrot.lane.b32.xlu0 %v837, 126
        %v867 = vpop.permute.xlu0 %866
        %868 = vrot.lane.b32.xlu0 %v838, 126
        %v869 = vpop.permute.xlu0 %868
        %870 = vrot.lane.b32.xlu0 %v839, 126
        %v871 = vpop.permute.xlu0 %870
        %vm872 = vcmp.lt.s32.totalorder %v296, 126
        %v873 = vsel %vm872, %v869, %v871
        %v874 = vsel %vm872, %v867, %v869
        %v875 = vsel %vm872, %v865, %v867
        %v876 = vsel %vm872, %v863, %v865
        %v877 = vsel %vm872, %v861, %v863
        %v878 = vsel %vm872, %v859, %v861
        %v879 = vsel %vm872, %v857, %v859
        %v880 = vsel %vm872, %v871, %v857
        %v881 = vsel %vm798, 1, 0
        %v882 = vsel %vm799, 1, 0
        %v883 = vlaneseq
        %v884 = vshrl.u32 %v883, 7
        %v885 = vsub.s32 0, %v884
        %v886 = vrot.slane %v881, %v885
        %v887 = vlaneseq
        %v888 = vshrl.u32 %v887, 7
        %v889 = vsub.s32 0, %v888
        %v890 = vrot.slane %v882, %v889
        %vm891 = vcmp.eq.s32.totalorder %v886, 1
        %vm892 = vcmp.eq.s32.totalorder %v890, 1
        %v893 = vsel %vm891, %v879, 0.0
        %v894 = vsel %vm892, %v878, 0.0
        %v895 = vsel %vm891, %v877, 0.0
        %v896 = vsel %vm892, %v876, 0.0
        %v897 = vsel %vm891, %v875, 0.0
        %v898 = vsel %vm892, %v874, 0.0
        %v899 = vsel %vm891, %v873, 0.0
        %v900 = vsel %vm892, %v880, 0.0
        %901 = vst [vmem:[#allocation2 + $0x40] sm:$0xff] %v893
        %902 = vst [vmem:[#allocation2 + $0x48] sm:$0xff] %v894
        %903 = vst [vmem:[#allocation2 + $0x50] sm:$0xff] %v895
        %904 = vst [vmem:[#allocation2 + $0x58] sm:$0xff] %v896
        %905 = vst [vmem:[#allocation2 + $0x60] sm:$0xff] %v897
        %906 = vst [vmem:[#allocation2 + $0x68] sm:$0xff] %v898
        %907 = vst [vmem:[#allocation2 + $0x70] sm:$0xff] %v899
        %908 = vst [vmem:[#allocation2 + $0x78] sm:$0xff] %v900
        %909 = vrot.lane.b32.xlu0 %v832, 64
        %v910 = vpop.permute.xlu0 %909
        %911 = vrot.lane.b32.xlu0 %v833, 64
        %v912 = vpop.permute.xlu0 %911
        %913 = vrot.lane.b32.xlu0 %v834, 64
        %v914 = vpop.permute.xlu0 %913
        %915 = vrot.lane.b32.xlu0 %v835, 64
        %v916 = vpop.permute.xlu0 %915
        %917 = vrot.lane.b32.xlu0 %v836, 64
        %v918 = vpop.permute.xlu0 %917
        %919 = vrot.lane.b32.xlu0 %v837, 64
        %v920 = vpop.permute.xlu0 %919
        %921 = vrot.lane.b32.xlu0 %v838, 64
        %v922 = vpop.permute.xlu0 %921
        %923 = vrot.lane.b32.xlu0 %v839, 64
        %v924 = vpop.permute.xlu0 %923
        %vm925 = vcmp.lt.s32.totalorder %v296, 64
        %v926 = vsel %vm925, %v922, %v924
        %v927 = vsel %vm925, %v920, %v922
        %v928 = vsel %vm925, %v918, %v920
        %v929 = vsel %vm925, %v916, %v918
        %v930 = vsel %vm925, %v914, %v916
        %v931 = vsel %vm925, %v912, %v914
        %v932 = vsel %vm925, %v910, %v912
        %v933 = vsel %vm925, %v924, %v910
        %v934 = vsel %vm790, 1, 0
        %v935 = vsel %vm791, 1, 0
        %v936 = vsel %vm792, 1, 0
        %v937 = vsel %vm793, 1, 0
        %v938 = vsel %vm794, 1, 0
        %v939 = vsel %vm795, 1, 0
        %v940 = vsel %vm796, 1, 0
        %v941 = vsel %vm797, 1, 0
        %v942 = vlaneseq
        %v943 = vshrl.u32 %v942, 7
        %v944 = vsub.s32 0, %v943
        %v945 = vrot.slane %v934, %v944
        %v946 = vlaneseq
        %v947 = vshrl.u32 %v946, 7
        %v948 = vsub.s32 0, %v947
        %v949 = vrot.slane %v935, %v948
        %v950 = vlaneseq
        %v951 = vshrl.u32 %v950, 7
        %v952 = vsub.s32 0, %v951
        %v953 = vrot.slane %v936, %v952
        %v954 = vlaneseq
        %v955 = vshrl.u32 %v954, 7
        %v956 = vsub.s32 0, %v955
        %v957 = vrot.slane %v937, %v956
        %v958 = vlaneseq
        %v959 = vshrl.u32 %v958, 7
        %v960 = vsub.s32 0, %v959
        %v961 = vrot.slane %v938, %v960
        %v962 = vlaneseq
        %v963 = vshrl.u32 %v962, 7
        %v964 = vsub.s32 0, %v963
        %v965 = vrot.slane %v939, %v964
        %v966 = vlaneseq
        %v967 = vshrl.u32 %v966, 7
        %v968 = vsub.s32 0, %v967
        %v969 = vrot.slane %v940, %v968
        %v970 = vlaneseq
        %v971 = vshrl.u32 %v970, 7
        %v972 = vsub.s32 0, %v971
        %v973 = vrot.slane %v941, %v972
        %vm974 = vcmp.eq.s32.totalorder %v945, 1
        %vm975 = vcmp.eq.s32.totalorder %v949, 1
        %vm976 = vcmp.eq.s32.totalorder %v953, 1
        %vm977 = vcmp.eq.s32.totalorder %v957, 1
        %vm978 = vcmp.eq.s32.totalorder %v961, 1
        %vm979 = vcmp.eq.s32.totalorder %v965, 1
        %vm980 = vcmp.eq.s32.totalorder %v969, 1
        %vm981 = vcmp.eq.s32.totalorder %v973, 1
        %v982 = vsel %vm974, %v932, 0.0
        %v983 = vsel %vm975, %v931, 0.0
        %v984 = vsel %vm976, %v930, 0.0
        %v985 = vsel %vm977, %v929, 0.0
        %v986 = vsel %vm978, %v928, 0.0
        %v987 = vsel %vm979, %v927, 0.0
        %v988 = vsel %vm980, %v926, 0.0
        %v989 = vsel %vm981, %v933, 0.0
        %990 = vst [vmem:[#allocation2 + $0x80] sm:$0xff] %v982
        %991 = vst [vmem:[#allocation2 + $0x88] sm:$0xff] %v983
        %992 = vst [vmem:[#allocation2 + $0x90] sm:$0xff] %v984
        %993 = vst [vmem:[#allocation2 + $0x98] sm:$0xff] %v985
        %994 = vst [vmem:[#allocation2 + $0xa0] sm:$0xff] %v986
        %995 = vst [vmem:[#allocation2 + $0xa8] sm:$0xff] %v987
        %996 = vst [vmem:[#allocation2 + $0xb0] sm:$0xff] %v988
        %997 = vst [vmem:[#allocation2 + $0xb8] sm:$0xff] %v989
        %998 = vrot.lane.b32.xlu0 %v832, 62
        %v999 = vpop.permute.xlu0 %998
        %1000 = vrot.lane.b32.xlu0 %v833, 62
        %v1001 = vpop.permute.xlu0 %1000
        %1002 = vrot.lane.b32.xlu0 %v834, 62
        %v1003 = vpop.permute.xlu0 %1002
        %1004 = vrot.lane.b32.xlu0 %v835, 62
        %v1005 = vpop.permute.xlu0 %1004
        %1006 = vrot.lane.b32.xlu0 %v836, 62
        %v1007 = vpop.permute.xlu0 %1006
        %1008 = vrot.lane.b32.xlu0 %v837, 62
        %v1009 = vpop.permute.xlu0 %1008
        %1010 = vrot.lane.b32.xlu0 %v838, 62
        %v1011 = vpop.permute.xlu0 %1010
        %1012 = vrot.lane.b32.xlu0 %v839, 62
        %v1013 = vpop.permute.xlu0 %1012
        %vm1014 = vcmp.lt.s32.totalorder %v296, 62
        %v1015 = vsel %vm1014, %v1011, %v1013
        %v1016 = vsel %vm1014, %v1009, %v1011
        %v1017 = vsel %vm1014, %v1007, %v1009
        %v1018 = vsel %vm1014, %v1005, %v1007
        %v1019 = vsel %vm1014, %v1003, %v1005
        %v1020 = vsel %vm1014, %v1001, %v1003
        %v1021 = vsel %vm1014, %v999, %v1001
        %v1022 = vsel %vm1014, %v1013, %v999
        %v1023 = vsel %vm840, 1, 0
        %v1024 = vsel %vm841, 1, 0
        %v1025 = vsel %vm842, 1, 0
        %v1026 = vsel %vm843, 1, 0
        %v1027 = vsel %vm844, 1, 0
        %v1028 = vsel %vm845, 1, 0
        %v1029 = vsel %vm846, 1, 0
        %v1030 = vsel %vm847, 1, 0
        %v1031 = vlaneseq
        %v1032 = vshrl.u32 %v1031, 7
        %v1033 = vsub.s32 0, %v1032
        %v1034 = vrot.slane %v1023, %v1033
        %v1035 = vlaneseq
        %v1036 = vshrl.u32 %v1035, 7
        %v1037 = vsub.s32 0, %v1036
        %v1038 = vrot.slane %v1024, %v1037
        %v1039 = vlaneseq
        %v1040 = vshrl.u32 %v1039, 7
        %v1041 = vsub.s32 0, %v1040
        %v1042 = vrot.slane %v1025, %v1041
        %v1043 = vlaneseq
        %v1044 = vshrl.u32 %v1043, 7
        %v1045 = vsub.s32 0, %v1044
        %v1046 = vrot.slane %v1026, %v1045
        %v1047 = vlaneseq
        %v1048 = vshrl.u32 %v1047, 7
        %v1049 = vsub.s32 0, %v1048
        %v1050 = vrot.slane %v1027, %v1049
        %v1051 = vlaneseq
        %v1052 = vshrl.u32 %v1051, 7
        %v1053 = vsub.s32 0, %v1052
        %v1054 = vrot.slane %v1028, %v1053
        %v1055 = vlaneseq
        %v1056 = vshrl.u32 %v1055, 7
        %v1057 = vsub.s32 0, %v1056
        %v1058 = vrot.slane %v1029, %v1057
        %v1059 = vlaneseq
        %v1060 = vshrl.u32 %v1059, 7
        %v1061 = vsub.s32 0, %v1060
        %v1062 = vrot.slane %v1030, %v1061
        %vm1063 = vcmp.eq.s32.totalorder %v1034, 1
        %vm1064 = vcmp.eq.s32.totalorder %v1038, 1
        %vm1065 = vcmp.eq.s32.totalorder %v1042, 1
        %vm1066 = vcmp.eq.s32.totalorder %v1046, 1
        %vm1067 = vcmp.eq.s32.totalorder %v1050, 1
        %vm1068 = vcmp.eq.s32.totalorder %v1054, 1
        %vm1069 = vcmp.eq.s32.totalorder %v1058, 1
        %vm1070 = vcmp.eq.s32.totalorder %v1062, 1
        %v1071 = vsel %vm1063, %v1021, 0.0
        %v1072 = vsel %vm1064, %v1020, 0.0
        %v1073 = vsel %vm1065, %v1019, 0.0
        %v1074 = vsel %vm1066, %v1018, 0.0
        %v1075 = vsel %vm1067, %v1017, 0.0
        %v1076 = vsel %vm1068, %v1016, 0.0
        %v1077 = vsel %vm1069, %v1015, 0.0
        %v1078 = vsel %vm1070, %v1022, 0.0
        %1079 = vst [vmem:[#allocation2 + $0xc0] sm:$0xff] %v1071
        %1080 = vst [vmem:[#allocation2 + $0xc8] sm:$0xff] %v1072
        %1081 = vst [vmem:[#allocation2 + $0xd0] sm:$0xff] %v1073
        %1082 = vst [vmem:[#allocation2 + $0xd8] sm:$0xff] %v1074
        %1083 = vst [vmem:[#allocation2 + $0xe0] sm:$0xff] %v1075
        %1084 = vst [vmem:[#allocation2 + $0xe8] sm:$0xff] %v1076
        %1085 = vst [vmem:[#allocation2 + $0xf0] sm:$0xff] %v1077
        %1086 = vst [vmem:[#allocation2 + $0xf8] sm:$0xff] %v1078
        %v1087 = vld [vmem:[%s1] sm:$0xff]
        %v1088 = vld [vmem:[%s1 + $0x8] sm:$0xff]
        %v1089 = vld [vmem:[%s1 + $0x10] sm:$0xff]
        %v1090 = vld [vmem:[%s1 + $0x18] sm:$0xff]
        %v1091 = vld [vmem:[#allocation2] sm:$0xff]
        %v1092 = vld [vmem:[#allocation2 + $0x8] sm:$0xff]
        %v1093 = vld [vmem:[#allocation2 + $0x10] sm:$0xff]
        %v1094 = vld [vmem:[#allocation2 + $0x18] sm:$0xff]
        %v1095 = vld [vmem:[#allocation2 + $0x20] sm:$0xff]
        %v1096 = vld [vmem:[#allocation2 + $0x28] sm:$0xff]
        %v1097 = vld [vmem:[#allocation2 + $0x30] sm:$0xff]
        %v1098 = vld [vmem:[#allocation2 + $0x38] sm:$0xff]
        %v1099 = vld [vmem:[#allocation2 + $0x40] sm:$0xff]
        %v1100 = vld [vmem:[#allocation2 + $0x48] sm:$0xff]
        %v1101 = vld [vmem:[#allocation2 + $0x50] sm:$0xff]
        %v1102 = vld [vmem:[#allocation2 + $0x58] sm:$0xff]
        %v1103 = vld [vmem:[#allocation2 + $0x60] sm:$0xff]
        %v1104 = vld [vmem:[#allocation2 + $0x68] sm:$0xff]
        %v1105 = vld [vmem:[#allocation2 + $0x70] sm:$0xff]
        %v1106 = vld [vmem:[#allocation2 + $0x78] sm:$0xff]
        %v1107 = vld [vmem:[#allocation2 + $0x80] sm:$0xff]
        %v1108 = vld [vmem:[#allocation2 + $0x88] sm:$0xff]
        %v1109 = vld [vmem:[#allocation2 + $0x90] sm:$0xff]
        %v1110 = vld [vmem:[#allocation2 + $0x98] sm:$0xff]
        %v1111 = vld [vmem:[#allocation2 + $0xa0] sm:$0xff]
        %v1112 = vld [vmem:[#allocation2 + $0xa8] sm:$0xff]
        %v1113 = vld [vmem:[#allocation2 + $0xb0] sm:$0xff]
        %v1114 = vld [vmem:[#allocation2 + $0xb8] sm:$0xff]
        %v1115 = vld [vmem:[#allocation2 + $0xc0] sm:$0xff]
        %v1116 = vld [vmem:[#allocation2 + $0xc8] sm:$0xff]
        %v1117 = vld [vmem:[#allocation2 + $0xd0] sm:$0xff]
        %v1118 = vld [vmem:[#allocation2 + $0xd8] sm:$0xff]
        %v1119 = vld [vmem:[#allocation2 + $0xe0] sm:$0xff]
        %v1120 = vld [vmem:[#allocation2 + $0xe8] sm:$0xff]
        %v1121 = vld [vmem:[#allocation2 + $0xf0] sm:$0xff]
        %v1122 = vld [vmem:[#allocation2 + $0xf8] sm:$0xff]
        %v1123 = vld [vmem:[%s2] sm:$0xff]
        %v1124 = vld [vmem:[%s2 + $0x8] sm:$0xff]
        %v1125 = vld [vmem:[%s2 + $0x10] sm:$0xff]
        %v1126 = vld [vmem:[%s2 + $0x18] sm:$0xff]
        %1128 = vset.pattern.permute.xlu0 0
        %1129 = vperm.xlu0 %1128, %v1123
        %v1130 = vpop.permute.xlu0 %1129
        %1133 = vset.pattern.permute.xlu0 0
        %1134 = vperm.xlu0 %1133, %v1124
        %v1135 = vpop.permute.xlu0 %1134
        %1138 = vset.pattern.permute.xlu0 0
        %1139 = vperm.xlu0 %1138, %v1125
        %v1140 = vpop.permute.xlu0 %1139
        %1143 = vset.pattern.permute.xlu0 0
        %1144 = vperm.xlu0 %1143, %v1126
        %v1145 = vpop.permute.xlu0 %1144
        %v1148 = vsel %vm358, %v1087, 0
        %v1151 = vsel %vm358, %v1088, 0
        %v1154 = vsel %vm358, %v1089, 0
        %v1157 = vsel %vm358, %v1090, 0
        %1159 = vmatprep.subr.mxu0 %v1092
        %1160 = vmatpush1.msra.mxu0 %v1091
        %1161 = vmatprep.subr.mxu0 %v1100
        %1162 = vmatpush1.msra.mxu0 %v1099
        %1163 = vmatprep.subr.mxu0 %v1108
        %1164 = vmatpush1.msra.mxu0 %v1107
        %1165 = vmatprep.subr.mxu0 %v1116
        %1166 = vmatpush1.msra.mxu0 %v1115
        %1167 = vmatprep.subr.mxu0 0.0
        %1168 = vmatpush1.msra.mxu0 0.0
        %1169 = vmatprep.subr.mxu0 0.0
        %1170 = vmatpush1.msra.mxu0 0.0
        %1171 = vmatprep.subr.mxu0 0.0
        %1172 = vmatpush1.msra.mxu0 0.0
        %1173 = vmatprep.subr.mxu0 0.0
        %1174 = vmatpush1.msra.mxu0 0.0
        %1175 = vmatprep.subr.mxu0 0.0
        %1176 = vmatpush1.msra.mxu0 0.0
        %1177 = vmatprep.subr.mxu0 0.0
        %1178 = vmatpush1.msra.mxu0 0.0
        %1179 = vmatprep.subr.mxu0 0.0
        %1180 = vmatpush1.msra.mxu0 0.0
        %1181 = vmatprep.subr.mxu0 0.0
        %1182 = vmatpush1.msra.mxu0 0.0
        %1183 = vmatprep.subr.mxu0 0.0
        %1184 = vmatpush1.msra.mxu0 0.0
        %1185 = vmatprep.subr.mxu0 0.0
        %1186 = vmatpush1.msra.mxu0 0.0
        %1187 = vmatprep.subr.mxu0 0.0
        %1188 = vmatpush1.msra.mxu0 0.0
        %1189 = vmatprep.subr.mxu0 0.0
        %1190 = vmatpush1.msra.mxu0 0.0
        %1191 = vmatprep.subr.mxu0 0.0
        %1192 = vmatpush1.msra.mxu0 0.0
        %1193 = vmatprep.subr.mxu0 0.0
        %1194 = vmatpush1.msra.mxu0 0.0
        %1195 = vmatprep.subr.mxu0 0.0
        %1196 = vmatpush1.msra.mxu0 0.0
        %1197 = vmatprep.subr.mxu0 0.0
        %1198 = vmatpush1.msra.mxu0 0.0
        %1199 = vmatprep.subr.mxu0 0.0
        %1200 = vmatpush1.msra.mxu0 0.0
        %1201 = vmatprep.subr.mxu0 0.0
        %1202 = vmatpush1.msra.mxu0 0.0
        %1203 = vmatprep.subr.mxu0 0.0
        %1204 = vmatpush1.msra.mxu0 0.0
        %1205 = vmatprep.subr.mxu0 0.0
        %1206 = vmatpush1.msra.mxu0 0.0
        %1207 = vmatprep.subr.mxu0 0.0
        %1208 = vmatpush1.msra.mxu0 0.0
        %1209 = vmatprep.subr.mxu0 0.0
        %1210 = vmatpush1.msra.mxu0 0.0
        %1211 = vmatprep.subr.mxu0 0.0
        %1212 = vmatpush1.msra.mxu0 0.0
        %1213 = vmatprep.subr.mxu0 0.0
        %1214 = vmatpush1.msra.mxu0 0.0
        %1215 = vmatprep.subr.mxu0 0.0
        %1216 = vmatpush1.msra.mxu0 0.0
        %1217 = vmatprep.subr.mxu0 0.0
        %1218 = vmatpush1.msra.mxu0 0.0
        %1219 = vmatprep.subr.mxu0 0.0
        %1220 = vmatpush1.msra.mxu0 0.0
        %1221 = vmatprep.subr.mxu0 0.0
        %1222 = vmatpush1.msra.mxu0 0.0
        %1223 = vmatprep.mubr.f32.mxu0 0.0
        %1224 = vmatmul.mubr.f32.gmra.mrb[0].mxu0 %v1148
        %v1225 = vpop.f32.mrb[0].mxu0
        %v1226 = vadd.f32 %v1130, %v1225
        %v1227 = vpop.f32.mrb[0].mxu0
        %v1228 = vadd.f32 %v1130, %v1227
        %1229 = vmatprep.mubr.f32.mxu0 0.0
        %1230 = vmatmul.mubr.f32.gmra.mrb[0].mxu0 %v1151
        %v1231 = vpop.f32.mrb[0].mxu0
        %v1232 = vadd.f32 %v1135, %v1231
        %v1233 = vpop.f32.mrb[0].mxu0
        %v1234 = vadd.f32 %v1135, %v1233
        %1235 = vmatprep.mubr.f32.mxu0 0.0
        %1236 = vmatmul.mubr.f32.gmra.mrb[0].mxu0 %v1154
        %v1237 = vpop.f32.mrb[0].mxu0
        %v1238 = vadd.f32 %v1140, %v1237
        %v1239 = vpop.f32.mrb[0].mxu0
        %v1240 = vadd.f32 %v1140, %v1239
        %1241 = vmatprep.mubr.f32.mxu0 0.0
        %1242 = vmatmul.mubr.f32.gmra.mrb[0].mxu0 %v1157
        %v1243 = vpop.f32.mrb[0].mxu0
        %v1244 = vadd.f32 %v1145, %v1243
        %v1245 = vpop.f32.mrb[0].mxu0
        %v1246 = vadd.f32 %v1145, %v1245
        %1247 = vdwg.mxu0
        %1248 = vmatprep.subr.mxu0 %v1094
        %1249 = vmatpush1.msra.mxu0 %v1093
        %1250 = vmatprep.subr.mxu0 %v1102
        %1251 = vmatpush1.msra.mxu0 %v1101
        %1252 = vmatprep.subr.mxu0 %v1110
        %1253 = vmatpush1.msra.mxu0 %v1109
        %1254 = vmatprep.subr.mxu0 %v1118
        %1255 = vmatpush1.msra.mxu0 %v1117
        %1256 = vmatprep.subr.mxu0 0.0
        %1257 = vmatpush1.msra.mxu0 0.0
        %1258 = vmatprep.subr.mxu0 0.0
        %1259 = vmatpush1.msra.mxu0 0.0
        %1260 = vmatprep.subr.mxu0 0.0
        %1261 = vmatpush1.msra.mxu0 0.0
        %1262 = vmatprep.subr.mxu0 0.0
        %1263 = vmatpush1.msra.mxu0 0.0
        %1264 = vmatprep.subr.mxu0 0.0
        %1265 = vmatpush1.msra.mxu0 0.0
        %1266 = vmatprep.subr.mxu0 0.0
        %1267 = vmatpush1.msra.mxu0 0.0
        %1268 = vmatprep.subr.mxu0 0.0
        %1269 = vmatpush1.msra.mxu0 0.0
        %1270 = vmatprep.subr.mxu0 0.0
        %1271 = vmatpush1.msra.mxu0 0.0
        %1272 = vmatprep.subr.mxu0 0.0
        %1273 = vmatpush1.msra.mxu0 0.0
        %1274 = vmatprep.subr.mxu0 0.0
        %1275 = vmatpush1.msra.mxu0 0.0
        %1276 = vmatprep.subr.mxu0 0.0
        %1277 = vmatpush1.msra.mxu0 0.0
        %1278 = vmatprep.subr.mxu0 0.0
        %1279 = vmatpush1.msra.mxu0 0.0
        %1280 = vmatprep.subr.mxu0 0.0
        %1281 = vmatpush1.msra.mxu0 0.0
        %1282 = vmatprep.subr.mxu0 0.0
        %1283 = vmatpush1.msra.mxu0 0.0
        %1284 = vmatprep.subr.mxu0 0.0
        %1285 = vmatpush1.msra.mxu0 0.0
        %1286 = vmatprep.subr.mxu0 0.0
        %1287 = vmatpush1.msra.mxu0 0.0
        %1288 = vmatprep.subr.mxu0 0.0
        %1289 = vmatpush1.msra.mxu0 0.0
        %1290 = vmatprep.subr.mxu0 0.0
        %1291 = vmatpush1.msra.mxu0 0.0
        %1292 = vmatprep.subr.mxu0 0.0
        %1293 = vmatpush1.msra.mxu0 0.0
        %1294 = vmatprep.subr.mxu0 0.0
        %1295 = vmatpush1.msra.mxu0 0.0
        %1296 = vmatprep.subr.mxu0 0.0
        %1297 = vmatpush1.msra.mxu0 0.0
        %1298 = vmatprep.subr.mxu0 0.0
        %1299 = vmatpush1.msra.mxu0 0.0
        %1300 = vmatprep.subr.mxu0 0.0
        %1301 = vmatpush1.msra.mxu0 0.0
        %1302 = vmatprep.subr.mxu0 0.0
        %1303 = vmatpush1.msra.mxu0 0.0
        %1304 = vmatprep.subr.mxu0 0.0
        %1305 = vmatpush1.msra.mxu0 0.0
        %1306 = vmatprep.subr.mxu0 0.0
        %1307 = vmatpush1.msra.mxu0 0.0
        %1308 = vmatprep.subr.mxu0 0.0
        %1309 = vmatpush1.msra.mxu0 0.0
        %1310 = vmatprep.subr.mxu0 0.0
        %1311 = vmatpush1.msra.mxu0 0.0
        %1312 = vmatprep.mubr.f32.mxu0 0.0
        %1313 = vmatmul.mubr.f32.gmra.mrb[0].mxu0 %v1148
        %v1314 = vpop.f32.mrb[0].mxu0
        %v1315 = vadd.f32 %v1130, %v1314
        %v1316 = vpop.f32.mrb[0].mxu0
        %v1317 = vadd.f32 %v1130, %v1316
        %1318 = vmatprep.mubr.f32.mxu0 0.0
        %1319 = vmatmul.mubr.f32.gmra.mrb[0].mxu0 %v1151
        %v1320 = vpop.f32.mrb[0].mxu0
        %v1321 = vadd.f32 %v1135, %v1320
        %v1322 = vpop.f32.mrb[0].mxu0
        %v1323 = vadd.f32 %v1135, %v1322
        %1324 = vmatprep.mubr.f32.mxu0 0.0
        %1325 = vmatmul.mubr.f32.gmra.mrb[0].mxu0 %v1154
        %v1326 = vpop.f32.mrb[0].mxu0
        %v1327 = vadd.f32 %v1140, %v1326
        %v1328 = vpop.f32.mrb[0].mxu0
        %v1329 = vadd.f32 %v1140, %v1328
        %1330 = vmatprep.mubr.f32.mxu0 0.0
        %1331 = vmatmul.mubr.f32.gmra.mrb[0].mxu0 %v1157
        %v1332 = vpop.f32.mrb[0].mxu0
        %v1333 = vadd.f32 %v1145, %v1332
        %v1334 = vpop.f32.mrb[0].mxu0
        %v1335 = vadd.f32 %v1145, %v1334
        %1336 = vdwg.mxu0
        %1337 = vmatprep.subr.mxu0 %v1096
        %1338 = vmatpush1.msra.mxu0 %v1095
        %1339 = vmatprep.subr.mxu0 %v1104
        %1340 = vmatpush1.msra.mxu0 %v1103
        %1341 = vmatprep.subr.mxu0 %v1112
        %1342 = vmatpush1.msra.mxu0 %v1111
        %1343 = vmatprep.subr.mxu0 %v1120
        %1344 = vmatpush1.msra.mxu0 %v1119
        %1345 = vmatprep.subr.mxu0 0.0
        %1346 = vmatpush1.msra.mxu0 0.0
        %1347 = vmatprep.subr.mxu0 0.0
        %1348 = vmatpush1.msra.mxu0 0.0
        %1349 = vmatprep.subr.mxu0 0.0
        %1350 = vmatpush1.msra.mxu0 0.0
        %1351 = vmatprep.subr.mxu0 0.0
        %1352 = vmatpush1.msra.mxu0 0.0
        %1353 = vmatprep.subr.mxu0 0.0
        %1354 = vmatpush1.msra.mxu0 0.0
        %1355 = vmatprep.subr.mxu0 0.0
        %1356 = vmatpush1.msra.mxu0 0.0
        %1357 = vmatprep.subr.mxu0 0.0
        %1358 = vmatpush1.msra.mxu0 0.0
        %1359 = vmatprep.subr.mxu0 0.0
        %1360 = vmatpush1.msra.mxu0 0.0
        %1361 = vmatprep.subr.mxu0 0.0
        %1362 = vmatpush1.msra.mxu0 0.0
        %1363 = vmatprep.subr.mxu0 0.0
        %1364 = vmatpush1.msra.mxu0 0.0
        %1365 = vmatprep.subr.mxu0 0.0
        %1366 = vmatpush1.msra.mxu0 0.0
        %1367 = vmatprep.subr.mxu0 0.0
        %1368 = vmatpush1.msra.mxu0 0.0
        %1369 = vmatprep.subr.mxu0 0.0
        %1370 = vmatpush1.msra.mxu0 0.0
        %1371 = vmatprep.subr.mxu0 0.0
        %1372 = vmatpush1.msra.mxu0 0.0
        %1373 = vmatprep.subr.mxu0 0.0
        %1374 = vmatpush1.msra.mxu0 0.0
        %1375 = vmatprep.subr.mxu0 0.0
        %1376 = vmatpush1.msra.mxu0 0.0
        %1377 = vmatprep.subr.mxu0 0.0
        %1378 = vmatpush1.msra.mxu0 0.0
        %1379 = vmatprep.subr.mxu0 0.0
        %1380 = vmatpush1.msra.mxu0 0.0
        %1381 = vmatprep.subr.mxu0 0.0
        %1382 = vmatpush1.msra.mxu0 0.0
        %1383 = vmatprep.subr.mxu0 0.0
        %1384 = vmatpush1.msra.mxu0 0.0
        %1385 = vmatprep.subr.mxu0 0.0
        %1386 = vmatpush1.msra.mxu0 0.0
        %1387 = vmatprep.subr.mxu0 0.0
        %1388 = vmatpush1.msra.mxu0 0.0
        %1389 = vmatprep.subr.mxu0 0.0
        %1390 = vmatpush1.msra.mxu0 0.0
        %1391 = vmatprep.subr.mxu0 0.0
        %1392 = vmatpush1.msra.mxu0 0.0
        %1393 = vmatprep.subr.mxu0 0.0
        %1394 = vmatpush1.msra.mxu0 0.0
        %1395 = vmatprep.subr.mxu0 0.0
        %1396 = vmatpush1.msra.mxu0 0.0
        %1397 = vmatprep.subr.mxu0 0.0
        %1398 = vmatpush1.msra.mxu0 0.0
        %1399 = vmatprep.subr.mxu0 0.0
        %1400 = vmatpush1.msra.mxu0 0.0
        %1401 = vmatprep.mubr.f32.mxu0 0.0
        %1402 = vmatmul.mubr.f32.gmra.mrb[0].mxu0 %v1148
        %v1403 = vpop.f32.mrb[0].mxu0
        %v1404 = vadd.f32 %v1130, %v1403
        %v1405 = vpop.f32.mrb[0].mxu0
        %v1406 = vadd.f32 %v1130, %v1405
        %1407 = vmatprep.mubr.f32.mxu0 0.0
        %1408 = vmatmul.mubr.f32.gmra.mrb[0].mxu0 %v1151
        %v1409 = vpop.f32.mrb[0].mxu0
        %v1410 = vadd.f32 %v1135, %v1409
        %v1411 = vpop.f32.mrb[0].mxu0
        %v1412 = vadd.f32 %v1135, %v1411
        %1413 = vmatprep.mubr.f32.mxu0 0.0
        %1414 = vmatmul.mubr.f32.gmra.mrb[0].mxu0 %v1154
        %v1415 = vpop.f32.mrb[0].mxu0
        %v1416 = vadd.f32 %v1140, %v1415
        %v1417 = vpop.f32.mrb[0].mxu0
        %v1418 = vadd.f32 %v1140, %v1417
        %1419 = vmatprep.mubr.f32.mxu0 0.0
        %1420 = vmatmul.mubr.f32.gmra.mrb[0].mxu0 %v1157
        %v1421 = vpop.f32.mrb[0].mxu0
        %v1422 = vadd.f32 %v1145, %v1421
        %v1423 = vpop.f32.mrb[0].mxu0
        %v1424 = vadd.f32 %v1145, %v1423
        %1425 = vdwg.mxu0
        %1426 = vmatprep.subr.mxu0 %v1098
        %1427 = vmatpush1.msra.mxu0 %v1097
        %1428 = vmatprep.subr.mxu0 %v1106
        %1429 = vmatpush1.msra.mxu0 %v1105
        %1430 = vmatprep.subr.mxu0 %v1114
        %1431 = vmatpush1.msra.mxu0 %v1113
        %1432 = vmatprep.subr.mxu0 %v1122
        %1433 = vmatpush1.msra.mxu0 %v1121
        %1434 = vmatprep.subr.mxu0 0.0
        %1435 = vmatpush1.msra.mxu0 0.0
        %1436 = vmatprep.subr.mxu0 0.0
        %1437 = vmatpush1.msra.mxu0 0.0
        %1438 = vmatprep.subr.mxu0 0.0
        %1439 = vmatpush1.msra.mxu0 0.0
        %1440 = vmatprep.subr.mxu0 0.0
        %1441 = vmatpush1.msra.mxu0 0.0
        %1442 = vmatprep.subr.mxu0 0.0
        %1443 = vmatpush1.msra.mxu0 0.0
        %1444 = vmatprep.subr.mxu0 0.0
        %1445 = vmatpush1.msra.mxu0 0.0
        %1446 = vmatprep.subr.mxu0 0.0
        %1447 = vmatpush1.msra.mxu0 0.0
        %1448 = vmatprep.subr.mxu0 0.0
        %1449 = vmatpush1.msra.mxu0 0.0
        %1450 = vmatprep.subr.mxu0 0.0
        %1451 = vmatpush1.msra.mxu0 0.0
        %1452 = vmatprep.subr.mxu0 0.0
        %1453 = vmatpush1.msra.mxu0 0.0
        %1454 = vmatprep.subr.mxu0 0.0
        %1455 = vmatpush1.msra.mxu0 0.0
        %1456 = vmatprep.subr.mxu0 0.0
        %1457 = vmatpush1.msra.mxu0 0.0
        %1458 = vmatprep.subr.mxu0 0.0
        %1459 = vmatpush1.msra.mxu0 0.0
        %1460 = vmatprep.subr.mxu0 0.0
        %1461 = vmatpush1.msra.mxu0 0.0
        %1462 = vmatprep.subr.mxu0 0.0
        %1463 = vmatpush1.msra.mxu0 0.0
        %1464 = vmatprep.subr.mxu0 0.0
        %1465 = vmatpush1.msra.mxu0 0.0
        %1466 = vmatprep.subr.mxu0 0.0
        %1467 = vmatpush1.msra.mxu0 0.0
        %1468 = vmatprep.subr.mxu0 0.0
        %1469 = vmatpush1.msra.mxu0 0.0
        %1470 = vmatprep.subr.mxu0 0.0
        %1471 = vmatpush1.msra.mxu0 0.0
        %1472 = vmatprep.subr.mxu0 0.0
        %1473 = vmatpush1.msra.mxu0 0.0
        %1474 = vmatprep.subr.mxu0 0.0
        %1475 = vmatpush1.msra.mxu0 0.0
        %1476 = vmatprep.subr.mxu0 0.0
        %1477 = vmatpush1.msra.mxu0 0.0
        %1478 = vmatprep.subr.mxu0 0.0
        %1479 = vmatpush1.msra.mxu0 0.0
        %1480 = vmatprep.subr.mxu0 0.0
        %1481 = vmatpush1.msra.mxu0 0.0
        %1482 = vmatprep.subr.mxu0 0.0
        %1483 = vmatpush1.msra.mxu0 0.0
        %1484 = vmatprep.subr.mxu0 0.0
        %1485 = vmatpush1.msra.mxu0 0.0
        %1486 = vmatprep.subr.mxu0 0.0
        %1487 = vmatpush1.msra.mxu0 0.0
        %1488 = vmatprep.subr.mxu0 0.0
        %1489 = vmatpush1.msra.mxu0 0.0
        %1490 = vmatprep.mubr.f32.mxu0 0.0
        %1491 = vmatmul.mubr.f32.gmra.mrb[0].mxu0 %v1148
        %v1492 = vpop.f32.mrb[0].mxu0
        %v1493 = vadd.f32 %v1130, %v1492
        %v1494 = vpop.f32.mrb[0].mxu0
        %v1495 = vadd.f32 %v1130, %v1494
        %1496 = vmatprep.mubr.f32.mxu0 0.0
        %1497 = vmatmul.mubr.f32.gmra.mrb[0].mxu0 %v1151
        %v1498 = vpop.f32.mrb[0].mxu0
        %v1499 = vadd.f32 %v1135, %v1498
        %v1500 = vpop.f32.mrb[0].mxu0
        %v1501 = vadd.f32 %v1135, %v1500
        %1502 = vmatprep.mubr.f32.mxu0 0.0
        %1503 = vmatmul.mubr.f32.gmra.mrb[0].mxu0 %v1154
        %v1504 = vpop.f32.mrb[0].mxu0
        %v1505 = vadd.f32 %v1140, %v1504
        %v1506 = vpop.f32.mrb[0].mxu0
        %v1507 = vadd.f32 %v1140, %v1506
        %1508 = vmatprep.mubr.f32.mxu0 0.0
        %1509 = vmatmul.mubr.f32.gmra.mrb[0].mxu0 %v1157
        %v1510 = vpop.f32.mrb[0].mxu0
        %v1511 = vadd.f32 %v1145, %v1510
        %v1512 = vpop.f32.mrb[0].mxu0
        %v1513 = vadd.f32 %v1145, %v1512
        %1514 = vdwg.mxu0
        %v1515 = vsel %vm768, 1, 0
        %v1516 = vsel %vm769, 1, 0
        %v1517 = vlaneseq
        %v1518 = vshrl.u32 %v1517, 7
        %v1519 = vsub.s32 0, %v1518
        %v1520 = vrot.slane %v1515, %v1519
        %v1521 = vlaneseq
        %v1522 = vshrl.u32 %v1521, 7
        %v1523 = vsub.s32 0, %v1522
        %v1524 = vrot.slane %v1516, %v1523
        %vm1525 = vcmp.eq.s32.totalorder %v1520, 1
        %vm1526 = vcmp.eq.s32.totalorder %v1524, 1
        %v1527 = vsel %vm1525, %v1226, %v1232
        %v1528 = vsel %vm1526, %v1228, %v1234
        %v1529 = vsel %vm1525, %v1315, %v1321
        %v1530 = vsel %vm1526, %v1317, %v1323
        %v1531 = vsel %vm1525, %v1404, %v1410
        %v1532 = vsel %vm1526, %v1406, %v1412
        %v1533 = vsel %vm1525, %v1493, %v1499
        %v1534 = vsel %vm1526, %v1495, %v1501
        %v1535 = vsel %vm1525, %v1238, %v1244
        %v1536 = vsel %vm1526, %v1240, %v1246
        %v1537 = vsel %vm1525, %v1327, %v1333
        %v1538 = vsel %vm1526, %v1329, %v1335
        %v1539 = vsel %vm1525, %v1416, %v1422
        %v1540 = vsel %vm1526, %v1418, %v1424
        %v1541 = vsel %vm1525, %v1505, %v1511
        %v1542 = vsel %vm1526, %v1507, %v1513
        %v1543 = vsel %vm736, 1, 0
        %v1544 = vsel %vm737, 1, 0
        %v1545 = vsel %vm738, 1, 0
        %v1546 = vsel %vm739, 1, 0
        %v1547 = vsel %vm740, 1, 0
        %v1548 = vsel %vm741, 1, 0
        %v1549 = vsel %vm742, 1, 0
        %v1550 = vsel %vm743, 1, 0
        %v1551 = vlaneseq
        %v1552 = vshrl.u32 %v1551, 7
        %v1553 = vsub.s32 0, %v1552
        %v1554 = vrot.slane %v1543, %v1553
        %v1555 = vlaneseq
        %v1556 = vshrl.u32 %v1555, 7
        %v1557 = vsub.s32 0, %v1556
        %v1558 = vrot.slane %v1544, %v1557
        %v1559 = vlaneseq
        %v1560 = vshrl.u32 %v1559, 7
        %v1561 = vsub.s32 0, %v1560
        %v1562 = vrot.slane %v1545, %v1561
        %v1563 = vlaneseq
        %v1564 = vshrl.u32 %v1563, 7
        %v1565 = vsub.s32 0, %v1564
        %v1566 = vrot.slane %v1546, %v1565
        %v1567 = vlaneseq
        %v1568 = vshrl.u32 %v1567, 7
        %v1569 = vsub.s32 0, %v1568
        %v1570 = vrot.slane %v1547, %v1569
        %v1571 = vlaneseq
        %v1572 = vshrl.u32 %v1571, 7
        %v1573 = vsub.s32 0, %v1572
        %v1574 = vrot.slane %v1548, %v1573
        %v1575 = vlaneseq
        %v1576 = vshrl.u32 %v1575, 7
        %v1577 = vsub.s32 0, %v1576
        %v1578 = vrot.slane %v1549, %v1577
        %v1579 = vlaneseq
        %v1580 = vshrl.u32 %v1579, 7
        %v1581 = vsub.s32 0, %v1580
        %v1582 = vrot.slane %v1550, %v1581
        %vm1583 = vcmp.eq.s32.totalorder %v1554, 1
        %vm1584 = vcmp.eq.s32.totalorder %v1558, 1
        %vm1585 = vcmp.eq.s32.totalorder %v1562, 1
        %vm1586 = vcmp.eq.s32.totalorder %v1566, 1
        %vm1587 = vcmp.eq.s32.totalorder %v1570, 1
        %vm1588 = vcmp.eq.s32.totalorder %v1574, 1
        %vm1589 = vcmp.eq.s32.totalorder %v1578, 1
        %vm1590 = vcmp.eq.s32.totalorder %v1582, 1
        %v1591 = vsel %vm1583, %v1527, %v1535
        %v1592 = vsel %vm1584, %v1528, %v1536
        %v1593 = vsel %vm1585, %v1529, %v1537
        %v1594 = vsel %vm1586, %v1530, %v1538
        %v1595 = vsel %vm1587, %v1531, %v1539
        %v1596 = vsel %vm1588, %v1532, %v1540
        %v1597 = vsel %vm1589, %v1533, %v1541
        %v1598 = vsel %vm1590, %v1534, %v1542
        %1599 = vrot.lane.b32.xlu0 %v1591, 33
        %v1600 = vpop.permute.xlu0 %1599
        %1601 = vrot.lane.b32.xlu0 %v1592, 33
        %v1602 = vpop.permute.xlu0 %1601
        %1603 = vrot.lane.b32.xlu0 %v1593, 33
        %v1604 = vpop.permute.xlu0 %1603
        %1605 = vrot.lane.b32.xlu0 %v1594, 33
        %v1606 = vpop.permute.xlu0 %1605
        %1607 = vrot.lane.b32.xlu0 %v1595, 33
        %v1608 = vpop.permute.xlu0 %1607
        %1609 = vrot.lane.b32.xlu0 %v1596, 33
        %v1610 = vpop.permute.xlu0 %1609
        %1611 = vrot.lane.b32.xlu0 %v1597, 33
        %v1612 = vpop.permute.xlu0 %1611
        %1613 = vrot.lane.b32.xlu0 %v1598, 33
        %v1614 = vpop.permute.xlu0 %1613
        %vm1615 = vcmp.lt.s32.totalorder %v296, 33
        %v1616 = vsel %vm1615, %v1612, %v1614
        %v1617 = vsel %vm1615, %v1610, %v1612
        %v1618 = vsel %vm1615, %v1608, %v1610
        %v1619 = vsel %vm1615, %v1606, %v1608
        %v1620 = vsel %vm1615, %v1604, %v1606
        %v1621 = vsel %vm1615, %v1602, %v1604
        %v1622 = vsel %vm1615, %v1600, %v1602
        %v1623 = vsel %vm1615, %v1614, %v1600
        %v1624 = vsel %vm800, 1, 0
        %v1625 = vsel %vm801, 1, 0
        %v1626 = vsel %vm802, 1, 0
        %v1627 = vsel %vm803, 1, 0
        %v1628 = vsel %vm804, 1, 0
        %v1629 = vsel %vm805, 1, 0
        %v1630 = vsel %vm806, 1, 0
        %v1631 = vsel %vm807, 1, 0
        %v1632 = vlaneseq
        %v1633 = vshrl.u32 %v1632, 7
        %v1634 = vsub.s32 0, %v1633
        %v1635 = vrot.slane %v1624, %v1634
        %v1636 = vlaneseq
        %v1637 = vshrl.u32 %v1636, 7
        %v1638 = vsub.s32 0, %v1637
        %v1639 = vrot.slane %v1625, %v1638
        %v1640 = vlaneseq
        %v1641 = vshrl.u32 %v1640, 7
        %v1642 = vsub.s32 0, %v1641
        %v1643 = vrot.slane %v1626, %v1642
        %v1644 = vlaneseq
        %v1645 = vshrl.u32 %v1644, 7
        %v1646 = vsub.s32 0, %v1645
        %v1647 = vrot.slane %v1627, %v1646
        %v1648 = vlaneseq
        %v1649 = vshrl.u32 %v1648, 7
        %v1650 = vsub.s32 0, %v1649
        %v1651 = vrot.slane %v1628, %v1650
        %v1652 = vlaneseq
        %v1653 = vshrl.u32 %v1652, 7
        %v1654 = vsub.s32 0, %v1653
        %v1655 = vrot.slane %v1629, %v1654
        %v1656 = vlaneseq
        %v1657 = vshrl.u32 %v1656, 7
        %v1658 = vsub.s32 0, %v1657
        %v1659 = vrot.slane %v1630, %v1658
        %v1660 = vlaneseq
        %v1661 = vshrl.u32 %v1660, 7
        %v1662 = vsub.s32 0, %v1661
        %v1663 = vrot.slane %v1631, %v1662
        %vm1664 = vcmp.eq.s32.totalorder %v1635, 1
        %vm1665 = vcmp.eq.s32.totalorder %v1639, 1
        %vm1666 = vcmp.eq.s32.totalorder %v1643, 1
        %vm1667 = vcmp.eq.s32.totalorder %v1647, 1
        %vm1668 = vcmp.eq.s32.totalorder %v1651, 1
        %vm1669 = vcmp.eq.s32.totalorder %v1655, 1
        %vm1670 = vcmp.eq.s32.totalorder %v1659, 1
        %vm1671 = vcmp.eq.s32.totalorder %v1663, 1
        %v1672 = vsel %vm1664, %v1623, 0.0
        %v1673 = vsel %vm1665, %v1622, 0.0
        %v1674 = vsel %vm1666, %v1621, 0.0
        %v1675 = vsel %vm1667, %v1620, 0.0
        %v1676 = vsel %vm1668, %v1619, 0.0
        %v1677 = vsel %vm1669, %v1618, 0.0
        %v1678 = vsel %vm1670, %v1617, 0.0
        %v1679 = vsel %vm1671, %v1616, 0.0
        %1680 = vst [vmem:[#allocation2] sm:$0xff] %v1672
        %1681 = vst [vmem:[#allocation2 + $0x8] sm:$0xff] %v1673
        %1682 = vst [vmem:[#allocation2 + $0x10] sm:$0xff] %v1674
        %1683 = vst [vmem:[#allocation2 + $0x18] sm:$0xff] %v1675
        %1684 = vst [vmem:[#allocation2 + $0x20] sm:$0xff] %v1676
        %1685 = vst [vmem:[#allocation2 + $0x28] sm:$0xff] %v1677
        %1686 = vst [vmem:[#allocation2 + $0x30] sm:$0xff] %v1678
        %1687 = vst [vmem:[#allocation2 + $0x38] sm:$0xff] %v1679
        %1688 = vrot.lane.b32.xlu0 %v1591, 32
        %v1689 = vpop.permute.xlu0 %1688
        %1690 = vrot.lane.b32.xlu0 %v1592, 32
        %v1691 = vpop.permute.xlu0 %1690
        %1692 = vrot.lane.b32.xlu0 %v1593, 32
        %v1693 = vpop.permute.xlu0 %1692
        %1694 = vrot.lane.b32.xlu0 %v1594, 32
        %v1695 = vpop.permute.xlu0 %1694
        %1696 = vrot.lane.b32.xlu0 %v1595, 32
        %v1697 = vpop.permute.xlu0 %1696
        %1698 = vrot.lane.b32.xlu0 %v1596, 32
        %v1699 = vpop.permute.xlu0 %1698
        %1700 = vrot.lane.b32.xlu0 %v1597, 32
        %v1701 = vpop.permute.xlu0 %1700
        %1702 = vrot.lane.b32.xlu0 %v1598, 32
        %v1703 = vpop.permute.xlu0 %1702
        %vm1704 = vcmp.lt.s32.totalorder %v296, 32
        %v1705 = vsel %vm1704, %v1701, %v1703
        %v1706 = vsel %vm1704, %v1699, %v1701
        %v1707 = vsel %vm1704, %v1697, %v1699
        %v1708 = vsel %vm1704, %v1695, %v1697
        %v1709 = vsel %vm1704, %v1693, %v1695
        %v1710 = vsel %vm1704, %v1691, %v1693
        %v1711 = vsel %vm1704, %v1689, %v1691
        %v1712 = vsel %vm1704, %v1703, %v1689
        %v1713 = vsel %vm770, 1, 0
        %v1714 = vsel %vm771, 1, 0
        %v1715 = vsel %vm772, 1, 0
        %v1716 = vsel %vm773, 1, 0
        %v1717 = vsel %vm774, 1, 0
        %v1718 = vsel %vm775, 1, 0
        %v1719 = vsel %vm776, 1, 0
        %v1720 = vsel %vm777, 1, 0
        %v1721 = vlaneseq
        %v1722 = vshrl.u32 %v1721, 7
        %v1723 = vsub.s32 0, %v1722
        %v1724 = vrot.slane %v1713, %v1723
        %v1725 = vlaneseq
        %v1726 = vshrl.u32 %v1725, 7
        %v1727 = vsub.s32 0, %v1726
        %v1728 = vrot.slane %v1714, %v1727
        %v1729 = vlaneseq
        %v1730 = vshrl.u32 %v1729, 7
        %v1731 = vsub.s32 0, %v1730
        %v1732 = vrot.slane %v1715, %v1731
        %v1733 = vlaneseq
        %v1734 = vshrl.u32 %v1733, 7
        %v1735 = vsub.s32 0, %v1734
        %v1736 = vrot.slane %v1716, %v1735
        %v1737 = vlaneseq
        %v1738 = vshrl.u32 %v1737, 7
        %v1739 = vsub.s32 0, %v1738
        %v1740 = vrot.slane %v1717, %v1739
        %v1741 = vlaneseq
        %v1742 = vshrl.u32 %v1741, 7
        %v1743 = vsub.s32 0, %v1742
        %v1744 = vrot.slane %v1718, %v1743
        %v1745 = vlaneseq
        %v1746 = vshrl.u32 %v1745, 7
        %v1747 = vsub.s32 0, %v1746
        %v1748 = vrot.slane %v1719, %v1747
        %v1749 = vlaneseq
        %v1750 = vshrl.u32 %v1749, 7
        %v1751 = vsub.s32 0, %v1750
        %v1752 = vrot.slane %v1720, %v1751
        %vm1753 = vcmp.eq.s32.totalorder %v1724, 1
        %vm1754 = vcmp.eq.s32.totalorder %v1728, 1
        %vm1755 = vcmp.eq.s32.totalorder %v1732, 1
        %vm1756 = vcmp.eq.s32.totalorder %v1736, 1
        %vm1757 = vcmp.eq.s32.totalorder %v1740, 1
        %vm1758 = vcmp.eq.s32.totalorder %v1744, 1
        %vm1759 = vcmp.eq.s32.totalorder %v1748, 1
        %vm1760 = vcmp.eq.s32.totalorder %v1752, 1
        %v1761 = vsel %vm1753, %v1712, 0.0
        %v1762 = vsel %vm1754, %v1711, 0.0
        %v1763 = vsel %vm1755, %v1710, 0.0
        %v1764 = vsel %vm1756, %v1709, 0.0
        %v1765 = vsel %vm1757, %v1708, 0.0
        %v1766 = vsel %vm1758, %v1707, 0.0
        %v1767 = vsel %vm1759, %v1706, 0.0
        %v1768 = vsel %vm1760, %v1705, 0.0
        %1769 = vst [vmem:[#allocation2 + $0x40] sm:$0xff] %v1761
        %1770 = vst [vmem:[#allocation2 + $0x48] sm:$0xff] %v1762
        %1771 = vst [vmem:[#allocation2 + $0x50] sm:$0xff] %v1763
        %1772 = vst [vmem:[#allocation2 + $0x58] sm:$0xff] %v1764
        %1773 = vst [vmem:[#allocation2 + $0x60] sm:$0xff] %v1765
        %1774 = vst [vmem:[#allocation2 + $0x68] sm:$0xff] %v1766
        %1775 = vst [vmem:[#allocation2 + $0x70] sm:$0xff] %v1767
        %1776 = vst [vmem:[#allocation2 + $0x78] sm:$0xff] %v1768
        %1777 = vrot.lane.b32.xlu0 %v1591, 31
        %v1778 = vpop.permute.xlu0 %1777
        %1779 = vrot.lane.b32.xlu0 %v1592, 31
        %v1780 = vpop.permute.xlu0 %1779
        %1781 = vrot.lane.b32.xlu0 %v1593, 31
        %v1782 = vpop.permute.xlu0 %1781
        %1783 = vrot.lane.b32.xlu0 %v1594, 31
        %v1784 = vpop.permute.xlu0 %1783
        %1785 = vrot.lane.b32.xlu0 %v1595, 31
        %v1786 = vpop.permute.xlu0 %1785
        %1787 = vrot.lane.b32.xlu0 %v1596, 31
        %v1788 = vpop.permute.xlu0 %1787
        %1789 = vrot.lane.b32.xlu0 %v1597, 31
        %v1790 = vpop.permute.xlu0 %1789
        %1791 = vrot.lane.b32.xlu0 %v1598, 31
        %v1792 = vpop.permute.xlu0 %1791
        %vm1793 = vcmp.lt.s32.totalorder %v296, 31
        %v1794 = vsel %vm1793, %v1790, %v1792
        %v1795 = vsel %vm1793, %v1788, %v1790
        %v1796 = vsel %vm1793, %v1786, %v1788
        %v1797 = vsel %vm1793, %v1784, %v1786
        %v1798 = vsel %vm1793, %v1782, %v1784
        %v1799 = vsel %vm1793, %v1780, %v1782
        %v1800 = vsel %vm1793, %v1778, %v1780
        %v1801 = vsel %vm1793, %v1792, %v1778
        %v1802 = vsel %vm808, 1, 0
        %v1803 = vsel %vm809, 1, 0
        %v1804 = vsel %vm810, 1, 0
        %v1805 = vsel %vm811, 1, 0
        %v1806 = vsel %vm812, 1, 0
        %v1807 = vsel %vm813, 1, 0
        %v1808 = vsel %vm814, 1, 0
        %v1809 = vsel %vm815, 1, 0
        %v1810 = vlaneseq
        %v1811 = vshrl.u32 %v1810, 7
        %v1812 = vsub.s32 0, %v1811
        %v1813 = vrot.slane %v1802, %v1812
        %v1814 = vlaneseq
        %v1815 = vshrl.u32 %v1814, 7
        %v1816 = vsub.s32 0, %v1815
        %v1817 = vrot.slane %v1803, %v1816
        %v1818 = vlaneseq
        %v1819 = vshrl.u32 %v1818, 7
        %v1820 = vsub.s32 0, %v1819
        %v1821 = vrot.slane %v1804, %v1820
        %v1822 = vlaneseq
        %v1823 = vshrl.u32 %v1822, 7
        %v1824 = vsub.s32 0, %v1823
        %v1825 = vrot.slane %v1805, %v1824
        %v1826 = vlaneseq
        %v1827 = vshrl.u32 %v1826, 7
        %v1828 = vsub.s32 0, %v1827
        %v1829 = vrot.slane %v1806, %v1828
        %v1830 = vlaneseq
        %v1831 = vshrl.u32 %v1830, 7
        %v1832 = vsub.s32 0, %v1831
        %v1833 = vrot.slane %v1807, %v1832
        %v1834 = vlaneseq
        %v1835 = vshrl.u32 %v1834, 7
        %v1836 = vsub.s32 0, %v1835
        %v1837 = vrot.slane %v1808, %v1836
        %v1838 = vlaneseq
        %v1839 = vshrl.u32 %v1838, 7
        %v1840 = vsub.s32 0, %v1839
        %v1841 = vrot.slane %v1809, %v1840
        %vm1842 = vcmp.eq.s32.totalorder %v1813, 1
        %vm1843 = vcmp.eq.s32.totalorder %v1817, 1
        %vm1844 = vcmp.eq.s32.totalorder %v1821, 1
        %vm1845 = vcmp.eq.s32.totalorder %v1825, 1
        %vm1846 = vcmp.eq.s32.totalorder %v1829, 1
        %vm1847 = vcmp.eq.s32.totalorder %v1833, 1
        %vm1848 = vcmp.eq.s32.totalorder %v1837, 1
        %vm1849 = vcmp.eq.s32.totalorder %v1841, 1
        %v1850 = vsel %vm1842, %v1801, 0.0
        %v1851 = vsel %vm1843, %v1800, 0.0
        %v1852 = vsel %vm1844, %v1799, 0.0
        %v1853 = vsel %vm1845, %v1798, 0.0
        %v1854 = vsel %vm1846, %v1797, 0.0
        %v1855 = vsel %vm1847, %v1796, 0.0
        %v1856 = vsel %vm1848, %v1795, 0.0
        %v1857 = vsel %vm1849, %v1794, 0.0
        %1858 = vst [vmem:[#allocation2 + $0x80] sm:$0xff] %v1850
        %1859 = vst [vmem:[#allocation2 + $0x88] sm:$0xff] %v1851
        %1860 = vst [vmem:[#allocation2 + $0x90] sm:$0xff] %v1852
        %1861 = vst [vmem:[#allocation2 + $0x98] sm:$0xff] %v1853
        %1862 = vst [vmem:[#allocation2 + $0xa0] sm:$0xff] %v1854
        %1863 = vst [vmem:[#allocation2 + $0xa8] sm:$0xff] %v1855
        %1864 = vst [vmem:[#allocation2 + $0xb0] sm:$0xff] %v1856
        %1865 = vst [vmem:[#allocation2 + $0xb8] sm:$0xff] %v1857
        %1866 = vrot.lane.b32.xlu0 %v1591, 1
        %v1867 = vpop.permute.xlu0 %1866
        %1868 = vrot.lane.b32.xlu0 %v1592, 1
        %v1869 = vpop.permute.xlu0 %1868
        %1870 = vrot.lane.b32.xlu0 %v1593, 1
        %v1871 = vpop.permute.xlu0 %1870
        %1872 = vrot.lane.b32.xlu0 %v1594, 1
        %v1873 = vpop.permute.xlu0 %1872
        %1874 = vrot.lane.b32.xlu0 %v1595, 1
        %v1875 = vpop.permute.xlu0 %1874
        %1876 = vrot.lane.b32.xlu0 %v1596, 1
        %v1877 = vpop.permute.xlu0 %1876
        %1878 = vrot.lane.b32.xlu0 %v1597, 1
        %v1879 = vpop.permute.xlu0 %1878
        %1880 = vrot.lane.b32.xlu0 %v1598, 1
        %v1881 = vpop.permute.xlu0 %1880
        %vm1882 = vcmp.lt.s32.totalorder %v296, 1
        %v1883 = vsel %vm1882, %v1879, %v1881
        %v1884 = vsel %vm1882, %v1877, %v1879
        %v1885 = vsel %vm1882, %v1875, %v1877
        %v1886 = vsel %vm1882, %v1873, %v1875
        %v1887 = vsel %vm1882, %v1871, %v1873
        %v1888 = vsel %vm1882, %v1869, %v1871
        %v1889 = vsel %vm1882, %v1867, %v1869
        %v1890 = vsel %vm1882, %v1881, %v1867
        %v1891 = vsel %vm786, 1, 0
        %v1892 = vsel %vm787, 1, 0
        %v1893 = vlaneseq
        %v1894 = vshrl.u32 %v1893, 7
        %v1895 = vsub.s32 0, %v1894
        %v1896 = vrot.slane %v1891, %v1895
        %v1897 = vlaneseq
        %v1898 = vshrl.u32 %v1897, 7
        %v1899 = vsub.s32 0, %v1898
        %v1900 = vrot.slane %v1892, %v1899
        %vm1901 = vcmp.eq.s32.totalorder %v1896, 1
        %vm1902 = vcmp.eq.s32.totalorder %v1900, 1
        %v1903 = vsel %vm1901, %v1890, 0.0
        %v1904 = vsel %vm1902, %v1889, 0.0
        %v1905 = vsel %vm1901, %v1888, 0.0
        %v1906 = vsel %vm1902, %v1887, 0.0
        %v1907 = vsel %vm1901, %v1886, 0.0
        %v1908 = vsel %vm1902, %v1885, 0.0
        %v1909 = vsel %vm1901, %v1884, 0.0
        %v1910 = vsel %vm1902, %v1883, 0.0
        %1911 = vst [vmem:[#allocation2 + $0xc0] sm:$0xff] %v1903
        %1912 = vst [vmem:[#allocation2 + $0xc8] sm:$0xff] %v1904
        %1913 = vst [vmem:[#allocation2 + $0xd0] sm:$0xff] %v1905
        %1914 = vst [vmem:[#allocation2 + $0xd8] sm:$0xff] %v1906
        %1915 = vst [vmem:[#allocation2 + $0xe0] sm:$0xff] %v1907
        %1916 = vst [vmem:[#allocation2 + $0xe8] sm:$0xff] %v1908
        %1917 = vst [vmem:[#allocation2 + $0xf0] sm:$0xff] %v1909
        %1918 = vst [vmem:[#allocation2 + $0xf8] sm:$0xff] %v1910
        %1919 = vst [vmem:[#allocation2 + $0x100] sm:$0xff] %v1591
        %1920 = vst [vmem:[#allocation2 + $0x108] sm:$0xff] %v1592
        %1921 = vst [vmem:[#allocation2 + $0x110] sm:$0xff] %v1593
        %1922 = vst [vmem:[#allocation2 + $0x118] sm:$0xff] %v1594
        %1923 = vst [vmem:[#allocation2 + $0x120] sm:$0xff] %v1595
        %1924 = vst [vmem:[#allocation2 + $0x128] sm:$0xff] %v1596
        %1925 = vst [vmem:[#allocation2 + $0x130] sm:$0xff] %v1597
        %1926 = vst [vmem:[#allocation2 + $0x138] sm:$0xff] %v1598
        %1927 = vrot.lane.b32.xlu0 %v1591, 127
        %v1928 = vpop.permute.xlu0 %1927
        %1929 = vrot.lane.b32.xlu0 %v1592, 127
        %v1930 = vpop.permute.xlu0 %1929
        %1931 = vrot.lane.b32.xlu0 %v1593, 127
        %v1932 = vpop.permute.xlu0 %1931
        %1933 = vrot.lane.b32.xlu0 %v1594, 127
        %v1934 = vpop.permute.xlu0 %1933
        %1935 = vrot.lane.b32.xlu0 %v1595, 127
        %v1936 = vpop.permute.xlu0 %1935
        %1937 = vrot.lane.b32.xlu0 %v1596, 127
        %v1938 = vpop.permute.xlu0 %1937
        %1939 = vrot.lane.b32.xlu0 %v1597, 127
        %v1940 = vpop.permute.xlu0 %1939
        %1941 = vrot.lane.b32.xlu0 %v1598, 127
        %v1942 = vpop.permute.xlu0 %1941
        %vm1943 = vcmp.lt.s32.totalorder %v296, 127
        %v1944 = vsel %vm1943, %v1940, %v1942
        %v1945 = vsel %vm1943, %v1938, %v1940
        %v1946 = vsel %vm1943, %v1936, %v1938
        %v1947 = vsel %vm1943, %v1934, %v1936
        %v1948 = vsel %vm1943, %v1932, %v1934
        %v1949 = vsel %vm1943, %v1930, %v1932
        %v1950 = vsel %vm1943, %v1928, %v1930
        %v1951 = vsel %vm1943, %v1942, %v1928
        %v1952 = vsel %vm788, 1, 0
        %v1953 = vsel %vm789, 1, 0
        %v1954 = vlaneseq
        %v1955 = vshrl.u32 %v1954, 7
        %v1956 = vsub.s32 0, %v1955
        %v1957 = vrot.slane %v1952, %v1956
        %v1958 = vlaneseq
        %v1959 = vshrl.u32 %v1958, 7
        %v1960 = vsub.s32 0, %v1959
        %v1961 = vrot.slane %v1953, %v1960
        %vm1962 = vcmp.eq.s32.totalorder %v1957, 1
        %vm1963 = vcmp.eq.s32.totalorder %v1961, 1
        %v1964 = vsel %vm1962, %v1950, 0.0
        %v1965 = vsel %vm1963, %v1949, 0.0
        %v1966 = vsel %vm1962, %v1948, 0.0
        %v1967 = vsel %vm1963, %v1947, 0.0
        %v1968 = vsel %vm1962, %v1946, 0.0
        %v1969 = vsel %vm1963, %v1945, 0.0
        %v1970 = vsel %vm1962, %v1944, 0.0
        %v1971 = vsel %vm1963, %v1951, 0.0
        %1972 = vst [vmem:[#allocation2 + $0x140] sm:$0xff] %v1964
        %1973 = vst [vmem:[#allocation2 + $0x148] sm:$0xff] %v1965
        %1974 = vst [vmem:[#allocation2 + $0x150] sm:$0xff] %v1966
        %1975 = vst [vmem:[#allocation2 + $0x158] sm:$0xff] %v1967
        %1976 = vst [vmem:[#allocation2 + $0x160] sm:$0xff] %v1968
        %1977 = vst [vmem:[#allocation2 + $0x168] sm:$0xff] %v1969
        %1978 = vst [vmem:[#allocation2 + $0x170] sm:$0xff] %v1970
        %1979 = vst [vmem:[#allocation2 + $0x178] sm:$0xff] %v1971
        %1980 = vrot.lane.b32.xlu0 %v1591, 97
        %v1981 = vpop.permute.xlu0 %1980
        %1982 = vrot.lane.b32.xlu0 %v1592, 97
        %v1983 = vpop.permute.xlu0 %1982
        %1984 = vrot.lane.b32.xlu0 %v1593, 97
        %v1985 = vpop.permute.xlu0 %1984
        %1986 = vrot.lane.b32.xlu0 %v1594, 97
        %v1987 = vpop.permute.xlu0 %1986
        %1988 = vrot.lane.b32.xlu0 %v1595, 97
        %v1989 = vpop.permute.xlu0 %1988
        %1990 = vrot.lane.b32.xlu0 %v1596, 97
        %v1991 = vpop.permute.xlu0 %1990
        %1992 = vrot.lane.b32.xlu0 %v1597, 97
        %v1993 = vpop.permute.xlu0 %1992
        %1994 = vrot.lane.b32.xlu0 %v1598, 97
        %v1995 = vpop.permute.xlu0 %1994
        %vm1996 = vcmp.lt.s32.totalorder %v296, 97
        %v1997 = vsel %vm1996, %v1993, %v1995
        %v1998 = vsel %vm1996, %v1991, %v1993
        %v1999 = vsel %vm1996, %v1989, %v1991
        %v2000 = vsel %vm1996, %v1987, %v1989
        %v2001 = vsel %vm1996, %v1985, %v1987
        %v2002 = vsel %vm1996, %v1983, %v1985
        %v2003 = vsel %vm1996, %v1981, %v1983
        %v2004 = vsel %vm1996, %v1995, %v1981
        %v2005 = vsel %vm816, 1, 0
        %v2006 = vsel %vm817, 1, 0
        %v2007 = vsel %vm818, 1, 0
        %v2008 = vsel %vm819, 1, 0
        %v2009 = vsel %vm820, 1, 0
        %v2010 = vsel %vm821, 1, 0
        %v2011 = vsel %vm822, 1, 0
        %v2012 = vsel %vm823, 1, 0
        %v2013 = vlaneseq
        %v2014 = vshrl.u32 %v2013, 7
        %v2015 = vsub.s32 0, %v2014
        %v2016 = vrot.slane %v2005, %v2015
        %v2017 = vlaneseq
        %v2018 = vshrl.u32 %v2017, 7
        %v2019 = vsub.s32 0, %v2018
        %v2020 = vrot.slane %v2006, %v2019
        %v2021 = vlaneseq
        %v2022 = vshrl.u32 %v2021, 7
        %v2023 = vsub.s32 0, %v2022
        %v2024 = vrot.slane %v2007, %v2023
        %v2025 = vlaneseq
        %v2026 = vshrl.u32 %v2025, 7
        %v2027 = vsub.s32 0, %v2026
        %v2028 = vrot.slane %v2008, %v2027
        %v2029 = vlaneseq
        %v2030 = vshrl.u32 %v2029, 7
        %v2031 = vsub.s32 0, %v2030
        %v2032 = vrot.slane %v2009, %v2031
        %v2033 = vlaneseq
        %v2034 = vshrl.u32 %v2033, 7
        %v2035 = vsub.s32 0, %v2034
        %v2036 = vrot.slane %v2010, %v2035
        %v2037 = vlaneseq
        %v2038 = vshrl.u32 %v2037, 7
        %v2039 = vsub.s32 0, %v2038
        %v2040 = vrot.slane %v2011, %v2039
        %v2041 = vlaneseq
        %v2042 = vshrl.u32 %v2041, 7
        %v2043 = vsub.s32 0, %v2042
        %v2044 = vrot.slane %v2012, %v2043
        %vm2045 = vcmp.eq.s32.totalorder %v2016, 1
        %vm2046 = vcmp.eq.s32.totalorder %v2020, 1
        %vm2047 = vcmp.eq.s32.totalorder %v2024, 1
        %vm2048 = vcmp.eq.s32.totalorder %v2028, 1
        %vm2049 = vcmp.eq.s32.totalorder %v2032, 1
        %vm2050 = vcmp.eq.s32.totalorder %v2036, 1
        %vm2051 = vcmp.eq.s32.totalorder %v2040, 1
        %vm2052 = vcmp.eq.s32.totalorder %v2044, 1
        %v2053 = vsel %vm2045, %v2003, 0.0
        %v2054 = vsel %vm2046, %v2002, 0.0
        %v2055 = vsel %vm2047, %v2001, 0.0
        %v2056 = vsel %vm2048, %v2000, 0.0
        %v2057 = vsel %vm2049, %v1999, 0.0
        %v2058 = vsel %vm2050, %v1998, 0.0
        %v2059 = vsel %vm2051, %v1997, 0.0
        %v2060 = vsel %vm2052, %v2004, 0.0
        %2061 = vst [vmem:[#allocation2 + $0x180] sm:$0xff] %v2053
        %2062 = vst [vmem:[#allocation2 + $0x188] sm:$0xff] %v2054
        %2063 = vst [vmem:[#allocation2 + $0x190] sm:$0xff] %v2055
        %2064 = vst [vmem:[#allocation2 + $0x198] sm:$0xff] %v2056
        %2065 = vst [vmem:[#allocation2 + $0x1a0] sm:$0xff] %v2057
        %2066 = vst [vmem:[#allocation2 + $0x1a8] sm:$0xff] %v2058
        %2067 = vst [vmem:[#allocation2 + $0x1b0] sm:$0xff] %v2059
        %2068 = vst [vmem:[#allocation2 + $0x1b8] sm:$0xff] %v2060
        %2069 = vrot.lane.b32.xlu0 %v1591, 96
        %v2070 = vpop.permute.xlu0 %2069
        %2071 = vrot.lane.b32.xlu0 %v1592, 96
        %v2072 = vpop.permute.xlu0 %2071
        %2073 = vrot.lane.b32.xlu0 %v1593, 96
        %v2074 = vpop.permute.xlu0 %2073
        %2075 = vrot.lane.b32.xlu0 %v1594, 96
        %v2076 = vpop.permute.xlu0 %2075
        %2077 = vrot.lane.b32.xlu0 %v1595, 96
        %v2078 = vpop.permute.xlu0 %2077
        %2079 = vrot.lane.b32.xlu0 %v1596, 96
        %v2080 = vpop.permute.xlu0 %2079
        %2081 = vrot.lane.b32.xlu0 %v1597, 96
        %v2082 = vpop.permute.xlu0 %2081
        %2083 = vrot.lane.b32.xlu0 %v1598, 96
        %v2084 = vpop.permute.xlu0 %2083
        %vm2085 = vcmp.lt.s32.totalorder %v296, 96
        %v2086 = vsel %vm2085, %v2082, %v2084
        %v2087 = vsel %vm2085, %v2080, %v2082
        %v2088 = vsel %vm2085, %v2078, %v2080
        %v2089 = vsel %vm2085, %v2076, %v2078
        %v2090 = vsel %vm2085, %v2074, %v2076
        %v2091 = vsel %vm2085, %v2072, %v2074
        %v2092 = vsel %vm2085, %v2070, %v2072
        %v2093 = vsel %vm2085, %v2084, %v2070
        %v2094 = vsel %vm778, 1, 0
        %v2095 = vsel %vm779, 1, 0
        %v2096 = vsel %vm780, 1, 0
        %v2097 = vsel %vm781, 1, 0
        %v2098 = vsel %vm782, 1, 0
        %v2099 = vsel %vm783, 1, 0
        %v2100 = vsel %vm784, 1, 0
        %v2101 = vsel %vm785, 1, 0
        %v2102 = vlaneseq
        %v2103 = vshrl.u32 %v2102, 7
        %v2104 = vsub.s32 0, %v2103
        %v2105 = vrot.slane %v2094, %v2104
        %v2106 = vlaneseq
        %v2107 = vshrl.u32 %v2106, 7
        %v2108 = vsub.s32 0, %v2107
        %v2109 = vrot.slane %v2095, %v2108
        %v2110 = vlaneseq
        %v2111 = vshrl.u32 %v2110, 7
        %v2112 = vsub.s32 0, %v2111
        %v2113 = vrot.slane %v2096, %v2112
        %v2114 = vlaneseq
        %v2115 = vshrl.u32 %v2114, 7
        %v2116 = vsub.s32 0, %v2115
        %v2117 = vrot.slane %v2097, %v2116
        %v2118 = vlaneseq
        %v2119 = vshrl.u32 %v2118, 7
        %v2120 = vsub.s32 0, %v2119
        %v2121 = vrot.slane %v2098, %v2120
        %v2122 = vlaneseq
        %v2123 = vshrl.u32 %v2122, 7
        %v2124 = vsub.s32 0, %v2123
        %v2125 = vrot.slane %v2099, %v2124
        %v2126 = vlaneseq
        %v2127 = vshrl.u32 %v2126, 7
        %v2128 = vsub.s32 0, %v2127
        %v2129 = vrot.slane %v2100, %v2128
        %v2130 = vlaneseq
        %v2131 = vshrl.u32 %v2130, 7
        %v2132 = vsub.s32 0, %v2131
        %v2133 = vrot.slane %v2101, %v2132
        %vm2134 = vcmp.eq.s32.totalorder %v2105, 1
        %vm2135 = vcmp.eq.s32.totalorder %v2109, 1
        %vm2136 = vcmp.eq.s32.totalorder %v2113, 1
        %vm2137 = vcmp.eq.s32.totalorder %v2117, 1
        %vm2138 = vcmp.eq.s32.totalorder %v2121, 1
        %vm2139 = vcmp.eq.s32.totalorder %v2125, 1
        %vm2140 = vcmp.eq.s32.totalorder %v2129, 1
        %vm2141 = vcmp.eq.s32.totalorder %v2133, 1
        %v2142 = vsel %vm2134, %v2092, 0.0
        %v2143 = vsel %vm2135, %v2091, 0.0
        %v2144 = vsel %vm2136, %v2090, 0.0
        %v2145 = vsel %vm2137, %v2089, 0.0
        %v2146 = vsel %vm2138, %v2088, 0.0
        %v2147 = vsel %vm2139, %v2087, 0.0
        %v2148 = vsel %vm2140, %v2086, 0.0
        %v2149 = vsel %vm2141, %v2093, 0.0
        %2150 = vst [vmem:[#allocation2 + $0x1c0] sm:$0xff] %v2142
        %2151 = vst [vmem:[#allocation2 + $0x1c8] sm:$0xff] %v2143
        %2152 = vst [vmem:[#allocation2 + $0x1d0] sm:$0xff] %v2144
        %2153 = vst [vmem:[#allocation2 + $0x1d8] sm:$0xff] %v2145
        %2154 = vst [vmem:[#allocation2 + $0x1e0] sm:$0xff] %v2146
        %2155 = vst [vmem:[#allocation2 + $0x1e8] sm:$0xff] %v2147
        %2156 = vst [vmem:[#allocation2 + $0x1f0] sm:$0xff] %v2148
        %2157 = vst [vmem:[#allocation2 + $0x1f8] sm:$0xff] %v2149
        %2158 = vrot.lane.b32.xlu0 %v1591, 95
        %v2159 = vpop.permute.xlu0 %2158
        %2160 = vrot.lane.b32.xlu0 %v1592, 95
        %v2161 = vpop.permute.xlu0 %2160
        %2162 = vrot.lane.b32.xlu0 %v1593, 95
        %v2163 = vpop.permute.xlu0 %2162
        %2164 = vrot.lane.b32.xlu0 %v1594, 95
        %v2165 = vpop.permute.xlu0 %2164
        %2166 = vrot.lane.b32.xlu0 %v1595, 95
        %v2167 = vpop.permute.xlu0 %2166
        %2168 = vrot.lane.b32.xlu0 %v1596, 95
        %v2169 = vpop.permute.xlu0 %2168
        %2170 = vrot.lane.b32.xlu0 %v1597, 95
        %v2171 = vpop.permute.xlu0 %2170
        %2172 = vrot.lane.b32.xlu0 %v1598, 95
        %v2173 = vpop.permute.xlu0 %2172
        %vm2174 = vcmp.lt.s32.totalorder %v296, 95
        %v2175 = vsel %vm2174, %v2171, %v2173
        %v2176 = vsel %vm2174, %v2169, %v2171
        %v2177 = vsel %vm2174, %v2167, %v2169
        %v2178 = vsel %vm2174, %v2165, %v2167
        %v2179 = vsel %vm2174, %v2163, %v2165
        %v2180 = vsel %vm2174, %v2161, %v2163
        %v2181 = vsel %vm2174, %v2159, %v2161
        %v2182 = vsel %vm2174, %v2173, %v2159
        %v2183 = vsel %vm824, 1, 0
        %v2184 = vsel %vm825, 1, 0
        %v2185 = vsel %vm826, 1, 0
        %v2186 = vsel %vm827, 1, 0
        %v2187 = vsel %vm828, 1, 0
        %v2188 = vsel %vm829, 1, 0
        %v2189 = vsel %vm830, 1, 0
        %v2190 = vsel %vm831, 1, 0
        %v2191 = vlaneseq
        %v2192 = vshrl.u32 %v2191, 7
        %v2193 = vsub.s32 0, %v2192
        %v2194 = vrot.slane %v2183, %v2193
        %v2195 = vlaneseq
        %v2196 = vshrl.u32 %v2195, 7
        %v2197 = vsub.s32 0, %v2196
        %v2198 = vrot.slane %v2184, %v2197
        %v2199 = vlaneseq
        %v2200 = vshrl.u32 %v2199, 7
        %v2201 = vsub.s32 0, %v2200
        %v2202 = vrot.slane %v2185, %v2201
        %v2203 = vlaneseq
        %v2204 = vshrl.u32 %v2203, 7
        %v2205 = vsub.s32 0, %v2204
        %v2206 = vrot.slane %v2186, %v2205
        %v2207 = vlaneseq
        %v2208 = vshrl.u32 %v2207, 7
        %v2209 = vsub.s32 0, %v2208
        %v2210 = vrot.slane %v2187, %v2209
        %v2211 = vlaneseq
        %v2212 = vshrl.u32 %v2211, 7
        %v2213 = vsub.s32 0, %v2212
        %v2214 = vrot.slane %v2188, %v2213
        %v2215 = vlaneseq
        %v2216 = vshrl.u32 %v2215, 7
        %v2217 = vsub.s32 0, %v2216
        %v2218 = vrot.slane %v2189, %v2217
        %v2219 = vlaneseq
        %v2220 = vshrl.u32 %v2219, 7
        %v2221 = vsub.s32 0, %v2220
        %v2222 = vrot.slane %v2190, %v2221
        %vm2223 = vcmp.eq.s32.totalorder %v2194, 1
        %vm2224 = vcmp.eq.s32.totalorder %v2198, 1
        %vm2225 = vcmp.eq.s32.totalorder %v2202, 1
        %vm2226 = vcmp.eq.s32.totalorder %v2206, 1
        %vm2227 = vcmp.eq.s32.totalorder %v2210, 1
        %vm2228 = vcmp.eq.s32.totalorder %v2214, 1
        %vm2229 = vcmp.eq.s32.totalorder %v2218, 1
        %vm2230 = vcmp.eq.s32.totalorder %v2222, 1
        %v2231 = vsel %vm2223, %v2181, 0.0
        %v2232 = vsel %vm2224, %v2180, 0.0
        %v2233 = vsel %vm2225, %v2179, 0.0
        %v2234 = vsel %vm2226, %v2178, 0.0
        %v2235 = vsel %vm2227, %v2177, 0.0
        %v2236 = vsel %vm2228, %v2176, 0.0
        %v2237 = vsel %vm2229, %v2175, 0.0
        %v2238 = vsel %vm2230, %v2182, 0.0
        %2239 = vst [vmem:[#allocation2 + $0x200] sm:$0xff] %v2231
        %2240 = vst [vmem:[#allocation2 + $0x208] sm:$0xff] %v2232
        %2241 = vst [vmem:[#allocation2 + $0x210] sm:$0xff] %v2233
        %2242 = vst [vmem:[#allocation2 + $0x218] sm:$0xff] %v2234
        %2243 = vst [vmem:[#allocation2 + $0x220] sm:$0xff] %v2235
        %2244 = vst [vmem:[#allocation2 + $0x228] sm:$0xff] %v2236
        %2245 = vst [vmem:[#allocation2 + $0x230] sm:$0xff] %v2237
        %2246 = vst [vmem:[#allocation2 + $0x238] sm:$0xff] %v2238
        %v2247 = vld [vmem:[%s3] sm:$0xff]
        %v2248 = vld [vmem:[#allocation2] sm:$0xff]
        %v2249 = vld [vmem:[#allocation2 + $0x8] sm:$0xff]
        %v2250 = vld [vmem:[#allocation2 + $0x10] sm:$0xff]
        %v2251 = vld [vmem:[#allocation2 + $0x18] sm:$0xff]
        %v2252 = vld [vmem:[#allocation2 + $0x20] sm:$0xff]
        %v2253 = vld [vmem:[#allocation2 + $0x28] sm:$0xff]
        %v2254 = vld [vmem:[#allocation2 + $0x30] sm:$0xff]
        %v2255 = vld [vmem:[#allocation2 + $0x38] sm:$0xff]
        %v2256 = vld [vmem:[#allocation2 + $0x40] sm:$0xff]
        %v2257 = vld [vmem:[#allocation2 + $0x48] sm:$0xff]
        %v2258 = vld [vmem:[#allocation2 + $0x50] sm:$0xff]
        %v2259 = vld [vmem:[#allocation2 + $0x58] sm:$0xff]
        %v2260 = vld [vmem:[#allocation2 + $0x60] sm:$0xff]
        %v2261 = vld [vmem:[#allocation2 + $0x68] sm:$0xff]
        %v2262 = vld [vmem:[#allocation2 + $0x70] sm:$0xff]
        %v2263 = vld [vmem:[#allocation2 + $0x78] sm:$0xff]
        %v2264 = vld [vmem:[#allocation2 + $0x80] sm:$0xff]
        %v2265 = vld [vmem:[#allocation2 + $0x88] sm:$0xff]
        %v2266 = vld [vmem:[#allocation2 + $0x90] sm:$0xff]
        %v2267 = vld [vmem:[#allocation2 + $0x98] sm:$0xff]
        %v2268 = vld [vmem:[#allocation2 + $0xa0] sm:$0xff]
        %v2269 = vld [vmem:[#allocation2 + $0xa8] sm:$0xff]
        %v2270 = vld [vmem:[#allocation2 + $0xb0] sm:$0xff]
        %v2271 = vld [vmem:[#allocation2 + $0xb8] sm:$0xff]
        %v2272 = vld [vmem:[#allocation2 + $0xc0] sm:$0xff]
        %v2273 = vld [vmem:[#allocation2 + $0xc8] sm:$0xff]
        %v2274 = vld [vmem:[#allocation2 + $0xd0] sm:$0xff]
        %v2275 = vld [vmem:[#allocation2 + $0xd8] sm:$0xff]
        %v2276 = vld [vmem:[#allocation2 + $0xe0] sm:$0xff]
        %v2277 = vld [vmem:[#allocation2 + $0xe8] sm:$0xff]
        %v2278 = vld [vmem:[#allocation2 + $0xf0] sm:$0xff]
        %v2279 = vld [vmem:[#allocation2 + $0xf8] sm:$0xff]
        %v2280 = vld [vmem:[#allocation2 + $0x100] sm:$0xff]
        %v2281 = vld [vmem:[#allocation2 + $0x108] sm:$0xff]
        %v2282 = vld [vmem:[#allocation2 + $0x110] sm:$0xff]
        %v2283 = vld [vmem:[#allocation2 + $0x118] sm:$0xff]
        %v2284 = vld [vmem:[#allocation2 + $0x120] sm:$0xff]
        %v2285 = vld [vmem:[#allocation2 + $0x128] sm:$0xff]
        %v2286 = vld [vmem:[#allocation2 + $0x130] sm:$0xff]
        %v2287 = vld [vmem:[#allocation2 + $0x138] sm:$0xff]
        %v2288 = vld [vmem:[#allocation2 + $0x140] sm:$0xff]
        %v2289 = vld [vmem:[#allocation2 + $0x148] sm:$0xff]
        %v2290 = vld [vmem:[#allocation2 + $0x150] sm:$0xff]
        %v2291 = vld [vmem:[#allocation2 + $0x158] sm:$0xff]
        %v2292 = vld [vmem:[#allocation2 + $0x160] sm:$0xff]
        %v2293 = vld [vmem:[#allocation2 + $0x168] sm:$0xff]
        %v2294 = vld [vmem:[#allocation2 + $0x170] sm:$0xff]
        %v2295 = vld [vmem:[#allocation2 + $0x178] sm:$0xff]
        %v2296 = vld [vmem:[#allocation2 + $0x180] sm:$0xff]
        %v2297 = vld [vmem:[#allocation2 + $0x188] sm:$0xff]
        %v2298 = vld [vmem:[#allocation2 + $0x190] sm:$0xff]
        %v2299 = vld [vmem:[#allocation2 + $0x198] sm:$0xff]
        %v2300 = vld [vmem:[#allocation2 + $0x1a0] sm:$0xff]
        %v2301 = vld [vmem:[#allocation2 + $0x1a8] sm:$0xff]
        %v2302 = vld [vmem:[#allocation2 + $0x1b0] sm:$0xff]
        %v2303 = vld [vmem:[#allocation2 + $0x1b8] sm:$0xff]
        %v2304 = vld [vmem:[#allocation2 + $0x1c0] sm:$0xff]
        %v2305 = vld [vmem:[#allocation2 + $0x1c8] sm:$0xff]
        %v2306 = vld [vmem:[#allocation2 + $0x1d0] sm:$0xff]
        %v2307 = vld [vmem:[#allocation2 + $0x1d8] sm:$0xff]
        %v2308 = vld [vmem:[#allocation2 + $0x1e0] sm:$0xff]
        %v2309 = vld [vmem:[#allocation2 + $0x1e8] sm:$0xff]
        %v2310 = vld [vmem:[#allocation2 + $0x1f0] sm:$0xff]
        %v2311 = vld [vmem:[#allocation2 + $0x1f8] sm:$0xff]
        %v2312 = vld [vmem:[#allocation2 + $0x200] sm:$0xff]
        %v2313 = vld [vmem:[#allocation2 + $0x208] sm:$0xff]
        %v2314 = vld [vmem:[#allocation2 + $0x210] sm:$0xff]
        %v2315 = vld [vmem:[#allocation2 + $0x218] sm:$0xff]
        %v2316 = vld [vmem:[#allocation2 + $0x220] sm:$0xff]
        %v2317 = vld [vmem:[#allocation2 + $0x228] sm:$0xff]
        %v2318 = vld [vmem:[#allocation2 + $0x230] sm:$0xff]
        %v2319 = vld [vmem:[#allocation2 + $0x238] sm:$0xff]
        %v2320 = vld [vmem:[%s4] sm:$0xff]
        %2322 = vset.pattern.permute.xlu0 0
        %2323 = vperm.xlu0 %2322, %v2320
        %v2324 = vpop.permute.xlu0 %2323
        %vm2326 = vcmask 588800
        %v2328 = vsel %vm2326, %v2247, 0
        %2330 = vmatprep.subr.mxu0 %v2249
        %2331 = vmatpush1.msra.mxu0 %v2248
        %2332 = vmatprep.subr.mxu0 %v2257
        %2333 = vmatpush1.msra.mxu0 %v2256
        %2334 = vmatprep.subr.mxu0 %v2265
        %2335 = vmatpush1.msra.mxu0 %v2264
        %2336 = vmatprep.subr.mxu0 %v2273
        %2337 = vmatpush1.msra.mxu0 %v2272
        %2338 = vmatprep.subr.mxu0 %v2281
        %2339 = vmatpush1.msra.mxu0 %v2280
        %2340 = vmatprep.subr.mxu0 %v2289
        %2341 = vmatpush1.msra.mxu0 %v2288
        %2342 = vmatprep.subr.mxu0 %v2297
        %2343 = vmatpush1.msra.mxu0 %v2296
        %2344 = vmatprep.subr.mxu0 %v2305
        %2345 = vmatpush1.msra.mxu0 %v2304
        %2346 = vmatprep.subr.mxu0 %v2313
        %2347 = vmatpush1.msra.mxu0 %v2312
        %2348 = vmatprep.subr.mxu0 0.0
        %2349 = vmatpush1.msra.mxu0 0.0
        %2350 = vmatprep.subr.mxu0 0.0
        %2351 = vmatpush1.msra.mxu0 0.0
        %2352 = vmatprep.subr.mxu0 0.0
        %2353 = vmatpush1.msra.mxu0 0.0
        %2354 = vmatprep.subr.mxu0 0.0
        %2355 = vmatpush1.msra.mxu0 0.0
        %2356 = vmatprep.subr.mxu0 0.0
        %2357 = vmatpush1.msra.mxu0 0.0
        %2358 = vmatprep.subr.mxu0 0.0
        %2359 = vmatpush1.msra.mxu0 0.0
        %2360 = vmatprep.subr.mxu0 0.0
        %2361 = vmatpush1.msra.mxu0 0.0
        %2362 = vmatprep.subr.mxu0 0.0
        %2363 = vmatpush1.msra.mxu0 0.0
        %2364 = vmatprep.subr.mxu0 0.0
        %2365 = vmatpush1.msra.mxu0 0.0
        %2366 = vmatprep.subr.mxu0 0.0
        %2367 = vmatpush1.msra.mxu0 0.0
        %2368 = vmatprep.subr.mxu0 0.0
        %2369 = vmatpush1.msra.mxu0 0.0
        %2370 = vmatprep.subr.mxu0 0.0
        %2371 = vmatpush1.msra.mxu0 0.0
        %2372 = vmatprep.subr.mxu0 0.0
        %2373 = vmatpush1.msra.mxu0 0.0
        %2374 = vmatprep.subr.mxu0 0.0
        %2375 = vmatpush1.msra.mxu0 0.0
        %2376 = vmatprep.subr.mxu0 0.0
        %2377 = vmatpush1.msra.mxu0 0.0
        %2378 = vmatprep.subr.mxu0 0.0
        %2379 = vmatpush1.msra.mxu0 0.0
        %2380 = vmatprep.subr.mxu0 0.0
        %2381 = vmatpush1.msra.mxu0 0.0
        %2382 = vmatprep.subr.mxu0 0.0
        %2383 = vmatpush1.msra.mxu0 0.0
        %2384 = vmatprep.subr.mxu0 0.0
        %2385 = vmatpush1.msra.mxu0 0.0
        %2386 = vmatprep.subr.mxu0 0.0
        %2387 = vmatpush1.msra.mxu0 0.0
        %2388 = vmatprep.subr.mxu0 0.0
        %2389 = vmatpush1.msra.mxu0 0.0
        %2390 = vmatprep.subr.mxu0 0.0
        %2391 = vmatpush1.msra.mxu0 0.0
        %2392 = vmatprep.subr.mxu0 0.0
        %2393 = vmatpush1.msra.mxu0 0.0
        %2394 = vmatprep.mubr.f32.mxu0 0.0
        %2395 = vmatmul.mubr.f32.gmra.mrb[0].mxu0 %v2328
        %v2396 = vpop.f32.mrb[0].mxu0
        %v2397 = vadd.f32 %v2324, %v2396
        %v2398 = vpop.f32.mrb[0].mxu0
        %v2399 = vadd.f32 %v2324, %v2398
        %2400 = vdwg.mxu0
        %2401 = vmatprep.subr.mxu0 %v2251
        %2402 = vmatpush1.msra.mxu0 %v2250
        %2403 = vmatprep.subr.mxu0 %v2259
        %2404 = vmatpush1.msra.mxu0 %v2258
        %2405 = vmatprep.subr.mxu0 %v2267
        %2406 = vmatpush1.msra.mxu0 %v2266
        %2407 = vmatprep.subr.mxu0 %v2275
        %2408 = vmatpush1.msra.mxu0 %v2274
        %2409 = vmatprep.subr.mxu0 %v2283
        %2410 = vmatpush1.msra.mxu0 %v2282
        %2411 = vmatprep.subr.mxu0 %v2291
        %2412 = vmatpush1.msra.mxu0 %v2290
        %2413 = vmatprep.subr.mxu0 %v2299
        %2414 = vmatpush1.msra.mxu0 %v2298
        %2415 = vmatprep.subr.mxu0 %v2307
        %2416 = vmatpush1.msra.mxu0 %v2306
        %2417 = vmatprep.subr.mxu0 %v2315
        %2418 = vmatpush1.msra.mxu0 %v2314
        %2419 = vmatprep.subr.mxu0 0.0
        %2420 = vmatpush1.msra.mxu0 0.0
        %2421 = vmatprep.subr.mxu0 0.0
        %2422 = vmatpush1.msra.mxu0 0.0
        %2423 = vmatprep.subr.mxu0 0.0
        %2424 = vmatpush1.msra.mxu0 0.0
        %2425 = vmatprep.subr.mxu0 0.0
        %2426 = vmatpush1.msra.mxu0 0.0
        %2427 = vmatprep.subr.mxu0 0.0
        %2428 = vmatpush1.msra.mxu0 0.0
        %2429 = vmatprep.subr.mxu0 0.0
        %2430 = vmatpush1.msra.mxu0 0.0
        %2431 = vmatprep.subr.mxu0 0.0
        %2432 = vmatpush1.msra.mxu0 0.0
        %2433 = vmatprep.subr.mxu0 0.0
        %2434 = vmatpush1.msra.mxu0 0.0
        %2435 = vmatprep.subr.mxu0 0.0
        %2436 = vmatpush1.msra.mxu0 0.0
        %2437 = vmatprep.subr.mxu0 0.0
        %2438 = vmatpush1.msra.mxu0 0.0
        %2439 = vmatprep.subr.mxu0 0.0
        %2440 = vmatpush1.msra.mxu0 0.0
        %2441 = vmatprep.subr.mxu0 0.0
        %2442 = vmatpush1.msra.mxu0 0.0
        %2443 = vmatprep.subr.mxu0 0.0
        %2444 = vmatpush1.msra.mxu0 0.0
        %2445 = vmatprep.subr.mxu0 0.0
        %2446 = vmatpush1.msra.mxu0 0.0
        %2447 = vmatprep.subr.mxu0 0.0
        %2448 = vmatpush1.msra.mxu0 0.0
        %2449 = vmatprep.subr.mxu0 0.0
        %2450 = vmatpush1.msra.mxu0 0.0
        %2451 = vmatprep.subr.mxu0 0.0
        %2452 = vmatpush1.msra.mxu0 0.0
        %2453 = vmatprep.subr.mxu0 0.0
        %2454 = vmatpush1.msra.mxu0 0.0
        %2455 = vmatprep.subr.mxu0 0.0
        %2456 = vmatpush1.msra.mxu0 0.0
        %2457 = vmatprep.subr.mxu0 0.0
        %2458 = vmatpush1.msra.mxu0 0.0
        %2459 = vmatprep.subr.mxu0 0.0
        %2460 = vmatpush1.msra.mxu0 0.0
        %2461 = vmatprep.subr.mxu0 0.0
        %2462 = vmatpush1.msra.mxu0 0.0
        %2463 = vmatprep.subr.mxu0 0.0
        %2464 = vmatpush1.msra.mxu0 0.0
        %2465 = vmatprep.mubr.f32.mxu0 0.0
        %2466 = vmatmul.mubr.f32.gmra.mrb[0].mxu0 %v2328
        %v2467 = vpop.f32.mrb[0].mxu0
        %v2468 = vadd.f32 %v2324, %v2467
        %v2469 = vpop.f32.mrb[0].mxu0
        %v2470 = vadd.f32 %v2324, %v2469
        %2471 = vdwg.mxu0
        %2472 = vmatprep.subr.mxu0 %v2253
        %2473 = vmatpush1.msra.mxu0 %v2252
        %2474 = vmatprep.subr.mxu0 %v2261
        %2475 = vmatpush1.msra.mxu0 %v2260
        %2476 = vmatprep.subr.mxu0 %v2269
        %2477 = vmatpush1.msra.mxu0 %v2268
        %2478 = vmatprep.subr.mxu0 %v2277
        %2479 = vmatpush1.msra.mxu0 %v2276
        %2480 = vmatprep.subr.mxu0 %v2285
        %2481 = vmatpush1.msra.mxu0 %v2284
        %2482 = vmatprep.subr.mxu0 %v2293
        %2483 = vmatpush1.msra.mxu0 %v2292
        %2484 = vmatprep.subr.mxu0 %v2301
        %2485 = vmatpush1.msra.mxu0 %v2300
        %2486 = vmatprep.subr.mxu0 %v2309
        %2487 = vmatpush1.msra.mxu0 %v2308
        %2488 = vmatprep.subr.mxu0 %v2317
        %2489 = vmatpush1.msra.mxu0 %v2316
        %2490 = vmatprep.subr.mxu0 0.0
        %2491 = vmatpush1.msra.mxu0 0.0
        %2492 = vmatprep.subr.mxu0 0.0
        %2493 = vmatpush1.msra.mxu0 0.0
        %2494 = vmatprep.subr.mxu0 0.0
        %2495 = vmatpush1.msra.mxu0 0.0
        %2496 = vmatprep.subr.mxu0 0.0
        %2497 = vmatpush1.msra.mxu0 0.0
        %2498 = vmatprep.subr.mxu0 0.0
        %2499 = vmatpush1.msra.mxu0 0.0
        %2500 = vmatprep.subr.mxu0 0.0
        %2501 = vmatpush1.msra.mxu0 0.0
        %2502 = vmatprep.subr.mxu0 0.0
        %2503 = vmatpush1.msra.mxu0 0.0
        %2504 = vmatprep.subr.mxu0 0.0
        %2505 = vmatpush1.msra.mxu0 0.0
        %2506 = vmatprep.subr.mxu0 0.0
        %2507 = vmatpush1.msra.mxu0 0.0
        %2508 = vmatprep.subr.mxu0 0.0
        %2509 = vmatpush1.msra.mxu0 0.0
        %2510 = vmatprep.subr.mxu0 0.0
        %2511 = vmatpush1.msra.mxu0 0.0
        %2512 = vmatprep.subr.mxu0 0.0
        %2513 = vmatpush1.msra.mxu0 0.0
        %2514 = vmatprep.subr.mxu0 0.0
        %2515 = vmatpush1.msra.mxu0 0.0
        %2516 = vmatprep.subr.mxu0 0.0
        %2517 = vmatpush1.msra.mxu0 0.0
        %2518 = vmatprep.subr.mxu0 0.0
        %2519 = vmatpush1.msra.mxu0 0.0
        %2520 = vmatprep.subr.mxu0 0.0
        %2521 = vmatpush1.msra.mxu0 0.0
        %2522 = vmatprep.subr.mxu0 0.0
        %2523 = vmatpush1.msra.mxu0 0.0
        %2524 = vmatprep.subr.mxu0 0.0
        %2525 = vmatpush1.msra.mxu0 0.0
        %2526 = vmatprep.subr.mxu0 0.0
        %2527 = vmatpush1.msra.mxu0 0.0
        %2528 = vmatprep.subr.mxu0 0.0
        %2529 = vmatpush1.msra.mxu0 0.0
        %2530 = vmatprep.subr.mxu0 0.0
        %2531 = vmatpush1.msra.mxu0 0.0
        %2532 = vmatprep.subr.mxu0 0.0
        %2533 = vmatpush1.msra.mxu0 0.0
        %2534 = vmatprep.subr.mxu0 0.0
        %2535 = vmatpush1.msra.mxu0 0.0
        %2536 = vmatprep.mubr.f32.mxu0 0.0
        %2537 = vmatmul.mubr.f32.gmra.mrb[0].mxu0 %v2328
        %v2538 = vpop.f32.mrb[0].mxu0
        %v2539 = vadd.f32 %v2324, %v2538
        %v2540 = vpop.f32.mrb[0].mxu0
        %v2541 = vadd.f32 %v2324, %v2540
        %2542 = vdwg.mxu0
        %2543 = vmatprep.subr.mxu0 %v2255
        %2544 = vmatpush1.msra.mxu0 %v2254
        %2545 = vmatprep.subr.mxu0 %v2263
        %2546 = vmatpush1.msra.mxu0 %v2262
        %2547 = vmatprep.subr.mxu0 %v2271
        %2548 = vmatpush1.msra.mxu0 %v2270
        %2549 = vmatprep.subr.mxu0 %v2279
        %2550 = vmatpush1.msra.mxu0 %v2278
        %2551 = vmatprep.subr.mxu0 %v2287
        %2552 = vmatpush1.msra.mxu0 %v2286
        %2553 = vmatprep.subr.mxu0 %v2295
        %2554 = vmatpush1.msra.mxu0 %v2294
        %2555 = vmatprep.subr.mxu0 %v2303
        %2556 = vmatpush1.msra.mxu0 %v2302
        %2557 = vmatprep.subr.mxu0 %v2311
        %2558 = vmatpush1.msra.mxu0 %v2310
        %2559 = vmatprep.subr.mxu0 %v2319
        %2560 = vmatpush1.msra.mxu0 %v2318
        %2561 = vmatprep.subr.mxu0 0.0
        %2562 = vmatpush1.msra.mxu0 0.0
        %2563 = vmatprep.subr.mxu0 0.0
        %2564 = vmatpush1.msra.mxu0 0.0
        %2565 = vmatprep.subr.mxu0 0.0
        %2566 = vmatpush1.msra.mxu0 0.0
        %2567 = vmatprep.subr.mxu0 0.0
        %2568 = vmatpush1.msra.mxu0 0.0
        %2569 = vmatprep.subr.mxu0 0.0
        %2570 = vmatpush1.msra.mxu0 0.0
        %2571 = vmatprep.subr.mxu0 0.0
        %2572 = vmatpush1.msra.mxu0 0.0
        %2573 = vmatprep.subr.mxu0 0.0
        %2574 = vmatpush1.msra.mxu0 0.0
        %2575 = vmatprep.subr.mxu0 0.0
        %2576 = vmatpush1.msra.mxu0 0.0
        %2577 = vmatprep.subr.mxu0 0.0
        %2578 = vmatpush1.msra.mxu0 0.0
        %2579 = vmatprep.subr.mxu0 0.0
        %2580 = vmatpush1.msra.mxu0 0.0
        %2581 = vmatprep.subr.mxu0 0.0
        %2582 = vmatpush1.msra.mxu0 0.0
        %2583 = vmatprep.subr.mxu0 0.0
        %2584 = vmatpush1.msra.mxu0 0.0
        %2585 = vmatprep.subr.mxu0 0.0
        %2586 = vmatpush1.msra.mxu0 0.0
        %2587 = vmatprep.subr.mxu0 0.0
        %2588 = vmatpush1.msra.mxu0 0.0
        %2589 = vmatprep.subr.mxu0 0.0
        %2590 = vmatpush1.msra.mxu0 0.0
        %2591 = vmatprep.subr.mxu0 0.0
        %2592 = vmatpush1.msra.mxu0 0.0
        %2593 = vmatprep.subr.mxu0 0.0
        %2594 = vmatpush1.msra.mxu0 0.0
        %2595 = vmatprep.subr.mxu0 0.0
        %2596 = vmatpush1.msra.mxu0 0.0
        %2597 = vmatprep.subr.mxu0 0.0
        %2598 = vmatpush1.msra.mxu0 0.0
        %2599 = vmatprep.subr.mxu0 0.0
        %2600 = vmatpush1.msra.mxu0 0.0
        %2601 = vmatprep.subr.mxu0 0.0
        %2602 = vmatpush1.msra.mxu0 0.0
        %2603 = vmatprep.subr.mxu0 0.0
        %2604 = vmatpush1.msra.mxu0 0.0
        %2605 = vmatprep.subr.mxu0 0.0
        %2606 = vmatpush1.msra.mxu0 0.0
        %2607 = vmatprep.mubr.f32.mxu0 0.0
        %2608 = vmatmul.mubr.f32.gmra.mrb[0].mxu0 %v2328
        %v2609 = vpop.f32.mrb[0].mxu0
        %v2610 = vadd.f32 %v2324, %v2609
        %v2611 = vpop.f32.mrb[0].mxu0
        %v2612 = vadd.f32 %v2324, %v2611
        %2613 = vdwg.mxu0
        %v2614 = vmax.f32 %v2397, 0.0
        %v2615 = vmax.f32 %v2399, 0.0
        %v2616 = vmax.f32 %v2468, 0.0
        %v2617 = vmax.f32 %v2470, 0.0
        %v2618 = vmax.f32 %v2539, 0.0
        %v2619 = vmax.f32 %v2541, 0.0
        %v2620 = vmax.f32 %v2610, 0.0
        %v2621 = vmax.f32 %v2612, 0.0
        %2622 = vrot.lane.b32.xlu0 %v2614, 33
        %v2623 = vpop.permute.xlu0 %2622
        %2624 = vrot.lane.b32.xlu0 %v2615, 33
        %v2625 = vpop.permute.xlu0 %2624
        %2626 = vrot.lane.b32.xlu0 %v2616, 33
        %v2627 = vpop.permute.xlu0 %2626
        %2628 = vrot.lane.b32.xlu0 %v2617, 33
        %v2629 = vpop.permute.xlu0 %2628
        %2630 = vrot.lane.b32.xlu0 %v2618, 33
        %v2631 = vpop.permute.xlu0 %2630
        %2632 = vrot.lane.b32.xlu0 %v2619, 33
        %v2633 = vpop.permute.xlu0 %2632
        %2634 = vrot.lane.b32.xlu0 %v2620, 33
        %v2635 = vpop.permute.xlu0 %2634
        %2636 = vrot.lane.b32.xlu0 %v2621, 33
        %v2637 = vpop.permute.xlu0 %2636
        %v2638 = vsel %vm1615, %v2635, %v2637
        %v2639 = vsel %vm1615, %v2633, %v2635
        %v2640 = vsel %vm1615, %v2631, %v2633
        %v2641 = vsel %vm1615, %v2629, %v2631
        %v2642 = vsel %vm1615, %v2627, %v2629
        %v2643 = vsel %vm1615, %v2625, %v2627
        %v2644 = vsel %vm1615, %v2623, %v2625
        %v2645 = vsel %vm1615, %v2637, %v2623
        %v2646 = vsel %vm1664, %v2645, 0.0
        %v2647 = vsel %vm1665, %v2644, 0.0
        %v2648 = vsel %vm1666, %v2643, 0.0
        %v2649 = vsel %vm1667, %v2642, 0.0
        %v2650 = vsel %vm1668, %v2641, 0.0
        %v2651 = vsel %vm1669, %v2640, 0.0
        %v2652 = vsel %vm1670, %v2639, 0.0
        %v2653 = vsel %vm1671, %v2638, 0.0
        %2654 = vst [vmem:[#allocation2] sm:$0xff] %v2646
        %2655 = vst [vmem:[#allocation2 + $0x8] sm:$0xff] %v2647
        %2656 = vst [vmem:[#allocation2 + $0x10] sm:$0xff] %v2648
        %2657 = vst [vmem:[#allocation2 + $0x18] sm:$0xff] %v2649
        %2658 = vst [vmem:[#allocation2 + $0x20] sm:$0xff] %v2650
        %2659 = vst [vmem:[#allocation2 + $0x28] sm:$0xff] %v2651
        %2660 = vst [vmem:[#allocation2 + $0x30] sm:$0xff] %v2652
        %2661 = vst [vmem:[#allocation2 + $0x38] sm:$0xff] %v2653
        %2662 = vrot.lane.b32.xlu0 %v2614, 32
        %v2663 = vpop.permute.xlu0 %2662
        %2664 = vrot.lane.b32.xlu0 %v2615, 32
        %v2665 = vpop.permute.xlu0 %2664
        %2666 = vrot.lane.b32.xlu0 %v2616, 32
        %v2667 = vpop.permute.xlu0 %2666
        %2668 = vrot.lane.b32.xlu0 %v2617, 32
        %v2669 = vpop.permute.xlu0 %2668
        %2670 = vrot.lane.b32.xlu0 %v2618, 32
        %v2671 = vpop.permute.xlu0 %2670
        %2672 = vrot.lane.b32.xlu0 %v2619, 32
        %v2673 = vpop.permute.xlu0 %2672
        %2674 = vrot.lane.b32.xlu0 %v2620, 32
        %v2675 = vpop.permute.xlu0 %2674
        %2676 = vrot.lane.b32.xlu0 %v2621, 32
        %v2677 = vpop.permute.xlu0 %2676
        %v2678 = vsel %vm1704, %v2675, %v2677
        %v2679 = vsel %vm1704, %v2673, %v2675
        %v2680 = vsel %vm1704, %v2671, %v2673
        %v2681 = vsel %vm1704, %v2669, %v2671
        %v2682 = vsel %vm1704, %v2667, %v2669
        %v2683 = vsel %vm1704, %v2665, %v2667
        %v2684 = vsel %vm1704, %v2663, %v2665
        %v2685 = vsel %vm1704, %v2677, %v2663
        %v2686 = vsel %vm1753, %v2685, 0.0
        %v2687 = vsel %vm1754, %v2684, 0.0
        %v2688 = vsel %vm1755, %v2683, 0.0
        %v2689 = vsel %vm1756, %v2682, 0.0
        %v2690 = vsel %vm1757, %v2681, 0.0
        %v2691 = vsel %vm1758, %v2680, 0.0
        %v2692 = vsel %vm1759, %v2679, 0.0
        %v2693 = vsel %vm1760, %v2678, 0.0
        %2694 = vst [vmem:[#allocation2 + $0x40] sm:$0xff] %v2686
        %2695 = vst [vmem:[#allocation2 + $0x48] sm:$0xff] %v2687
        %2696 = vst [vmem:[#allocation2 + $0x50] sm:$0xff] %v2688
        %2697 = vst [vmem:[#allocation2 + $0x58] sm:$0xff] %v2689
        %2698 = vst [vmem:[#allocation2 + $0x60] sm:$0xff] %v2690
        %2699 = vst [vmem:[#allocation2 + $0x68] sm:$0xff] %v2691
        %2700 = vst [vmem:[#allocation2 + $0x70] sm:$0xff] %v2692
        %2701 = vst [vmem:[#allocation2 + $0x78] sm:$0xff] %v2693
        %2702 = vrot.lane.b32.xlu0 %v2614, 31
        %v2703 = vpop.permute.xlu0 %2702
        %2704 = vrot.lane.b32.xlu0 %v2615, 31
        %v2705 = vpop.permute.xlu0 %2704
        %2706 = vrot.lane.b32.xlu0 %v2616, 31
        %v2707 = vpop.permute.xlu0 %2706
        %2708 = vrot.lane.b32.xlu0 %v2617, 31
        %v2709 = vpop.permute.xlu0 %2708
        %2710 = vrot.lane.b32.xlu0 %v2618, 31
        %v2711 = vpop.permute.xlu0 %2710
        %2712 = vrot.lane.b32.xlu0 %v2619, 31
        %v2713 = vpop.permute.xlu0 %2712
        %2714 = vrot.lane.b32.xlu0 %v2620, 31
        %v2715 = vpop.permute.xlu0 %2714
        %2716 = vrot.lane.b32.xlu0 %v2621, 31
        %v2717 = vpop.permute.xlu0 %2716
        %v2718 = vsel %vm1793, %v2715, %v2717
        %v2719 = vsel %vm1793, %v2713, %v2715
        %v2720 = vsel %vm1793, %v2711, %v2713
        %v2721 = vsel %vm1793, %v2709, %v2711
        %v2722 = vsel %vm1793, %v2707, %v2709
        %v2723 = vsel %vm1793, %v2705, %v2707
        %v2724 = vsel %vm1793, %v2703, %v2705
        %v2725 = vsel %vm1793, %v2717, %v2703
        %v2726 = vsel %vm1842, %v2725, 0.0
        %v2727 = vsel %vm1843, %v2724, 0.0
        %v2728 = vsel %vm1844, %v2723, 0.0
        %v2729 = vsel %vm1845, %v2722, 0.0
        %v2730 = vsel %vm1846, %v2721, 0.0
        %v2731 = vsel %vm1847, %v2720, 0.0
        %v2732 = vsel %vm1848, %v2719, 0.0
        %v2733 = vsel %vm1849, %v2718, 0.0
        %2734 = vst [vmem:[#allocation2 + $0x80] sm:$0xff] %v2726
        %2735 = vst [vmem:[#allocation2 + $0x88] sm:$0xff] %v2727
        %2736 = vst [vmem:[#allocation2 + $0x90] sm:$0xff] %v2728
        %2737 = vst [vmem:[#allocation2 + $0x98] sm:$0xff] %v2729
        %2738 = vst [vmem:[#allocation2 + $0xa0] sm:$0xff] %v2730
        %2739 = vst [vmem:[#allocation2 + $0xa8] sm:$0xff] %v2731
        %2740 = vst [vmem:[#allocation2 + $0xb0] sm:$0xff] %v2732
        %2741 = vst [vmem:[#allocation2 + $0xb8] sm:$0xff] %v2733
        %2742 = vrot.lane.b32.xlu0 %v2614, 1
        %v2743 = vpop.permute.xlu0 %2742
        %2744 = vrot.lane.b32.xlu0 %v2615, 1
        %v2745 = vpop.permute.xlu0 %2744
        %2746 = vrot.lane.b32.xlu0 %v2616, 1
        %v2747 = vpop.permute.xlu0 %2746
        %2748 = vrot.lane.b32.xlu0 %v2617, 1
        %v2749 = vpop.permute.xlu0 %2748
        %2750 = vrot.lane.b32.xlu0 %v2618, 1
        %v2751 = vpop.permute.xlu0 %2750
        %2752 = vrot.lane.b32.xlu0 %v2619, 1
        %v2753 = vpop.permute.xlu0 %2752
        %2754 = vrot.lane.b32.xlu0 %v2620, 1
        %v2755 = vpop.permute.xlu0 %2754
        %2756 = vrot.lane.b32.xlu0 %v2621, 1
        %v2757 = vpop.permute.xlu0 %2756
        %v2758 = vsel %vm1882, %v2755, %v2757
        %v2759 = vsel %vm1882, %v2753, %v2755
        %v2760 = vsel %vm1882, %v2751, %v2753
        %v2761 = vsel %vm1882, %v2749, %v2751
        %v2762 = vsel %vm1882, %v2747, %v2749
        %v2763 = vsel %vm1882, %v2745, %v2747
        %v2764 = vsel %vm1882, %v2743, %v2745
        %v2765 = vsel %vm1882, %v2757, %v2743
        %v2766 = vsel %vm1901, %v2765, 0.0
        %v2767 = vsel %vm1902, %v2764, 0.0
        %v2768 = vsel %vm1901, %v2763, 0.0
        %v2769 = vsel %vm1902, %v2762, 0.0
        %v2770 = vsel %vm1901, %v2761, 0.0
        %v2771 = vsel %vm1902, %v2760, 0.0
        %v2772 = vsel %vm1901, %v2759, 0.0
        %v2773 = vsel %vm1902, %v2758, 0.0
        %2774 = vst [vmem:[#allocation2 + $0xc0] sm:$0xff] %v2766
        %2775 = vst [vmem:[#allocation2 + $0xc8] sm:$0xff] %v2767
        %2776 = vst [vmem:[#allocation2 + $0xd0] sm:$0xff] %v2768
        %2777 = vst [vmem:[#allocation2 + $0xd8] sm:$0xff] %v2769
        %2778 = vst [vmem:[#allocation2 + $0xe0] sm:$0xff] %v2770
        %2779 = vst [vmem:[#allocation2 + $0xe8] sm:$0xff] %v2771
        %2780 = vst [vmem:[#allocation2 + $0xf0] sm:$0xff] %v2772
        %2781 = vst [vmem:[#allocation2 + $0xf8] sm:$0xff] %v2773
        %2782 = vst [vmem:[#allocation2 + $0x100] sm:$0xff] %v2614
        %2783 = vst [vmem:[#allocation2 + $0x108] sm:$0xff] %v2615
        %2784 = vst [vmem:[#allocation2 + $0x110] sm:$0xff] %v2616
        %2785 = vst [vmem:[#allocation2 + $0x118] sm:$0xff] %v2617
        %2786 = vst [vmem:[#allocation2 + $0x120] sm:$0xff] %v2618
        %2787 = vst [vmem:[#allocation2 + $0x128] sm:$0xff] %v2619
        %2788 = vst [vmem:[#allocation2 + $0x130] sm:$0xff] %v2620
        %2789 = vst [vmem:[#allocation2 + $0x138] sm:$0xff] %v2621
        %2790 = vrot.lane.b32.xlu0 %v2614, 127
        %v2791 = vpop.permute.xlu0 %2790
        %2792 = vrot.lane.b32.xlu0 %v2615, 127
        %v2793 = vpop.permute.xlu0 %2792
        %2794 = vrot.lane.b32.xlu0 %v2616, 127
        %v2795 = vpop.permute.xlu0 %2794
        %2796 = vrot.lane.b32.xlu0 %v2617, 127
        %v2797 = vpop.permute.xlu0 %2796
        %2798 = vrot.lane.b32.xlu0 %v2618, 127
        %v2799 = vpop.permute.xlu0 %2798
        %2800 = vrot.lane.b32.xlu0 %v2619, 127
        %v2801 = vpop.permute.xlu0 %2800
        %2802 = vrot.lane.b32.xlu0 %v2620, 127
        %v2803 = vpop.permute.xlu0 %2802
        %2804 = vrot.lane.b32.xlu0 %v2621, 127
        %v2805 = vpop.permute.xlu0 %2804
        %v2806 = vsel %vm1943, %v2803, %v2805
        %v2807 = vsel %vm1943, %v2801, %v2803
        %v2808 = vsel %vm1943, %v2799, %v2801
        %v2809 = vsel %vm1943, %v2797, %v2799
        %v2810 = vsel %vm1943, %v2795, %v2797
        %v2811 = vsel %vm1943, %v2793, %v2795
        %v2812 = vsel %vm1943, %v2791, %v2793
        %v2813 = vsel %vm1943, %v2805, %v2791
        %v2814 = vsel %vm1962, %v2812, 0.0
        %v2815 = vsel %vm1963, %v2811, 0.0
        %v2816 = vsel %vm1962, %v2810, 0.0
        %v2817 = vsel %vm1963, %v2809, 0.0
        %v2818 = vsel %vm1962, %v2808, 0.0
        %v2819 = vsel %vm1963, %v2807, 0.0
        %v2820 = vsel %vm1962, %v2806, 0.0
        %v2821 = vsel %vm1963, %v2813, 0.0
        %2822 = vst [vmem:[#allocation2 + $0x140] sm:$0xff] %v2814
        %2823 = vst [vmem:[#allocation2 + $0x148] sm:$0xff] %v2815
        %2824 = vst [vmem:[#allocation2 + $0x150] sm:$0xff] %v2816
        %2825 = vst [vmem:[#allocation2 + $0x158] sm:$0xff] %v2817
        %2826 = vst [vmem:[#allocation2 + $0x160] sm:$0xff] %v2818
        %2827 = vst [vmem:[#allocation2 + $0x168] sm:$0xff] %v2819
        %2828 = vst [vmem:[#allocation2 + $0x170] sm:$0xff] %v2820
        %2829 = vst [vmem:[#allocation2 + $0x178] sm:$0xff] %v2821
        %2830 = vrot.lane.b32.xlu0 %v2614, 97
        %v2831 = vpop.permute.xlu0 %2830
        %2832 = vrot.lane.b32.xlu0 %v2615, 97
        %v2833 = vpop.permute.xlu0 %2832
        %2834 = vrot.lane.b32.xlu0 %v2616, 97
        %v2835 = vpop.permute.xlu0 %2834
        %2836 = vrot.lane.b32.xlu0 %v2617, 97
        %v2837 = vpop.permute.xlu0 %2836
        %2838 = vrot.lane.b32.xlu0 %v2618, 97
        %v2839 = vpop.permute.xlu0 %2838
        %2840 = vrot.lane.b32.xlu0 %v2619, 97
        %v2841 = vpop.permute.xlu0 %2840
        %2842 = vrot.lane.b32.xlu0 %v2620, 97
        %v2843 = vpop.permute.xlu0 %2842
        %2844 = vrot.lane.b32.xlu0 %v2621, 97
        %v2845 = vpop.permute.xlu0 %2844
        %v2846 = vsel %vm1996, %v2843, %v2845
        %v2847 = vsel %vm1996, %v2841, %v2843
        %v2848 = vsel %vm1996, %v2839, %v2841
        %v2849 = vsel %vm1996, %v2837, %v2839
        %v2850 = vsel %vm1996, %v2835, %v2837
        %v2851 = vsel %vm1996, %v2833, %v2835
        %v2852 = vsel %vm1996, %v2831, %v2833
        %v2853 = vsel %vm1996, %v2845, %v2831
        %v2854 = vsel %vm2045, %v2852, 0.0
        %v2855 = vsel %vm2046, %v2851, 0.0
        %v2856 = vsel %vm2047, %v2850, 0.0
        %v2857 = vsel %vm2048, %v2849, 0.0
        %v2858 = vsel %vm2049, %v2848, 0.0
        %v2859 = vsel %vm2050, %v2847, 0.0
        %v2860 = vsel %vm2051, %v2846, 0.0
        %v2861 = vsel %vm2052, %v2853, 0.0
        %2862 = vst [vmem:[#allocation2 + $0x180] sm:$0xff] %v2854
        %2863 = vst [vmem:[#allocation2 + $0x188] sm:$0xff] %v2855
        %2864 = vst [vmem:[#allocation2 + $0x190] sm:$0xff] %v2856
        %2865 = vst [vmem:[#allocation2 + $0x198] sm:$0xff] %v2857
        %2866 = vst [vmem:[#allocation2 + $0x1a0] sm:$0xff] %v2858
        %2867 = vst [vmem:[#allocation2 + $0x1a8] sm:$0xff] %v2859
        %2868 = vst [vmem:[#allocation2 + $0x1b0] sm:$0xff] %v2860
        %2869 = vst [vmem:[#allocation2 + $0x1b8] sm:$0xff] %v2861
        %2870 = vrot.lane.b32.xlu0 %v2614, 96
        %v2871 = vpop.permute.xlu0 %2870
        %2872 = vrot.lane.b32.xlu0 %v2615, 96
        %v2873 = vpop.permute.xlu0 %2872
        %2874 = vrot.lane.b32.xlu0 %v2616, 96
        %v2875 = vpop.permute.xlu0 %2874
        %2876 = vrot.lane.b32.xlu0 %v2617, 96
        %v2877 = vpop.permute.xlu0 %2876
        %2878 = vrot.lane.b32.xlu0 %v2618, 96
        %v2879 = vpop.permute.xlu0 %2878
        %2880 = vrot.lane.b32.xlu0 %v2619, 96
        %v2881 = vpop.permute.xlu0 %2880
        %2882 = vrot.lane.b32.xlu0 %v2620, 96
        %v2883 = vpop.permute.xlu0 %2882
        %2884 = vrot.lane.b32.xlu0 %v2621, 96
        %v2885 = vpop.permute.xlu0 %2884
        %v2886 = vsel %vm2085, %v2883, %v2885
        %v2887 = vsel %vm2085, %v2881, %v2883
        %v2888 = vsel %vm2085, %v2879, %v2881
        %v2889 = vsel %vm2085, %v2877, %v2879
        %v2890 = vsel %vm2085, %v2875, %v2877
        %v2891 = vsel %vm2085, %v2873, %v2875
        %v2892 = vsel %vm2085, %v2871, %v2873
        %v2893 = vsel %vm2085, %v2885, %v2871
        %v2894 = vsel %vm2134, %v2892, 0.0
        %v2895 = vsel %vm2135, %v2891, 0.0
        %v2896 = vsel %vm2136, %v2890, 0.0
        %v2897 = vsel %vm2137, %v2889, 0.0
        %v2898 = vsel %vm2138, %v2888, 0.0
        %v2899 = vsel %vm2139, %v2887, 0.0
        %v2900 = vsel %vm2140, %v2886, 0.0
        %v2901 = vsel %vm2141, %v2893, 0.0
        %2902 = vst [vmem:[#allocation2 + $0x1c0] sm:$0xff] %v2894
        %2903 = vst [vmem:[#allocation2 + $0x1c8] sm:$0xff] %v2895
        %2904 = vst [vmem:[#allocation2 + $0x1d0] sm:$0xff] %v2896
        %2905 = vst [vmem:[#allocation2 + $0x1d8] sm:$0xff] %v2897
        %2906 = vst [vmem:[#allocation2 + $0x1e0] sm:$0xff] %v2898
        %2907 = vst [vmem:[#allocation2 + $0x1e8] sm:$0xff] %v2899
        %2908 = vst [vmem:[#allocation2 + $0x1f0] sm:$0xff] %v2900
        %2909 = vst [vmem:[#allocation2 + $0x1f8] sm:$0xff] %v2901
        %2910 = vrot.lane.b32.xlu0 %v2614, 95
        %v2911 = vpop.permute.xlu0 %2910
        %2912 = vrot.lane.b32.xlu0 %v2615, 95
        %v2913 = vpop.permute.xlu0 %2912
        %2914 = vrot.lane.b32.xlu0 %v2616, 95
        %v2915 = vpop.permute.xlu0 %2914
        %2916 = vrot.lane.b32.xlu0 %v2617, 95
        %v2917 = vpop.permute.xlu0 %2916
        %2918 = vrot.lane.b32.xlu0 %v2618, 95
        %v2919 = vpop.permute.xlu0 %2918
        %2920 = vrot.lane.b32.xlu0 %v2619, 95
        %v2921 = vpop.permute.xlu0 %2920
        %2922 = vrot.lane.b32.xlu0 %v2620, 95
        %v2923 = vpop.permute.xlu0 %2922
        %2924 = vrot.lane.b32.xlu0 %v2621, 95
        %v2925 = vpop.permute.xlu0 %2924
        %v2926 = vsel %vm2174, %v2923, %v2925
        %v2927 = vsel %vm2174, %v2921, %v2923
        %v2928 = vsel %vm2174, %v2919, %v2921
        %v2929 = vsel %vm2174, %v2917, %v2919
        %v2930 = vsel %vm2174, %v2915, %v2917
        %v2931 = vsel %vm2174, %v2913, %v2915
        %v2932 = vsel %vm2174, %v2911, %v2913
        %v2933 = vsel %vm2174, %v2925, %v2911
        %v2934 = vsel %vm2223, %v2932, 0.0
        %v2935 = vsel %vm2224, %v2931, 0.0
        %v2936 = vsel %vm2225, %v2930, 0.0
        %v2937 = vsel %vm2226, %v2929, 0.0
        %v2938 = vsel %vm2227, %v2928, 0.0
        %v2939 = vsel %vm2228, %v2927, 0.0
        %v2940 = vsel %vm2229, %v2926, 0.0
        %v2941 = vsel %vm2230, %v2933, 0.0
        %2942 = vst [vmem:[#allocation2 + $0x200] sm:$0xff] %v2934
        %2943 = vst [vmem:[#allocation2 + $0x208] sm:$0xff] %v2935
        %2944 = vst [vmem:[#allocation2 + $0x210] sm:$0xff] %v2936
        %2945 = vst [vmem:[#allocation2 + $0x218] sm:$0xff] %v2937
        %2946 = vst [vmem:[#allocation2 + $0x220] sm:$0xff] %v2938
        %2947 = vst [vmem:[#allocation2 + $0x228] sm:$0xff] %v2939
        %2948 = vst [vmem:[#allocation2 + $0x230] sm:$0xff] %v2940
        %2949 = vst [vmem:[#allocation2 + $0x238] sm:$0xff] %v2941
        %v2950 = vld [vmem:[%s5] sm:$0xff]
        %v2951 = vld [vmem:[#allocation2] sm:$0xff]
        %v2952 = vld [vmem:[#allocation2 + $0x8] sm:$0xff]
        %v2953 = vld [vmem:[#allocation2 + $0x10] sm:$0xff]
        %v2954 = vld [vmem:[#allocation2 + $0x18] sm:$0xff]
        %v2955 = vld [vmem:[#allocation2 + $0x20] sm:$0xff]
        %v2956 = vld [vmem:[#allocation2 + $0x28] sm:$0xff]
        %v2957 = vld [vmem:[#allocation2 + $0x30] sm:$0xff]
        %v2958 = vld [vmem:[#allocation2 + $0x38] sm:$0xff]
        %v2959 = vld [vmem:[#allocation2 + $0x40] sm:$0xff]
        %v2960 = vld [vmem:[#allocation2 + $0x48] sm:$0xff]
        %v2961 = vld [vmem:[#allocation2 + $0x50] sm:$0xff]
        %v2962 = vld [vmem:[#allocation2 + $0x58] sm:$0xff]
        %v2963 = vld [vmem:[#allocation2 + $0x60] sm:$0xff]
        %v2964 = vld [vmem:[#allocation2 + $0x68] sm:$0xff]
        %v2965 = vld [vmem:[#allocation2 + $0x70] sm:$0xff]
        %v2966 = vld [vmem:[#allocation2 + $0x78] sm:$0xff]
        %v2967 = vld [vmem:[#allocation2 + $0x80] sm:$0xff]
        %v2968 = vld [vmem:[#allocation2 + $0x88] sm:$0xff]
        %v2969 = vld [vmem:[#allocation2 + $0x90] sm:$0xff]
        %v2970 = vld [vmem:[#allocation2 + $0x98] sm:$0xff]
        %v2971 = vld [vmem:[#allocation2 + $0xa0] sm:$0xff]
        %v2972 = vld [vmem:[#allocation2 + $0xa8] sm:$0xff]
        %v2973 = vld [vmem:[#allocation2 + $0xb0] sm:$0xff]
        %v2974 = vld [vmem:[#allocation2 + $0xb8] sm:$0xff]
        %v2975 = vld [vmem:[#allocation2 + $0xc0] sm:$0xff]
        %v2976 = vld [vmem:[#allocation2 + $0xc8] sm:$0xff]
        %v2977 = vld [vmem:[#allocation2 + $0xd0] sm:$0xff]
        %v2978 = vld [vmem:[#allocation2 + $0xd8] sm:$0xff]
        %v2979 = vld [vmem:[#allocation2 + $0xe0] sm:$0xff]
        %v2980 = vld [vmem:[#allocation2 + $0xe8] sm:$0xff]
        %v2981 = vld [vmem:[#allocation2 + $0xf0] sm:$0xff]
        %v2982 = vld [vmem:[#allocation2 + $0xf8] sm:$0xff]
        %v2983 = vld [vmem:[#allocation2 + $0x100] sm:$0xff]
        %v2984 = vld [vmem:[#allocation2 + $0x108] sm:$0xff]
        %v2985 = vld [vmem:[#allocation2 + $0x110] sm:$0xff]
        %v2986 = vld [vmem:[#allocation2 + $0x118] sm:$0xff]
        %v2987 = vld [vmem:[#allocation2 + $0x120] sm:$0xff]
        %v2988 = vld [vmem:[#allocation2 + $0x128] sm:$0xff]
        %v2989 = vld [vmem:[#allocation2 + $0x130] sm:$0xff]
        %v2990 = vld [vmem:[#allocation2 + $0x138] sm:$0xff]
        %v2991 = vld [vmem:[#allocation2 + $0x140] sm:$0xff]
        %v2992 = vld [vmem:[#allocation2 + $0x148] sm:$0xff]
        %v2993 = vld [vmem:[#allocation2 + $0x150] sm:$0xff]
        %v2994 = vld [vmem:[#allocation2 + $0x158] sm:$0xff]
        %v2995 = vld [vmem:[#allocation2 + $0x160] sm:$0xff]
        %v2996 = vld [vmem:[#allocation2 + $0x168] sm:$0xff]
        %v2997 = vld [vmem:[#allocation2 + $0x170] sm:$0xff]
        %v2998 = vld [vmem:[#allocation2 + $0x178] sm:$0xff]
        %v2999 = vld [vmem:[#allocation2 + $0x180] sm:$0xff]
        %v3000 = vld [vmem:[#allocation2 + $0x188] sm:$0xff]
        %v3001 = vld [vmem:[#allocation2 + $0x190] sm:$0xff]
        %v3002 = vld [vmem:[#allocation2 + $0x198] sm:$0xff]
        %v3003 = vld [vmem:[#allocation2 + $0x1a0] sm:$0xff]
        %v3004 = vld [vmem:[#allocation2 + $0x1a8] sm:$0xff]
        %v3005 = vld [vmem:[#allocation2 + $0x1b0] sm:$0xff]
        %v3006 = vld [vmem:[#allocation2 + $0x1b8] sm:$0xff]
        %v3007 = vld [vmem:[#allocation2 + $0x1c0] sm:$0xff]
        %v3008 = vld [vmem:[#allocation2 + $0x1c8] sm:$0xff]
        %v3009 = vld [vmem:[#allocation2 + $0x1d0] sm:$0xff]
        %v3010 = vld [vmem:[#allocation2 + $0x1d8] sm:$0xff]
        %v3011 = vld [vmem:[#allocation2 + $0x1e0] sm:$0xff]
        %v3012 = vld [vmem:[#allocation2 + $0x1e8] sm:$0xff]
        %v3013 = vld [vmem:[#allocation2 + $0x1f0] sm:$0xff]
        %v3014 = vld [vmem:[#allocation2 + $0x1f8] sm:$0xff]
        %v3015 = vld [vmem:[#allocation2 + $0x200] sm:$0xff]
        %v3016 = vld [vmem:[#allocation2 + $0x208] sm:$0xff]
        %v3017 = vld [vmem:[#allocation2 + $0x210] sm:$0xff]
        %v3018 = vld [vmem:[#allocation2 + $0x218] sm:$0xff]
        %v3019 = vld [vmem:[#allocation2 + $0x220] sm:$0xff]
        %v3020 = vld [vmem:[#allocation2 + $0x228] sm:$0xff]
        %v3021 = vld [vmem:[#allocation2 + $0x230] sm:$0xff]
        %v3022 = vld [vmem:[#allocation2 + $0x238] sm:$0xff]
        %v3023 = vld [vmem:[%s6] sm:$0xff]
        %3025 = vset.pattern.permute.xlu0 0
        %3026 = vperm.xlu0 %3025, %v3023
        %v3027 = vpop.permute.xlu0 %3026
        %v3030 = vsel %vm2326, %v2950, 0
        %3032 = vmatprep.subr.mxu0 %v2952
        %3033 = vmatpush1.msra.mxu0 %v2951
        %3034 = vmatprep.subr.mxu0 %v2960
        %3035 = vmatpush1.msra.mxu0 %v2959
        %3036 = vmatprep.subr.mxu0 %v2968
        %3037 = vmatpush1.msra.mxu0 %v2967
        %3038 = vmatprep.subr.mxu0 %v2976
        %3039 = vmatpush1.msra.mxu0 %v2975
        %3040 = vmatprep.subr.mxu0 %v2984
        %3041 = vmatpush1.msra.mxu0 %v2983
        %3042 = vmatprep.subr.mxu0 %v2992
        %3043 = vmatpush1.msra.mxu0 %v2991
        %3044 = vmatprep.subr.mxu0 %v3000
        %3045 = vmatpush1.msra.mxu0 %v2999
        %3046 = vmatprep.subr.mxu0 %v3008
        %3047 = vmatpush1.msra.mxu0 %v3007
        %3048 = vmatprep.subr.mxu0 %v3016
        %3049 = vmatpush1.msra.mxu0 %v3015
        %3050 = vmatprep.subr.mxu0 0.0
        %3051 = vmatpush1.msra.mxu0 0.0
        %3052 = vmatprep.subr.mxu0 0.0
        %3053 = vmatpush1.msra.mxu0 0.0
        %3054 = vmatprep.subr.mxu0 0.0
        %3055 = vmatpush1.msra.mxu0 0.0
        %3056 = vmatprep.subr.mxu0 0.0
        %3057 = vmatpush1.msra.mxu0 0.0
        %3058 = vmatprep.subr.mxu0 0.0
        %3059 = vmatpush1.msra.mxu0 0.0
        %3060 = vmatprep.subr.mxu0 0.0
        %3061 = vmatpush1.msra.mxu0 0.0
        %3062 = vmatprep.subr.mxu0 0.0
        %3063 = vmatpush1.msra.mxu0 0.0
        %3064 = vmatprep.subr.mxu0 0.0
        %3065 = vmatpush1.msra.mxu0 0.0
        %3066 = vmatprep.subr.mxu0 0.0
        %3067 = vmatpush1.msra.mxu0 0.0
        %3068 = vmatprep.subr.mxu0 0.0
        %3069 = vmatpush1.msra.mxu0 0.0
        %3070 = vmatprep.subr.mxu0 0.0
        %3071 = vmatpush1.msra.mxu0 0.0
        %3072 = vmatprep.subr.mxu0 0.0
        %3073 = vmatpush1.msra.mxu0 0.0
        %3074 = vmatprep.subr.mxu0 0.0
        %3075 = vmatpush1.msra.mxu0 0.0
        %3076 = vmatprep.subr.mxu0 0.0
        %3077 = vmatpush1.msra.mxu0 0.0
        %3078 = vmatprep.subr.mxu0 0.0
        %3079 = vmatpush1.msra.mxu0 0.0
        %3080 = vmatprep.subr.mxu0 0.0
        %3081 = vmatpush1.msra.mxu0 0.0
        %3082 = vmatprep.subr.mxu0 0.0
        %3083 = vmatpush1.msra.mxu0 0.0
        %3084 = vmatprep.subr.mxu0 0.0
        %3085 = vmatpush1.msra.mxu0 0.0
        %3086 = vmatprep.subr.mxu0 0.0
        %3087 = vmatpush1.msra.mxu0 0.0
        %3088 = vmatprep.subr.mxu0 0.0
        %3089 = vmatpush1.msra.mxu0 0.0
        %3090 = vmatprep.subr.mxu0 0.0
        %3091 = vmatpush1.msra.mxu0 0.0
        %3092 = vmatprep.subr.mxu0 0.0
        %3093 = vmatpush1.msra.mxu0 0.0
        %3094 = vmatprep.subr.mxu0 0.0
        %3095 = vmatpush1.msra.mxu0 0.0
        %3096 = vmatprep.mubr.f32.mxu0 0.0
        %3097 = vmatmul.mubr.f32.gmra.mrb[0].mxu0 %v3030
        %v3098 = vpop.f32.mrb[0].mxu0
        %v3099 = vadd.f32 %v3027, %v3098
        %v3100 = vpop.f32.mrb[0].mxu0
        %v3101 = vadd.f32 %v3027, %v3100
        %3102 = vdwg.mxu0
        %3103 = vmatprep.subr.mxu0 %v2954
        %3104 = vmatpush1.msra.mxu0 %v2953
        %3105 = vmatprep.subr.mxu0 %v2962
        %3106 = vmatpush1.msra.mxu0 %v2961
        %3107 = vmatprep.subr.mxu0 %v2970
        %3108 = vmatpush1.msra.mxu0 %v2969
        %3109 = vmatprep.subr.mxu0 %v2978
        %3110 = vmatpush1.msra.mxu0 %v2977
        %3111 = vmatprep.subr.mxu0 %v2986
        %3112 = vmatpush1.msra.mxu0 %v2985
        %3113 = vmatprep.subr.mxu0 %v2994
        %3114 = vmatpush1.msra.mxu0 %v2993
        %3115 = vmatprep.subr.mxu0 %v3002
        %3116 = vmatpush1.msra.mxu0 %v3001
        %3117 = vmatprep.subr.mxu0 %v3010
        %3118 = vmatpush1.msra.mxu0 %v3009
        %3119 = vmatprep.subr.mxu0 %v3018
        %3120 = vmatpush1.msra.mxu0 %v3017
        %3121 = vmatprep.subr.mxu0 0.0
        %3122 = vmatpush1.msra.mxu0 0.0
        %3123 = vmatprep.subr.mxu0 0.0
        %3124 = vmatpush1.msra.mxu0 0.0
        %3125 = vmatprep.subr.mxu0 0.0
        %3126 = vmatpush1.msra.mxu0 0.0
        %3127 = vmatprep.subr.mxu0 0.0
        %3128 = vmatpush1.msra.mxu0 0.0
        %3129 = vmatprep.subr.mxu0 0.0
        %3130 = vmatpush1.msra.mxu0 0.0
        %3131 = vmatprep.subr.mxu0 0.0
        %3132 = vmatpush1.msra.mxu0 0.0
        %3133 = vmatprep.subr.mxu0 0.0
        %3134 = vmatpush1.msra.mxu0 0.0
        %3135 = vmatprep.subr.mxu0 0.0
        %3136 = vmatpush1.msra.mxu0 0.0
        %3137 = vmatprep.subr.mxu0 0.0
        %3138 = vmatpush1.msra.mxu0 0.0
        %3139 = vmatprep.subr.mxu0 0.0
        %3140 = vmatpush1.msra.mxu0 0.0
        %3141 = vmatprep.subr.mxu0 0.0
        %3142 = vmatpush1.msra.mxu0 0.0
        %3143 = vmatprep.subr.mxu0 0.0
        %3144 = vmatpush1.msra.mxu0 0.0
        %3145 = vmatprep.subr.mxu0 0.0
        %3146 = vmatpush1.msra.mxu0 0.0
        %3147 = vmatprep.subr.mxu0 0.0
        %3148 = vmatpush1.msra.mxu0 0.0
        %3149 = vmatprep.subr.mxu0 0.0
        %3150 = vmatpush1.msra.mxu0 0.0
        %3151 = vmatprep.subr.mxu0 0.0
        %3152 = vmatpush1.msra.mxu0 0.0
        %3153 = vmatprep.subr.mxu0 0.0
        %3154 = vmatpush1.msra.mxu0 0.0
        %3155 = vmatprep.subr.mxu0 0.0
        %3156 = vmatpush1.msra.mxu0 0.0
        %3157 = vmatprep.subr.mxu0 0.0
        %3158 = vmatpush1.msra.mxu0 0.0
        %3159 = vmatprep.subr.mxu0 0.0
        %3160 = vmatpush1.msra.mxu0 0.0
        %3161 = vmatprep.subr.mxu0 0.0
        %3162 = vmatpush1.msra.mxu0 0.0
        %3163 = vmatprep.subr.mxu0 0.0
        %3164 = vmatpush1.msra.mxu0 0.0
        %3165 = vmatprep.subr.mxu0 0.0
        %3166 = vmatpush1.msra.mxu0 0.0
        %3167 = vmatprep.mubr.f32.mxu0 0.0
        %3168 = vmatmul.mubr.f32.gmra.mrb[0].mxu0 %v3030
        %v3169 = vpop.f32.mrb[0].mxu0
        %v3170 = vadd.f32 %v3027, %v3169
        %v3171 = vpop.f32.mrb[0].mxu0
        %v3172 = vadd.f32 %v3027, %v3171
        %3173 = vdwg.mxu0
        %3174 = vmatprep.subr.mxu0 %v2956
        %3175 = vmatpush1.msra.mxu0 %v2955
        %3176 = vmatprep.subr.mxu0 %v2964
        %3177 = vmatpush1.msra.mxu0 %v2963
        %3178 = vmatprep.subr.mxu0 %v2972
        %3179 = vmatpush1.msra.mxu0 %v2971
        %3180 = vmatprep.subr.mxu0 %v2980
        %3181 = vmatpush1.msra.mxu0 %v2979
        %3182 = vmatprep.subr.mxu0 %v2988
        %3183 = vmatpush1.msra.mxu0 %v2987
        %3184 = vmatprep.subr.mxu0 %v2996
        %3185 = vmatpush1.msra.mxu0 %v2995
        %3186 = vmatprep.subr.mxu0 %v3004
        %3187 = vmatpush1.msra.mxu0 %v3003
        %3188 = vmatprep.subr.mxu0 %v3012
        %3189 = vmatpush1.msra.mxu0 %v3011
        %3190 = vmatprep.subr.mxu0 %v3020
        %3191 = vmatpush1.msra.mxu0 %v3019
        %3192 = vmatprep.subr.mxu0 0.0
        %3193 = vmatpush1.msra.mxu0 0.0
        %3194 = vmatprep.subr.mxu0 0.0
        %3195 = vmatpush1.msra.mxu0 0.0
        %3196 = vmatprep.subr.mxu0 0.0
        %3197 = vmatpush1.msra.mxu0 0.0
        %3198 = vmatprep.subr.mxu0 0.0
        %3199 = vmatpush1.msra.mxu0 0.0
        %3200 = vmatprep.subr.mxu0 0.0
        %3201 = vmatpush1.msra.mxu0 0.0
        %3202 = vmatprep.subr.mxu0 0.0
        %3203 = vmatpush1.msra.mxu0 0.0
        %3204 = vmatprep.subr.mxu0 0.0
        %3205 = vmatpush1.msra.mxu0 0.0
        %3206 = vmatprep.subr.mxu0 0.0
        %3207 = vmatpush1.msra.mxu0 0.0
        %3208 = vmatprep.subr.mxu0 0.0
        %3209 = vmatpush1.msra.mxu0 0.0
        %3210 = vmatprep.subr.mxu0 0.0
        %3211 = vmatpush1.msra.mxu0 0.0
        %3212 = vmatprep.subr.mxu0 0.0
        %3213 = vmatpush1.msra.mxu0 0.0
        %3214 = vmatprep.subr.mxu0 0.0
        %3215 = vmatpush1.msra.mxu0 0.0
        %3216 = vmatprep.subr.mxu0 0.0
        %3217 = vmatpush1.msra.mxu0 0.0
        %3218 = vmatprep.subr.mxu0 0.0
        %3219 = vmatpush1.msra.mxu0 0.0
        %3220 = vmatprep.subr.mxu0 0.0
        %3221 = vmatpush1.msra.mxu0 0.0
        %3222 = vmatprep.subr.mxu0 0.0
        %3223 = vmatpush1.msra.mxu0 0.0
        %3224 = vmatprep.subr.mxu0 0.0
        %3225 = vmatpush1.msra.mxu0 0.0
        %3226 = vmatprep.subr.mxu0 0.0
        %3227 = vmatpush1.msra.mxu0 0.0
        %3228 = vmatprep.subr.mxu0 0.0
        %3229 = vmatpush1.msra.mxu0 0.0
        %3230 = vmatprep.subr.mxu0 0.0
        %3231 = vmatpush1.msra.mxu0 0.0
        %3232 = vmatprep.subr.mxu0 0.0
        %3233 = vmatpush1.msra.mxu0 0.0
        %3234 = vmatprep.subr.mxu0 0.0
        %3235 = vmatpush1.msra.mxu0 0.0
        %3236 = vmatprep.subr.mxu0 0.0
        %3237 = vmatpush1.msra.mxu0 0.0
        %3238 = vmatprep.mubr.f32.mxu0 0.0
        %3239 = vmatmul.mubr.f32.gmra.mrb[0].mxu0 %v3030
        %v3240 = vpop.f32.mrb[0].mxu0
        %v3241 = vadd.f32 %v3027, %v3240
        %v3242 = vpop.f32.mrb[0].mxu0
        %v3243 = vadd.f32 %v3027, %v3242
        %3244 = vdwg.mxu0
        %3245 = vmatprep.subr.mxu0 %v2958
        %3246 = vmatpush1.msra.mxu0 %v2957
        %3247 = vmatprep.subr.mxu0 %v2966
        %3248 = vmatpush1.msra.mxu0 %v2965
        %3249 = vmatprep.subr.mxu0 %v2974
        %3250 = vmatpush1.msra.mxu0 %v2973
        %3251 = vmatprep.subr.mxu0 %v2982
        %3252 = vmatpush1.msra.mxu0 %v2981
        %3253 = vmatprep.subr.mxu0 %v2990
        %3254 = vmatpush1.msra.mxu0 %v2989
        %3255 = vmatprep.subr.mxu0 %v2998
        %3256 = vmatpush1.msra.mxu0 %v2997
        %3257 = vmatprep.subr.mxu0 %v3006
        %3258 = vmatpush1.msra.mxu0 %v3005
        %3259 = vmatprep.subr.mxu0 %v3014
        %3260 = vmatpush1.msra.mxu0 %v3013
        %3261 = vmatprep.subr.mxu0 %v3022
        %3262 = vmatpush1.msra.mxu0 %v3021
        %3263 = vmatprep.subr.mxu0 0.0
        %3264 = vmatpush1.msra.mxu0 0.0
        %3265 = vmatprep.subr.mxu0 0.0
        %3266 = vmatpush1.msra.mxu0 0.0
        %3267 = vmatprep.subr.mxu0 0.0
        %3268 = vmatpush1.msra.mxu0 0.0
        %3269 = vmatprep.subr.mxu0 0.0
        %3270 = vmatpush1.msra.mxu0 0.0
        %3271 = vmatprep.subr.mxu0 0.0
        %3272 = vmatpush1.msra.mxu0 0.0
        %3273 = vmatprep.subr.mxu0 0.0
        %3274 = vmatpush1.msra.mxu0 0.0
        %3275 = vmatprep.subr.mxu0 0.0
        %3276 = vmatpush1.msra.mxu0 0.0
        %3277 = vmatprep.subr.mxu0 0.0
        %3278 = vmatpush1.msra.mxu0 0.0
        %3279 = vmatprep.subr.mxu0 0.0
        %3280 = vmatpush1.msra.mxu0 0.0
        %3281 = vmatprep.subr.mxu0 0.0
        %3282 = vmatpush1.msra.mxu0 0.0
        %3283 = vmatprep.subr.mxu0 0.0
        %3284 = vmatpush1.msra.mxu0 0.0
        %3285 = vmatprep.subr.mxu0 0.0
        %3286 = vmatpush1.msra.mxu0 0.0
        %3287 = vmatprep.subr.mxu0 0.0
        %3288 = vmatpush1.msra.mxu0 0.0
        %3289 = vmatprep.subr.mxu0 0.0
        %3290 = vmatpush1.msra.mxu0 0.0
        %3291 = vmatprep.subr.mxu0 0.0
        %3292 = vmatpush1.msra.mxu0 0.0
        %3293 = vmatprep.subr.mxu0 0.0
        %3294 = vmatpush1.msra.mxu0 0.0
        %3295 = vmatprep.subr.mxu0 0.0
        %3296 = vmatpush1.msra.mxu0 0.0
        %3297 = vmatprep.subr.mxu0 0.0
        %3298 = vmatpush1.msra.mxu0 0.0
        %3299 = vmatprep.subr.mxu0 0.0
        %3300 = vmatpush1.msra.mxu0 0.0
        %3301 = vmatprep.subr.mxu0 0.0
        %3302 = vmatpush1.msra.mxu0 0.0
        %3303 = vmatprep.subr.mxu0 0.0
        %3304 = vmatpush1.msra.mxu0 0.0
        %3305 = vmatprep.subr.mxu0 0.0
        %3306 = vmatpush1.msra.mxu0 0.0
        %3307 = vmatprep.subr.mxu0 0.0
        %3308 = vmatpush1.msra.mxu0 0.0
        %3309 = vmatprep.mubr.f32.mxu0 0.0
        %3310 = vmatmul.mubr.f32.gmra.mrb[0].mxu0 %v3030
        %v3311 = vpop.f32.mrb[0].mxu0
        %v3312 = vadd.f32 %v3027, %v3311
        %v3313 = vpop.f32.mrb[0].mxu0
        %v3314 = vadd.f32 %v3027, %v3313
        %3315 = vdwg.mxu0
        %v3316 = vmax.f32 %v3099, 0.0
        %v3317 = vmax.f32 %v3101, 0.0
        %v3318 = vmax.f32 %v3170, 0.0
        %v3319 = vmax.f32 %v3172, 0.0
        %v3320 = vmax.f32 %v3241, 0.0
        %v3321 = vmax.f32 %v3243, 0.0
        %v3322 = vmax.f32 %v3312, 0.0
        %v3323 = vmax.f32 %v3314, 0.0
        %3324 = vst [vmem:[%s294] sm:$0xff] %v3316
        %3325 = vst [vmem:[%s294 + $0x8] sm:$0xff] %v3317
        %3326 = vst [vmem:[%s294 + $0x10] sm:$0xff] %v3318
        %3327 = vst [vmem:[%s294 + $0x18] sm:$0xff] %v3319
        %3328 = vst [vmem:[%s294 + $0x20] sm:$0xff] %v3320
        %3329 = vst [vmem:[%s294 + $0x28] sm:$0xff] %v3321
        %3330 = vst [vmem:[%s294 + $0x30] sm:$0xff] %v3322
        %3331 = vst [vmem:[%s294 + $0x38] sm:$0xff] %v3323
        %s3332 = sand.u32 %s184, 1
        %s3333 = scalar_lea.sflag [#allocation5], %s3332
        %s3334 = sand.u32 %s184, 1
        %s3335 = smul.addr %s3334, 64
        %s3336 = scalar_lea.vmem [#allocation6], %s3335
        // Predicated region
        $region53: #{tpu_custom_call.1} parent=47 // pred_check
          %p3337 = pneg %p194
        $region54: #{tpu_custom_call.1} parent=47 // pred_check_branch
          %3339 = sbr.rel (%p3337) target = $region56
        $region55: #{tpu_custom_call.1} parent=47 // pred_region
          %s3341 = ssub.s32 1024, 1024
          %3342 = vsyncadd %s3333, %s3341
          %s3343 = smul.addr %s24, 8
          %s3344 = smul.addr %s3343, 128
          %s3345 = scalar_lea.hbm %s7, %s3344
          %s3347 = sshll.u32 %s3336, 4
          %s3348 = int_to_ptr.vmem [resolvable:$true] %s3347
          %3350 = dma.vmem_to_hbm [thread:$0]  %s3348, 1024, %s3345, %s3333
        $region56: #{tpu_custom_call.1} parent=47 // pred_fallthru
          _
      $region48: #{tpu_custom_call.1} parent=5 // pred_fallthru
        _
      %p3351 = scmp.le.s32.totalorder 2, %s19
      // Predicated region
      $region57: #{tpu_custom_call.1} parent=5 // pred_check
        %p3352 = pneg %p3351
      $region58: #{tpu_custom_call.1} parent=5 // pred_check_branch
        %3354 = sbr.rel (%p3352) target = $region60
      $region59: #{tpu_custom_call.1} parent=5 // pred_region
        %s3355 = ssub.s32 %s19, 2
        // Predicated region
        $region61: #{tpu_custom_call.1} parent=59 // pred_check
          %p3356 = pneg %p200
        $region62: #{tpu_custom_call.1} parent=59 // pred_check_branch
          %3358 = sbr.rel (%p3356) target = $region64
        $region63: #{tpu_custom_call.1} parent=59 // pred_region
          %s3359 = sand.u32 %s185, 1
          %s3360 = scalar_lea.sflag [#allocation5], %s3359
          %s3361 = sand.u32 %s185, 1
          %s3362 = smul.addr %s3361, 64
          %s3363 = scalar_lea.vmem [#allocation6], %s3362
          %3364 = dma.done %s3360, 1024
        $region64: #{tpu_custom_call.1} parent=59 // pred_fallthru
          _
      $region60: #{tpu_custom_call.1} parent=5 // pred_fallthru
        _
    $region6: #{tpu_custom_call.1} parent=1 // loop_footer
      %s23 = sadd.s32 1, %s19
    $region7: #{tpu_custom_call.1} parent=1 // loop_footer_branch
      %18 = sbr.rel target = $region3
    $region8: #{tpu_custom_call.1} parent=1 // loop_exit
      _
    %3365 = vsyncpa [#allocation4], 1
    %s3366 = scalar_lea.sflag [#allocation4], 1
    %3367 = vsyncpa %s3366, 1
    %3368 = vsyncpa [#allocation5], 1
    %s3369 = scalar_lea.sflag [#allocation5], 1
    %3370 = vsyncpa %s3369, 1

</llo_original>
